<compile_context>
chip_gen: v6e
topology: v6e:2x2x1
jax: 0.10.0
libtpu: 0.0.40
codegen_flags: <defaults>
</compile_context>

<pallas_src>
import functools
import math

import jax
import jax.numpy as jnp
from jax.experimental import pallas as pl
from jax.experimental.pallas import tpu as pltpu


# ----------------------------------------------------------------------------
# Tiled matmul (bf16 inputs, fp32 accumulation)
# ----------------------------------------------------------------------------
def _matmul_kernel(x_ref, w_ref, o_ref, acc_ref):
    @pl.when(pl.program_id(2) == 0)
    def _():
        acc_ref[...] = jnp.zeros_like(acc_ref)

    acc_ref[...] += jnp.dot(
        x_ref[...], w_ref[...], preferred_element_type=jnp.float32
    )

    @pl.when(pl.program_id(2) == pl.num_programs(2) - 1)
    def _():
        o_ref[...] = acc_ref[...].astype(o_ref.dtype)


def _pick_tile(dim, prefs):
    for p in prefs:
        if dim % p == 0:
            return p
    return dim  # full dim is always a legal block


def pallas_matmul(x, w, out_dtype=jnp.bfloat16):
    """x: [M, K] @ w: [K, N] -> [M, N], tiled and pipelined.

    Larger tm/tk tiles (up to 512x1024, ~4 MiB double-buffered) amortize the
    per-step pipeline overhead; tn stays 256 (v6e/v7x MXU) with 128 fallback.
    """
    M, K = x.shape
    K2, N = w.shape
    assert K == K2
    tm = _pick_tile(M, (512, 256, 128, 64, 32, 16, 8))
    tn = _pick_tile(N, (256, 128))
    tk = _pick_tile(K, (1024, 512, 256, 128))
    return pl.pallas_call(
        _matmul_kernel,
        out_shape=jax.ShapeDtypeStruct((M, N), out_dtype),
        grid=(M // tm, N // tn, K // tk),
        in_specs=[
            pl.BlockSpec((tm, tk), lambda i, j, k: (i, k)),
            pl.BlockSpec((tk, tn), lambda i, j, k: (k, j)),
        ],
        out_specs=pl.BlockSpec((tm, tn), lambda i, j, k: (i, j)),
        scratch_shapes=[pltpu.VMEM((tm, tn), jnp.float32)],
        compiler_params=pltpu.CompilerParams(
            dimension_semantics=("parallel", "parallel", "arbitrary")
        ),
    )(x, w)


# ----------------------------------------------------------------------------
# Causal depthwise short conv (+ SiLU), channel-tiled
# ----------------------------------------------------------------------------
def _conv_silu_kernel(xp_ref, w_ref, o_ref, *, ksize):
    # xp_ref: (T+K-1, ct) left-padded input; w_ref: (K, ct); o_ref: (T, ct).
    T, ct = o_ref.shape
    w = w_ref[...].astype(jnp.float32)  # taps loaded once (hoisted)
    acc = jnp.zeros((T, ct), jnp.float32)
    for j in range(ksize):  # ksize is tiny and static (2-4)
        acc = acc + xp_ref[pl.ds(j, T), :].astype(jnp.float32) * w[j:j + 1, :]
    o_ref[...] = (acc * jax.nn.sigmoid(acc)).astype(o_ref.dtype)  # SiLU


def _conv_channel_tile(T, C):
    # Keep one input block <= ~4 MiB bf16 so double-buffered in/out plus the
    # fp32 accumulator fit comfortably in scoped VMEM (incl. v7x's 64 MiB).
    max_ct = max(128, ((4 << 20) // (2 * max(T, 1))) // 128 * 128)
    for ct in (512, 256, 128):
        if ct <= max_ct and C % ct == 0:
            return ct
    return C  # small / odd channel counts: full width


def short_conv_silu(x, w):
    """Causal depthwise conv1d + SiLU. x: [B, T, C] (bf16), w: [K, C] -> bf16."""
    B, T, C = x.shape
    K = w.shape[0]
    # TODO(synk): the K-1 causal halo is handled via jnp.pad (one extra HBM
    #             pass); handle it in-kernel once T itself is tiled for very
    #             long sequences.
    xp = jnp.pad(x, ((0, 0), (K - 1, 0), (0, 0)))
    ct = _conv_channel_tile(T, C)
    return pl.pallas_call(
        functools.partial(_conv_silu_kernel, ksize=K),
        out_shape=jax.ShapeDtypeStruct((B, T, C), jnp.bfloat16),
        grid=(B, C // ct),
        in_specs=[
            pl.BlockSpec((None, T + K - 1, ct), lambda b, j: (b, 0, j)),
            pl.BlockSpec((K, ct), lambda b, j: (0, j)),
        ],
        out_specs=pl.BlockSpec((None, T, ct), lambda b, j: (b, 0, j)),
        compiler_params=pltpu.CompilerParams(
            dimension_semantics=("parallel", "parallel")
        ),
    )(xp, w)


# ----------------------------------------------------------------------------
# Chunked gated linear-attention recurrence + fused RMSNorm-swish-gate
# ----------------------------------------------------------------------------
def _bla_chunk_kernel(q_ref, k_ref, v_ref, gr_ref, gc_ref, gate_ref, w_ref,
                      o_ref, s_ref, *, num_sub, csize, eps):
    # Per (batch, head, chunk-group) grid cell:
    #   q_ref/k_ref: (NS*C, Dk); v_ref/gate_ref/o_ref: (NS*C, Dv)
    #   gr_ref: (NS, C) within-chunk cumulative log-decay (lane-dense rows)
    #   gc_ref: (NS*C, 2) per-token [cum log-decay, beta] (column oriented)
    #   s_ref: (Dk, Dv) fp32 recurrent state carried across the chunk axis.
    Dk = q_ref.shape[1]
    scale = Dk ** -0.5

    @pl.when(pl.program_id(2) == 0)
    def _():
        s_ref[...] = jnp.zeros_like(s_ref)

    w = w_ref[...].astype(jnp.float32)                       # (1, Dv), hoisted
    row = jax.lax.broadcasted_iota(jnp.int32, (csize, csize), 0)
    col = jax.lax.broadcasted_iota(jnp.int32, (csize, csize), 1)
    causal = row >= col                                      # hoisted

    def body(i, s_prev):
        t0 = pl.multiple_of(i * csize, csize)
        q = q_ref[pl.ds(t0, csize), :].astype(jnp.float32)
        k = k_ref[pl.ds(t0, csize), :].astype(jnp.float32)
        vb = v_ref[pl.ds(t0, csize), :]                      # bf16 for the MXU
        gcols = gc_ref[pl.ds(t0, csize), :]                  # (C, 2) fp32
        bc_col = gcols[:, 0:1]                               # cumulative log-decay
        bt_col = gcols[:, 1:2]                               # beta
        bc_row = gr_ref[pl.ds(i, 1), :]                      # (1, C)

        # use_qk_l2norm_in_kernel=True
        q = q * jax.lax.rsqrt(jnp.sum(q * q, axis=-1, keepdims=True) + 1e-6)
        k = k * jax.lax.rsqrt(jnp.sum(k * k, axis=-1, keepdims=True) + 1e-6)
        qs = q * scale
        kb = k * bt_col                                      # fold beta into k once

        # exp(b_t - b_s) for t>=s, 0 otherwise (mask before exp: no overflow).
        decay = jnp.exp(jnp.where(causal, bc_col - bc_row, -1e30))

        # Intra-chunk: A[t,s] = (q_t . beta_s k_s) * exp(b_t - b_s)   (t >= s)
        scores = jax.lax.dot_general(
            qs.astype(jnp.bfloat16), kb.astype(jnp.bfloat16),
            (((1,), (1,)), ((), ())), preferred_element_type=jnp.float32)
        attn = scores * decay                                # (C, C)
        o_intra = jnp.dot(attn.astype(jnp.bfloat16), vb,
                          preferred_element_type=jnp.float32)

        # Inter-chunk: exp(b_t) folded into q; bf16 MXU against carried state.
        qi = (qs * jnp.exp(bc_col)).astype(jnp.bfloat16)
        o_inter = jnp.dot(qi, s_prev.astype(jnp.bfloat16),
                          preferred_element_type=jnp.float32)

        # State: S_new = exp(b_C) S_prev + sum_s exp(b_C - b_s) beta_s k_s v_s^T
        g_tot = bc_row[:, csize - 1:csize]                   # (1, 1)
        kfac = jnp.exp(g_tot - bc_col)                       # (C, 1)
        kv = jax.lax.dot_general(
            (kb * kfac).astype(jnp.bfloat16), vb,
            (((0,), (0,)), ((), ())), preferred_element_type=jnp.float32)
        s_new = jnp.exp(g_tot) * s_prev + kv

        # Fused FusedRMSNormSwishGate epilogue: rmsnorm(o) * w * silu(g)
        o = o_intra + o_inter
        var = jnp.mean(o * o, axis=-1, keepdims=True)
        o = o * jax.lax.rsqrt(var + eps)
        gg = gate_ref[pl.ds(t0, csize), :].astype(jnp.float32)
        o_ref[pl.ds(t0, csize), :] = (
            o * w * (gg * jax.nn.sigmoid(gg))).astype(o_ref.dtype)
        return s_new

    s_ref[...] = jax.lax.fori_loop(0, num_sub, body, s_ref[...])


def bla_chunk_fused(q, k, v, g_log, beta, gate, norm_w, *, H, Dk, Dv,
                    eps=1e-5, chunk=128, ns_max=4):
    """q,k: [B,T,H*Dk]; v,gate: [B,T,H*Dv]; g_log,beta: [B,T,H] -> [B,T,H*Dv] bf16."""
    B, T, _ = q.shape
    # Direct [B, T, H*D] blocking is legal when D is a 128-multiple (lane rule)
    # or there is a single head; otherwise fall back to a head-split layout.
    direct = (Dk % 128 == 0 and Dv % 128 == 0) or H == 1
    if direct:
        Bp, Hp = B, H
        qq, kk, vv, gg = q, k, v, gate
        gb = jnp.transpose(g_log, (0, 2, 1))                 # [B, H, T] (tiny)
        bb = jnp.transpose(beta, (0, 2, 1))
    else:
        # TODO(synk): sub-128 head dims need the transposed layout (extra HBM pass).
        Bp, Hp = B * H, 1

        def split(t, d):
            return jnp.transpose(
                t.reshape(B, T, H, d), (0, 2, 1, 3)).reshape(B * H, T, d)

        qq, kk = split(q, Dk), split(k, Dk)
        vv, gg = split(v, Dv), split(gate, Dv)
        gb = jnp.transpose(g_log, (0, 2, 1)).reshape(B * H, 1, T)
        bb = jnp.transpose(beta, (0, 2, 1)).reshape(B * H, 1, T)

    # Chunking: pad T to a multiple of C (g=0 -> decay 1, beta=0 -> padded
    # tokens contribute nothing, so the recurrence stays exact).
    C = chunk if T >= chunk else ((T + 7) // 8) * 8
    T_pad = ((T + C - 1) // C) * C
    pad = T_pad - T
    if pad:
        qq = jnp.pad(qq, ((0, 0), (0, pad), (0, 0)))
        kk = jnp.pad(kk, ((0, 0), (0, pad), (0, 0)))
        vv = jnp.pad(vv, ((0, 0), (0, pad), (0, 0)))
        gg = jnp.pad(gg, ((0, 0), (0, pad), (0, 0)))
        gb = jnp.pad(gb, ((0, 0), (0, 0), (0, pad)))
        bb = jnp.pad(bb, ((0, 0), (0, 0), (0, pad)))
    NC = T_pad // C
    NS = 1
    for cand in range(min(ns_max, NC), 0, -1):  # sub-chunks per grid step
        if NC % cand == 0:
            NS = cand
            break
    G = NC // NS

    # Within-chunk inclusive cumulative log-decay (tiny, computed once in XLA),
    # packed into two lane-dense gate blocks (rows + [bc, beta] columns).
    bc = jnp.cumsum(gb.astype(jnp.float32).reshape(Bp, Hp, NC, C), axis=-1)
    g_rows = bc.reshape(Bp, Hp, G, NS, C)
    g_cols = jnp.stack(
        [bc.reshape(Bp, Hp, T_pad), bb.astype(jnp.float32)], axis=-1
    ).reshape(Bp, Hp, G, NS * C, 2)

    out = pl.pallas_call(
        functools.partial(_bla_chunk_kernel, num_sub=NS, csize=C, eps=eps),
        out_shape=jax.ShapeDtypeStruct((Bp, T_pad, Hp * Dv), jnp.bfloat16),
        grid=(Bp, Hp, G),
        in_specs=[
            pl.BlockSpec((None, NS * C, Dk), lambda b, h, c: (b, c, h)),
            pl.BlockSpec((None, NS * C, Dk), lambda b, h, c: (b, c, h)),
            pl.BlockSpec((None, NS * C, Dv), lambda b, h, c: (b, c, h)),
            pl.BlockSpec((None, None, None, NS, C), lambda b, h, c: (b, h, c, 0, 0)),
            pl.BlockSpec((None, None, None, NS * C, 2), lambda b, h, c: (b, h, c, 0, 0)),
            pl.BlockSpec((None, NS * C, Dv), lambda b, h, c: (b, c, h)),
            pl.BlockSpec((1, Dv), lambda b, h, c: (0, 0)),
        ],
        out_specs=pl.BlockSpec((None, NS * C, Dv), lambda b, h, c: (b, c, h)),
        scratch_shapes=[pltpu.VMEM((Dk, Dv), jnp.float32)],
        compiler_params=pltpu.CompilerParams(
            dimension_semantics=("parallel", "parallel", "arbitrary")
        ),
    )(qq, kk, vv, g_rows, g_cols, gg, norm_w)

    out = out[:, :T, :]
    if not direct:
        out = jnp.transpose(
            out.reshape(B, H, T, Dv), (0, 2, 1, 3)).reshape(B, T, H * Dv)
    return out  # [B, T, H*Dv] bf16


# ----------------------------------------------------------------------------
# Forward pass (glue + kernel calls)
# ----------------------------------------------------------------------------
def bilinear_attention_forward(params, hidden_states, *, norm_eps=1e-5):
    B, T, hidden = hidden_states.shape
    H = params["A_log"].shape[0]
    key_dim = params["conv_q"].shape[1]
    value_dim = params["conv_v"].shape[1]
    Dk, Dv = key_dim // H, value_dim // H

    xf = hidden_states.reshape(B * T, hidden).astype(jnp.bfloat16)

    # Fused input projection: one tiled matmul over [q | k | v | g | a | b]
    # (a/b live in 128-aligned column slots).
    y = pallas_matmul(xf, params["W_in_fused"], out_dtype=jnp.bfloat16)
    off_g = 2 * key_dim + value_dim
    off_a = off_g + value_dim
    slot = ((H + 127) // 128) * 128
    off_b = off_a + slot
    q_lin = y[:, :key_dim]
    k_lin = y[:, key_dim:2 * key_dim]
    v_lin = y[:, 2 * key_dim:off_g]
    g_lin = y[:, off_g:off_a]
    a_lin = y[:, off_a:off_a + H].astype(jnp.float32)
    b_lin = y[:, off_b:off_b + H].astype(jnp.float32)

    # Short causal depthwise conv + SiLU (Pallas, channel-tiled).
    q = short_conv_silu(q_lin.reshape(B, T, key_dim), params["conv_q"])
    k = short_conv_silu(k_lin.reshape(B, T, key_dim), params["conv_k"])
    v = short_conv_silu(v_lin.reshape(B, T, value_dim), params["conv_v"])

    # Gates (tiny elementwise glue, fp32 — matches reference's .float() cast of
    # the bf16 a/b projections): memory-decay g (log space) and beta.
    g_log = -jnp.exp(params["A_log"]) * jax.nn.softplus(
        a_lin.reshape(B, T, H) + params["dt_bias"])
    beta = jax.nn.sigmoid(b_lin.reshape(B, T, H))  # beta_act == 'sigmoid'

    # Recurrence + fused RMSNorm-swish-gate, straight from [B, T, H*D] layout.
    o = bla_chunk_fused(
        q, k, v, g_log, beta, g_lin.reshape(B, T, value_dim), params["norm_w"],
        H=H, Dk=Dk, Dv=Dv, eps=norm_eps)                   # [B, T, value_dim] bf16

    # Output projection (bf16 writeback).
    out = pallas_matmul(o.reshape(B * T, value_dim), params["W_o"],
                        out_dtype=jnp.bfloat16)
    return out.reshape(B, T, hidden)


# ----------------------------------------------------------------------------
# Deterministic parameter init (mirrors module __init__ shapes)
# ----------------------------------------------------------------------------
def init_params(key, hidden_size, num_heads, head_dim, expand_v, conv_size):
    key_dim = num_heads * head_dim
    value_dim = int(key_dim * expand_v)
    head_v_dim = int(head_dim * expand_v)
    gain = 2.0 ** (-2.5)
    ks = jax.random.split(key, 12)

    def xavier(k, fan_in, fan_out):
        bound = gain * math.sqrt(6.0 / (fan_in + fan_out))
        return jax.random.uniform(k, (fan_in, fan_out), jnp.float32, -bound, bound)

    def conv_w(k, ksize, channels):
        bound = 1.0 / math.sqrt(ksize)
        return jax.random.uniform(k, (ksize, channels), jnp.float32, -bound, bound)

    # dt_bias as in the module __init__
    dt_min, dt_max, dt_floor = 0.001, 0.1, 1e-4
    dt = jnp.exp(
        jax.random.uniform(ks[8], (num_heads,), jnp.float32)
        * (math.log(dt_max) - math.log(dt_min)) + math.log(dt_min))
    dt = jnp.clip(dt, dt_floor, None)
    dt_bias = dt + jnp.log(-jnp.expm1(-dt))

    w_q = xavier(ks[0], hidden_size, key_dim)
    w_k = xavier(ks[1], hidden_size, key_dim)
    w_v = xavier(ks[2], hidden_size, value_dim)
    w_g = xavier(ks[5], hidden_size, value_dim)
    w_a = xavier(ks[4], hidden_size, num_heads)
    w_b = xavier(ks[3], hidden_size, num_heads)

    # Fused [q | k | v | g | a | b]; a and b occupy 128-aligned column slots
    # so the post-matmul slices start lane-aligned; total padded to 128 cols.
    slot = ((num_heads + 127) // 128) * 128
    zpad = jnp.zeros((hidden_size, slot - num_heads), jnp.float32)
    w_in = jnp.concatenate([w_q, w_k, w_v, w_g, w_a, zpad, w_b, zpad], axis=1)
    rem = (-w_in.shape[1]) % 128
    if rem:
        w_in = jnp.pad(w_in, ((0, 0), (0, rem)))

    return {
        "W_in_fused": w_in.astype(jnp.bfloat16),
        "W_o": xavier(ks[6], value_dim, hidden_size).astype(jnp.bfloat16),
        "A_log": jnp.log(
            jax.random.uniform(ks[7], (num_heads,), jnp.float32, 1e-3, 16.0)),
        "dt_bias": dt_bias,
        "D": jnp.ones((num_heads,), jnp.float32),  # defined in module, unused in forward
        "conv_q": conv_w(ks[9], conv_size, key_dim),
        "conv_k": conv_w(ks[10], conv_size, key_dim),
        "conv_v": conv_w(ks[11], conv_size, value_dim),
        "norm_w": jnp.ones((1, head_v_dim), jnp.float32),  # RMSNorm weight
    }


# ----------------------------------------------------------------------------
if __name__ == "__main__":
    B, T = 2, 16
    hidden_size = 128
    num_heads = 2
    head_dim = 128       # 128-multiple head dim -> direct [B,T,H*D] blocking path
    expand_v = 1
    conv_size = 2

    root = jax.random.PRNGKey(0)
    k_params, k_x = jax.random.split(root)
    params = init_params(k_params, hidden_size, num_heads, head_dim, expand_v, conv_size)
    x = jax.random.normal(k_x, (B, T, hidden_size), jnp.float32)

    fwd = jax.jit(functools.partial(bilinear_attention_forward, norm_eps=1e-5))
    out = fwd(params, x)
    jax.block_until_ready(out)

    assert out.shape == (B, T, hidden_size), out.shape
    assert jnp.all(jnp.isfinite(out.astype(jnp.float32))), "non-finite output"
    print("KERNEL_OK")
</pallas_src>

<mosaic_0001>
module attributes {stable_mosaic.version = 11 : i64} {
  func.func @_matmul_kernel(%arg0: i32, %arg1: i32, %arg2: i32, %arg3: memref<32x128xbf16, #tpu.memory_space<vmem>>, %arg4: memref<128x256xbf16, #tpu.memory_space<vmem>>, %arg5: memref<32x256xbf16, #tpu.memory_space<vmem>>, %arg6: memref<32x256xf32, #tpu.memory_space<vmem>>) attributes {dimension_semantics = [#tpu.dimension_semantics<parallel>, #tpu.dimension_semantics<parallel>, #tpu.dimension_semantics<arbitrary>], iteration_bounds = array<i64: 1, 5, 1>, scalar_prefetch = 0 : i64, scratch_operands = 1 : i64, tpu.core_type = #tpu.core_type<tc>, window_params = [{transform_indices = @transform_0, window_bounds = array<i64: 32, 128>}, {transform_indices = @transform_1, window_bounds = array<i64: 128, 256>}, {transform_indices = @transform_2, window_bounds = array<i64: 32, 256>}]} {
    %c0_i32 = arith.constant 0 : i32
    %0 = arith.cmpi eq, %arg2, %c0_i32 : i32
    %1 = arith.extui %0 : i1 to i32
    %c0_i32_0 = arith.constant 0 : i32
    %2 = arith.cmpi ne, %1, %c0_i32_0 : i32
    scf.if %2 {
      %cst_10 = arith.constant 0.000000e+00 : f32
      %12 = vector.broadcast %cst_10 : f32 to vector<32x256xf32>
      %c0_11 = arith.constant 0 : index
      %c0_12 = arith.constant 0 : index
      %13 = vector.load %arg6[%c0_11, %c0_12] : memref<32x256xf32, #tpu.memory_space<vmem>>, vector<32x256xf32>
      tpu.vector_store %arg6[%c0_11, %c0_12], %12 {strides = array<i32>} : memref<32x256xf32, #tpu.memory_space<vmem>>, vector<32x256xf32>,
    } else {
    }
    %c0 = arith.constant 0 : index
    %c0_1 = arith.constant 0 : index
    %3 = vector.load %arg6[%c0, %c0_1] : memref<32x256xf32, #tpu.memory_space<vmem>>, vector<32x256xf32>
    %c0_2 = arith.constant 0 : index
    %c0_3 = arith.constant 0 : index
    %4 = vector.load %arg3[%c0_2, %c0_3] : memref<32x128xbf16, #tpu.memory_space<vmem>>, vector<32x128xbf16>
    %c0_4 = arith.constant 0 : index
    %c0_5 = arith.constant 0 : index
    %5 = vector.load %arg4[%c0_4, %c0_5] : memref<128x256xbf16, #tpu.memory_space<vmem>>, vector<128x256xbf16>
    %cst = arith.constant dense<0.000000e+00> : vector<32x256xf32>
    %6 = tpu.matmul %4, %5, %cst {dimension_numbers = #tpu.dot_dimension_numbers<[1], [0], [0], [1], [0, 0, 1, 1], [], []>} : vector<32x128xbf16>, vector<128x256xbf16>, vector<32x256xf32> -> vector<32x256xf32>
    %7 = arith.addf %3, %6 : vector<32x256xf32>
    %c0_6 = arith.constant 0 : index
    %c0_7 = arith.constant 0 : index
    %8 = vector.load %arg6[%c0_6, %c0_7] : memref<32x256xf32, #tpu.memory_space<vmem>>, vector<32x256xf32>
    tpu.vector_store %arg6[%c0_6, %c0_7], %7 {strides = array<i32>} : memref<32x256xf32, #tpu.memory_space<vmem>>, vector<32x256xf32>,
    %c0_i32_8 = arith.constant 0 : i32
    %9 = arith.cmpi eq, %arg2, %c0_i32_8 : i32
    %10 = arith.extui %9 : i1 to i32
    %c0_i32_9 = arith.constant 0 : i32
    %11 = arith.cmpi ne, %10, %c0_i32_9 : i32
    scf.if %11 {
      %c0_10 = arith.constant 0 : index
      %c0_11 = arith.constant 0 : index
      %12 = vector.load %arg6[%c0_10, %c0_11] : memref<32x256xf32, #tpu.memory_space<vmem>>, vector<32x256xf32>
      %13 = arith.truncf %12 : vector<32x256xf32> to vector<32x256xbf16>
      %c0_12 = arith.constant 0 : index
      %c0_13 = arith.constant 0 : index
      %14 = vector.load %arg5[%c0_12, %c0_13] : memref<32x256xbf16, #tpu.memory_space<vmem>>, vector<32x256xbf16>
      tpu.vector_store %arg5[%c0_12, %c0_13], %13 {strides = array<i32>} : memref<32x256xbf16, #tpu.memory_space<vmem>>, vector<32x256xbf16>,
    } else {
    }
    return
  }
  func.func @transform_0(%arg0: i32, %arg1: i32, %arg2: i32) -> (i32, i32) {
    %c0_i32 = arith.constant 0 : i32
    return %arg0, %arg2 : i32, i32
  }
  func.func @transform_1(%arg0: i32, %arg1: i32, %arg2: i32) -> (i32, i32) {
    %c0_i32 = arith.constant 0 : i32
    return %arg2, %arg1 : i32, i32
  }
  func.func @transform_2(%arg0: i32, %arg1: i32, %arg2: i32) -> (i32, i32) {
    %c0_i32 = arith.constant 0 : i32
    return %arg0, %arg1 : i32, i32
  }
}

module attributes {stable_mosaic.version = 11 : i64} {
  func.func @_conv_silu_kernel(%arg0: i32, %arg1: i32, %arg2: memref<1x17x256xbf16, #tpu.memory_space<vmem>>, %arg3: memref<2x256xf32, #tpu.memory_space<vmem>>, %arg4: memref<1x16x256xbf16, #tpu.memory_space<vmem>>) attributes {dimension_semantics = [#tpu.dimension_semantics<parallel>, #tpu.dimension_semantics<parallel>], iteration_bounds = array<i64: 2, 1>, scalar_prefetch = 0 : i64, scratch_operands = 0 : i64, tpu.core_type = #tpu.core_type<tc>, window_params = [{transform_indices = @transform_0, window_bounds = array<i64: 1, 17, 256>}, {transform_indices = @transform_1, window_bounds = array<i64: 2, 256>}, {transform_indices = @transform_2, window_bounds = array<i64: 1, 16, 256>}]} {
    %c0 = arith.constant 0 : index
    %c0_0 = arith.constant 0 : index
    %0 = vector.load %arg3[%c0, %c0_0] : memref<2x256xf32, #tpu.memory_space<vmem>>, vector<2x256xf32>
    %cst = arith.constant 0.000000e+00 : f32
    %1 = vector.broadcast %cst : f32 to vector<16x256xf32>
    %c0_1 = arith.constant 0 : index
    %c0_2 = arith.constant 0 : index
    %c0_3 = arith.constant 0 : index
    %2 = vector.load %arg2[%c0_1, %c0_2, %c0_3] : memref<1x17x256xbf16, #tpu.memory_space<vmem>>, vector<1x16x256xbf16>
    %3 = vector.shape_cast %2 : vector<1x16x256xbf16> to vector<16x256xbf16>
    %4 = arith.extf %3 : vector<16x256xbf16> to vector<16x256xf32>
    %5 = vector.extract_strided_slice %0 {offsets = [0, 0], sizes = [1, 256], strides = [1, 1]} : vector<2x256xf32> to vector<1x256xf32>
    %6 = vector.broadcast %5 : vector<1x256xf32> to vector<16x256xf32>
    %7 = arith.mulf %4, %6 : vector<16x256xf32>
    %8 = arith.addf %1, %7 : vector<16x256xf32>
    %c0_4 = arith.constant 0 : index
    %c1 = arith.constant 1 : index
    %c0_5 = arith.constant 0 : index
    %9 = vector.load %arg2[%c0_4, %c1, %c0_5] : memref<1x17x256xbf16, #tpu.memory_space<vmem>>, vector<1x16x256xbf16>
    %10 = vector.shape_cast %9 : vector<1x16x256xbf16> to vector<16x256xbf16>
    %11 = arith.extf %10 : vector<16x256xbf16> to vector<16x256xf32>
    %12 = vector.extract_strided_slice %0 {offsets = [1, 0], sizes = [1, 256], strides = [1, 1]} : vector<2x256xf32> to vector<1x256xf32>
    %13 = vector.broadcast %12 : vector<1x256xf32> to vector<16x256xf32>
    %14 = arith.mulf %11, %13 : vector<16x256xf32>
    %15 = arith.addf %8, %14 : vector<16x256xf32>
    %16 = arith.negf %15 : vector<16x256xf32>
    %17 = math.exp %16 : vector<16x256xf32>
    %cst_6 = arith.constant 1.000000e+00 : f32
    %18 = vector.broadcast %cst_6 : f32 to vector<16x256xf32>
    %19 = arith.addf %18, %17 : vector<16x256xf32>
    %20 = arith.divf %18, %19 : vector<16x256xf32>
    %21 = arith.mulf %15, %20 : vector<16x256xf32>
    %22 = arith.truncf %21 : vector<16x256xf32> to vector<16x256xbf16>
    %c0_7 = arith.constant 0 : index
    %c0_8 = arith.constant 0 : index
    %c0_9 = arith.constant 0 : index
    %23 = vector.load %arg4[%c0_7, %c0_8, %c0_9] : memref<1x16x256xbf16, #tpu.memory_space<vmem>>, vector<1x16x256xbf16>
    %24 = vector.shape_cast %23 : vector<1x16x256xbf16> to vector<16x256xbf16>
    %25 = vector.shape_cast %22 : vector<16x256xbf16> to vector<1x16x256xbf16>
    tpu.vector_store %arg4[%c0_7, %c0_8, %c0_9], %25 {strides = array<i32>} : memref<1x16x256xbf16, #tpu.memory_space<vmem>>, vector<1x16x256xbf16>,
    return
  }
  func.func @transform_0(%arg0: i32, %arg1: i32) -> (i32, i32, i32) {
    %c0_i32 = arith.constant 0 : i32
    %c0_i32_0 = arith.constant 0 : i32
    return %arg0, %c0_i32, %arg1 : i32, i32, i32
  }
  func.func @transform_1(%arg0: i32, %arg1: i32) -> (i32, i32) {
    %c0_i32 = arith.constant 0 : i32
    %c0_i32_0 = arith.constant 0 : i32
    return %c0_i32, %arg1 : i32, i32
  }
  func.func @transform_2(%arg0: i32, %arg1: i32) -> (i32, i32, i32) {
    %c0_i32 = arith.constant 0 : i32
    %c0_i32_0 = arith.constant 0 : i32
    return %arg0, %c0_i32, %arg1 : i32, i32, i32
  }
}

module attributes {stable_mosaic.version = 11 : i64} {
  func.func @_matmul_kernel(%arg0: i32, %arg1: i32, %arg2: i32, %arg3: memref<32x256xbf16, #tpu.memory_space<vmem>>, %arg4: memref<256x128xbf16, #tpu.memory_space<vmem>>, %arg5: memref<32x128xbf16, #tpu.memory_space<vmem>>, %arg6: memref<32x128xf32, #tpu.memory_space<vmem>>) attributes {dimension_semantics = [#tpu.dimension_semantics<parallel>, #tpu.dimension_semantics<parallel>, #tpu.dimension_semantics<arbitrary>], iteration_bounds = array<i64: 1, 1, 1>, scalar_prefetch = 0 : i64, scratch_operands = 1 : i64, tpu.core_type = #tpu.core_type<tc>, window_params = [{transform_indices = @transform_0, window_bounds = array<i64: 32, 256>}, {transform_indices = @transform_1, window_bounds = array<i64: 256, 128>}, {transform_indices = @transform_2, window_bounds = array<i64: 32, 128>}]} {
    %c0_i32 = arith.constant 0 : i32
    %0 = arith.cmpi eq, %arg2, %c0_i32 : i32
    %1 = arith.extui %0 : i1 to i32
    %c0_i32_0 = arith.constant 0 : i32
    %2 = arith.cmpi ne, %1, %c0_i32_0 : i32
    scf.if %2 {
      %cst_10 = arith.constant 0.000000e+00 : f32
      %12 = vector.broadcast %cst_10 : f32 to vector<32x128xf32>
      %c0_11 = arith.constant 0 : index
      %c0_12 = arith.constant 0 : index
      %13 = vector.load %arg6[%c0_11, %c0_12] : memref<32x128xf32, #tpu.memory_space<vmem>>, vector<32x128xf32>
      tpu.vector_store %arg6[%c0_11, %c0_12], %12 {strides = array<i32>} : memref<32x128xf32, #tpu.memory_space<vmem>>, vector<32x128xf32>,
    } else {
    }
    %c0 = arith.constant 0 : index
    %c0_1 = arith.constant 0 : index
    %3 = vector.load %arg6[%c0, %c0_1] : memref<32x128xf32, #tpu.memory_space<vmem>>, vector<32x128xf32>
    %c0_2 = arith.constant 0 : index
    %c0_3 = arith.constant 0 : index
    %4 = vector.load %arg3[%c0_2, %c0_3] : memref<32x256xbf16, #tpu.memory_space<vmem>>, vector<32x256xbf16>
    %c0_4 = arith.constant 0 : index
    %c0_5 = arith.constant 0 : index
    %5 = vector.load %arg4[%c0_4, %c0_5] : memref<256x128xbf16, #tpu.memory_space<vmem>>, vector<256x128xbf16>
    %cst = arith.constant dense<0.000000e+00> : vector<32x128xf32>
    %6 = tpu.matmul %4, %5, %cst {dimension_numbers = #tpu.dot_dimension_numbers<[1], [0], [0], [1], [0, 0, 1, 1], [], []>} : vector<32x256xbf16>, vector<256x128xbf16>, vector<32x128xf32> -> vector<32x128xf32>
    %7 = arith.addf %3, %6 : vector<32x128xf32>
    %c0_6 = arith.constant 0 : index
    %c0_7 = arith.constant 0 : index
    %8 = vector.load %arg6[%c0_6, %c0_7] : memref<32x128xf32, #tpu.memory_space<vmem>>, vector<32x128xf32>
    tpu.vector_store %arg6[%c0_6, %c0_7], %7 {strides = array<i32>} : memref<32x128xf32, #tpu.memory_space<vmem>>, vector<32x128xf32>,
    %c0_i32_8 = arith.constant 0 : i32
    %9 = arith.cmpi eq, %arg2, %c0_i32_8 : i32
    %10 = arith.extui %9 : i1 to i32
    %c0_i32_9 = arith.constant 0 : i32
    %11 = arith.cmpi ne, %10, %c0_i32_9 : i32
    scf.if %11 {
      %c0_10 = arith.constant 0 : index
      %c0_11 = arith.constant 0 : index
      %12 = vector.load %arg6[%c0_10, %c0_11] : memref<32x128xf32, #tpu.memory_space<vmem>>, vector<32x128xf32>
      %13 = arith.truncf %12 : vector<32x128xf32> to vector<32x128xbf16>
      %c0_12 = arith.constant 0 : index
      %c0_13 = arith.constant 0 : index
      %14 = vector.load %arg5[%c0_12, %c0_13] : memref<32x128xbf16, #tpu.memory_space<vmem>>, vector<32x128xbf16>
      tpu.vector_store %arg5[%c0_12, %c0_13], %13 {strides = array<i32>} : memref<32x128xbf16, #tpu.memory_space<vmem>>, vector<32x128xbf16>,
    } else {
    }
    return
  }
  func.func @transform_0(%arg0: i32, %arg1: i32, %arg2: i32) -> (i32, i32) {
    %c0_i32 = arith.constant 0 : i32
    return %arg0, %arg2 : i32, i32
  }
  func.func @transform_1(%arg0: i32, %arg1: i32, %arg2: i32) -> (i32, i32) {
    %c0_i32 = arith.constant 0 : i32
    return %arg2, %arg1 : i32, i32
  }
  func.func @transform_2(%arg0: i32, %arg1: i32, %arg2: i32) -> (i32, i32) {
    %c0_i32 = arith.constant 0 : i32
    return %arg0, %arg1 : i32, i32
  }
}

module attributes {stable_mosaic.version = 11 : i64} {
  func.func @_bla_chunk_kernel(%arg0: i32, %arg1: i32, %arg2: i32, %arg3: memref<1x16x128xbf16, #tpu.memory_space<vmem>>, %arg4: memref<1x16x128xbf16, #tpu.memory_space<vmem>>, %arg5: memref<1x16x128xbf16, #tpu.memory_space<vmem>>, %arg6: memref<1x1x1x1x16xf32, #tpu.memory_space<vmem>>, %arg7: memref<1x1x1x16x2xf32, #tpu.memory_space<vmem>>, %arg8: memref<1x16x128xbf16, #tpu.memory_space<vmem>>, %arg9: memref<1x128xf32, #tpu.memory_space<vmem>>, %arg10: memref<1x16x128xbf16, #tpu.memory_space<vmem>>, %arg11: memref<128x128xf32, #tpu.memory_space<vmem>>) attributes {dimension_semantics = [#tpu.dimension_semantics<parallel>, #tpu.dimension_semantics<parallel>, #tpu.dimension_semantics<arbitrary>], iteration_bounds = array<i64: 2, 2, 1>, scalar_prefetch = 0 : i64, scratch_operands = 1 : i64, tpu.core_type = #tpu.core_type<tc>, window_params = [{transform_indices = @transform_0, window_bounds = array<i64: 1, 16, 128>}, {transform_indices = @transform_1, window_bounds = array<i64: 1, 16, 128>}, {transform_indices = @transform_2, window_bounds = array<i64: 1, 16, 128>}, {transform_indices = @transform_3, window_bounds = array<i64: 1, 1, 1, 1, 16>}, {transform_indices = @transform_4, window_bounds = array<i64: 1, 1, 1, 16, 2>}, {transform_indices = @transform_5, window_bounds = array<i64: 1, 16, 128>}, {pipeline_mode = #tpu.pipeline_mode<synchronous>, transform_indices = @transform_6, window_bounds = array<i64: 1, 128>}, {transform_indices = @transform_7, window_bounds = array<i64: 1, 16, 128>}]} {
    %c0_i32 = arith.constant 0 : i32
    %0 = arith.cmpi eq, %arg2, %c0_i32 : i32
    %1 = arith.extui %0 : i1 to i32
    %c0_i32_0 = arith.constant 0 : i32
    %2 = arith.cmpi ne, %1, %c0_i32_0 : i32
    scf.if %2 {
      %cst_38 = arith.constant 0.000000e+00 : f32
      %109 = vector.broadcast %cst_38 : f32 to vector<128x128xf32>
      %c0_39 = arith.constant 0 : index
      %c0_40 = arith.constant 0 : index
      %110 = vector.load %arg11[%c0_39, %c0_40] : memref<128x128xf32, #tpu.memory_space<vmem>>, vector<128x128xf32>
      tpu.vector_store %arg11[%c0_39, %c0_40], %109 {strides = array<i32>} : memref<128x128xf32, #tpu.memory_space<vmem>>, vector<128x128xf32>,
    } else {
    }
    %c0 = arith.constant 0 : index
    %c0_1 = arith.constant 0 : index
    %3 = vector.load %arg9[%c0, %c0_1] : memref<1x128xf32, #tpu.memory_space<vmem>>, vector<1x128xf32>
    %4 = tpu.iota {dimensions = array<i32: 0>} : vector<16x16xi32>
    %5 = tpu.iota {dimensions = array<i32: 1>} : vector<16x16xi32>
    %6 = arith.cmpi sge, %4, %5 : vector<16x16xi32>
    %c0_2 = arith.constant 0 : index
    %c0_3 = arith.constant 0 : index
    %7 = vector.load %arg11[%c0_2, %c0_3] : memref<128x128xf32, #tpu.memory_space<vmem>>, vector<128x128xf32>
    %c0_i32_4 = arith.constant 0 : i32
    %c16_i32 = arith.constant 16 : i32
    %8 = arith.muli %c0_i32_4, %c16_i32 : i32
    %9 = tpu.assume_multiple %8, 16 : i32
    %c0_5 = arith.constant 0 : index
    %10 = arith.index_cast %9 : i32 to index
    %c0_6 = arith.constant 0 : index
    %11 = vector.load %arg3[%c0_5, %10, %c0_6] : memref<1x16x128xbf16, #tpu.memory_space<vmem>>, vector<1x16x128xbf16>
    %12 = vector.shape_cast %11 : vector<1x16x128xbf16> to vector<16x128xbf16>
    %13 = arith.extf %12 : vector<16x128xbf16> to vector<16x128xf32>
    %c0_7 = arith.constant 0 : index
    %14 = arith.index_cast %9 : i32 to index
    %c0_8 = arith.constant 0 : index
    %15 = vector.load %arg4[%c0_7, %14, %c0_8] : memref<1x16x128xbf16, #tpu.memory_space<vmem>>, vector<1x16x128xbf16>
    %16 = vector.shape_cast %15 : vector<1x16x128xbf16> to vector<16x128xbf16>
    %17 = arith.extf %16 : vector<16x128xbf16> to vector<16x128xf32>
    %c0_9 = arith.constant 0 : index
    %18 = arith.index_cast %9 : i32 to index
    %c0_10 = arith.constant 0 : index
    %19 = vector.load %arg5[%c0_9, %18, %c0_10] : memref<1x16x128xbf16, #tpu.memory_space<vmem>>, vector<1x16x128xbf16>
    %20 = vector.shape_cast %19 : vector<1x16x128xbf16> to vector<16x128xbf16>
    %c0_11 = arith.constant 0 : index
    %c0_12 = arith.constant 0 : index
    %c0_13 = arith.constant 0 : index
    %21 = arith.index_cast %9 : i32 to index
    %c0_14 = arith.constant 0 : index
    %22 = vector.load %arg7[%c0_11, %c0_12, %c0_13, %21, %c0_14] : memref<1x1x1x16x2xf32, #tpu.memory_space<vmem>>, vector<1x1x1x16x2xf32>
    %23 = vector.shape_cast %22 : vector<1x1x1x16x2xf32> to vector<16x2xf32>
    %24 = vector.extract_strided_slice %23 {offsets = [0, 0], sizes = [16, 1], strides = [1, 1]} : vector<16x2xf32> to vector<16x1xf32>
    %25 = vector.extract_strided_slice %23 {offsets = [0, 1], sizes = [16, 1], strides = [1, 1]} : vector<16x2xf32> to vector<16x1xf32>
    %c0_15 = arith.constant 0 : index
    %c0_16 = arith.constant 0 : index
    %c0_17 = arith.constant 0 : index
    %26 = arith.index_cast %c0_i32_4 : i32 to index
    %c0_18 = arith.constant 0 : index
    %27 = vector.load %arg6[%c0_15, %c0_16, %c0_17, %26, %c0_18] : memref<1x1x1x1x16xf32, #tpu.memory_space<vmem>>, vector<1x1x1x1x16xf32>
    %28 = vector.shape_cast %27 : vector<1x1x1x1x16xf32> to vector<1x16xf32>
    %29 = arith.mulf %13, %13 : vector<16x128xf32>
    %cst = arith.constant dense<0.000000e+00> : vector<16xf32>
    %30 = vector.multi_reduction <add>, %29, %cst [1] : vector<16x128xf32> to vector<16xf32>
    %31 = vector.shape_cast %30 : vector<16xf32> to vector<16x1xf32>
    %cst_19 = arith.constant 9.99999997E-7 : f32
    %32 = vector.broadcast %cst_19 : f32 to vector<16x1xf32>
    %33 = arith.addf %31, %32 : vector<16x1xf32>
    %34 = math.rsqrt %33 : vector<16x1xf32>
    %35 = vector.broadcast %34 : vector<16x1xf32> to vector<16x128xf32>
    %36 = arith.mulf %13, %35 : vector<16x128xf32>
    %37 = arith.mulf %17, %17 : vector<16x128xf32>
    %cst_20 = arith.constant dense<0.000000e+00> : vector<16xf32>
    %38 = vector.multi_reduction <add>, %37, %cst_20 [1] : vector<16x128xf32> to vector<16xf32>
    %39 = vector.shape_cast %38 : vector<16xf32> to vector<16x1xf32>
    %cst_21 = arith.constant 9.99999997E-7 : f32
    %40 = vector.broadcast %cst_21 : f32 to vector<16x1xf32>
    %41 = arith.addf %39, %40 : vector<16x1xf32>
    %42 = math.rsqrt %41 : vector<16x1xf32>
    %43 = vector.broadcast %42 : vector<16x1xf32> to vector<16x128xf32>
    %44 = arith.mulf %17, %43 : vector<16x128xf32>
    %cst_22 = arith.constant 0.0883883461 : f32
    %45 = vector.broadcast %cst_22 : f32 to vector<16x128xf32>
    %46 = arith.mulf %36, %45 : vector<16x128xf32>
    %47 = vector.broadcast %25 : vector<16x1xf32> to vector<16x128xf32>
    %48 = arith.mulf %44, %47 : vector<16x128xf32>
    %49 = vector.broadcast %24 : vector<16x1xf32> to vector<16x16xf32>
    %50 = vector.broadcast %28 : vector<1x16xf32> to vector<16x16xf32>
    %51 = arith.subf %49, %50 : vector<16x16xf32>
    %cst_23 = arith.constant -1.000000e+30 : f32
    %52 = vector.broadcast %cst_23 : f32 to vector<16x16xf32>
    %53 = arith.select %6, %51, %52 : vector<16x16xi1>, vector<16x16xf32>
    %54 = math.exp %53 : vector<16x16xf32>
    %55 = arith.truncf %46 : vector<16x128xf32> to vector<16x128xbf16>
    %56 = arith.truncf %48 : vector<16x128xf32> to vector<16x128xbf16>
    %cst_24 = arith.constant dense<0.000000e+00> : vector<16x16xf32>
    %57 = tpu.matmul %55, %56, %cst_24 {dimension_numbers = #tpu.dot_dimension_numbers<[1], [1], [0], [0], [0, 0, 1, 0], [], []>} : vector<16x128xbf16>, vector<16x128xbf16>, vector<16x16xf32> -> vector<16x16xf32>
    %58 = arith.mulf %57, %54 : vector<16x16xf32>
    %59 = arith.truncf %58 : vector<16x16xf32> to vector<16x16xbf16>
    %cst_25 = arith.constant dense<0.000000e+00> : vector<16x128xf32>
    %60 = tpu.matmul %59, %20, %cst_25 {dimension_numbers = #tpu.dot_dimension_numbers<[1], [0], [0], [1], [0, 0, 1, 1], [], []>} : vector<16x16xbf16>, vector<16x128xbf16>, vector<16x128xf32> -> vector<16x128xf32>
    %61 = math.exp %24 : vector<16x1xf32>
    %62 = vector.broadcast %61 : vector<16x1xf32> to vector<16x128xf32>
    %63 = arith.mulf %46, %62 : vector<16x128xf32>
    %64 = arith.truncf %63 : vector<16x128xf32> to vector<16x128xbf16>
    %65 = arith.truncf %7 : vector<128x128xf32> to vector<128x128xbf16>
    %cst_26 = arith.constant dense<0.000000e+00> : vector<16x128xf32>
    %66 = tpu.matmul %64, %65, %cst_26 {dimension_numbers = #tpu.dot_dimension_numbers<[1], [0], [0], [1], [0, 0, 1, 1], [], []>} : vector<16x128xbf16>, vector<128x128xbf16>, vector<16x128xf32> -> vector<16x128xf32>
    %67 = vector.extract_strided_slice %28 {offsets = [0, 15], sizes = [1, 1], strides = [1, 1]} : vector<1x16xf32> to vector<1x1xf32>
    %68 = vector.broadcast %67 : vector<1x1xf32> to vector<16x1xf32>
    %69 = arith.subf %68, %24 : vector<16x1xf32>
    %70 = math.exp %69 : vector<16x1xf32>
    %71 = vector.broadcast %70 : vector<16x1xf32> to vector<16x128xf32>
    %72 = arith.mulf %48, %71 : vector<16x128xf32>
    %73 = arith.truncf %72 : vector<16x128xf32> to vector<16x128xbf16>
    %cst_27 = arith.constant dense<0.000000e+00> : vector<128x128xf32>
    %74 = tpu.matmul %73, %20, %cst_27 {dimension_numbers = #tpu.dot_dimension_numbers<[0], [0], [1], [1], [0, 1, 1, 1], [], []>} : vector<16x128xbf16>, vector<16x128xbf16>, vector<128x128xf32> -> vector<128x128xf32>
    %75 = math.exp %67 : vector<1x1xf32>
    %76 = vector.broadcast %75 : vector<1x1xf32> to vector<128x128xf32>
    %77 = arith.mulf %76, %7 : vector<128x128xf32>
    %78 = arith.addf %77, %74 : vector<128x128xf32>
    %79 = arith.addf %60, %66 : vector<16x128xf32>
    %80 = arith.mulf %79, %79 : vector<16x128xf32>
    %cst_28 = arith.constant dense<0.000000e+00> : vector<16xf32>
    %81 = vector.multi_reduction <add>, %80, %cst_28 [1] : vector<16x128xf32> to vector<16xf32>
    %82 = vector.shape_cast %81 : vector<16xf32> to vector<16x1xf32>
    %cst_29 = arith.constant 1.280000e+02 : f32
    %83 = vector.broadcast %cst_29 : f32 to vector<16x1xf32>
    %84 = arith.divf %82, %83 : vector<16x1xf32>
    %cst_30 = arith.constant 9.99999974E-6 : f32
    %85 = vector.broadcast %cst_30 : f32 to vector<16x1xf32>
    %86 = arith.addf %84, %85 : vector<16x1xf32>
    %87 = math.rsqrt %86 : vector<16x1xf32>
    %88 = vector.broadcast %87 : vector<16x1xf32> to vector<16x128xf32>
    %89 = arith.mulf %79, %88 : vector<16x128xf32>
    %c0_31 = arith.constant 0 : index
    %90 = arith.index_cast %9 : i32 to index
    %c0_32 = arith.constant 0 : index
    %91 = vector.load %arg8[%c0_31, %90, %c0_32] : memref<1x16x128xbf16, #tpu.memory_space<vmem>>, vector<1x16x128xbf16>
    %92 = vector.shape_cast %91 : vector<1x16x128xbf16> to vector<16x128xbf16>
    %93 = arith.extf %92 : vector<16x128xbf16> to vector<16x128xf32>
    %94 = vector.broadcast %3 : vector<1x128xf32> to vector<16x128xf32>
    %95 = arith.mulf %89, %94 : vector<16x128xf32>
    %96 = arith.negf %93 : vector<16x128xf32>
    %97 = math.exp %96 : vector<16x128xf32>
    %cst_33 = arith.constant 1.000000e+00 : f32
    %98 = vector.broadcast %cst_33 : f32 to vector<16x128xf32>
    %99 = arith.addf %98, %97 : vector<16x128xf32>
    %100 = arith.divf %98, %99 : vector<16x128xf32>
    %101 = arith.mulf %93, %100 : vector<16x128xf32>
    %102 = arith.mulf %95, %101 : vector<16x128xf32>
    %103 = arith.truncf %102 : vector<16x128xf32> to vector<16x128xbf16>
    %c0_34 = arith.constant 0 : index
    %104 = arith.index_cast %9 : i32 to index
    %c0_35 = arith.constant 0 : index
    %105 = vector.load %arg10[%c0_34, %104, %c0_35] : memref<1x16x128xbf16, #tpu.memory_space<vmem>>, vector<1x16x128xbf16>
    %106 = vector.shape_cast %105 : vector<1x16x128xbf16> to vector<16x128xbf16>
    %107 = vector.shape_cast %103 : vector<16x128xbf16> to vector<1x16x128xbf16>
    tpu.vector_store %arg10[%c0_34, %104, %c0_35], %107 {strides = array<i32>} : memref<1x16x128xbf16, #tpu.memory_space<vmem>>, vector<1x16x128xbf16>,
    %c1_i32 = arith.constant 1 : i32
    %c0_36 = arith.constant 0 : index
    %c0_37 = arith.constant 0 : index
    %108 = vector.load %arg11[%c0_36, %c0_37] : memref<128x128xf32, #tpu.memory_space<vmem>>, vector<128x128xf32>
    tpu.vector_store %arg11[%c0_36, %c0_37], %78 {strides = array<i32>} : memref<128x128xf32, #tpu.memory_space<vmem>>, vector<128x128xf32>,
    return
  }
  func.func @transform_0(%arg0: i32, %arg1: i32, %arg2: i32) -> (i32, i32, i32) {
    %c0_i32 = arith.constant 0 : i32
    return %arg0, %arg2, %arg1 : i32, i32, i32
  }
  func.func @transform_1(%arg0: i32, %arg1: i32, %arg2: i32) -> (i32, i32, i32) {
    %c0_i32 = arith.constant 0 : i32
    return %arg0, %arg2, %arg1 : i32, i32, i32
  }
  func.func @transform_2(%arg0: i32, %arg1: i32, %arg2: i32) -> (i32, i32, i32) {
    %c0_i32 = arith.constant 0 : i32
    return %arg0, %arg2, %arg1 : i32, i32, i32
  }
  func.func @transform_3(%arg0: i32, %arg1: i32, %arg2: i32) -> (i32, i32, i32, i32, i32) {
    %c0_i32 = arith.constant 0 : i32
    %c0_i32_0 = arith.constant 0 : i32
    %c0_i32_1 = arith.constant 0 : i32
    return %arg0, %arg1, %arg2, %c0_i32, %c0_i32_0 : i32, i32, i32, i32, i32
  }
  func.func @transform_4(%arg0: i32, %arg1: i32, %arg2: i32) -> (i32, i32, i32, i32, i32) {
    %c0_i32 = arith.constant 0 : i32
    %c0_i32_0 = arith.constant 0 : i32
    %c0_i32_1 = arith.constant 0 : i32
    return %arg0, %arg1, %arg2, %c0_i32, %c0_i32_0 : i32, i32, i32, i32, i32
  }
  func.func @transform_5(%arg0: i32, %arg1: i32, %arg2: i32) -> (i32, i32, i32) {
    %c0_i32 = arith.constant 0 : i32
    return %arg0, %arg2, %arg1 : i32, i32, i32
  }
  func.func @transform_6(%arg0: i32, %arg1: i32, %arg2: i32) -> (i32, i32) {
    %c0_i32 = arith.constant 0 : i32
    %c0_i32_0 = arith.constant 0 : i32
    %c0_i32_1 = arith.constant 0 : i32
    return %c0_i32, %c0_i32_0 : i32, i32
  }
  func.func @transform_7(%arg0: i32, %arg1: i32, %arg2: i32) -> (i32, i32, i32) {
    %c0_i32 = arith.constant 0 : i32
    return %arg0, %arg2, %arg1 : i32, i32, i32
  }
}

</mosaic_0001>

<llo_original>
// kernel: bilinear_attention_forward.6
$region0: #{bilinear_attention_forward.6}
  #allocation0 [shape = 'u32[]', space=smem, size = 0x4, offset = 0x4, fixed_abs, tag = 'smem constant byte address 0x4 - core index']
  #allocation1 [shape = 'u32[144,128]{1,0:T(1,128)}', space=vmem, size = 0x12000, scoped, tag = 'internal scratch']
  #allocation2 [shape = 'f32[32,256]{1,0:T(8,128)}', space=vmem, size = 0x8000, scoped, tag = 'scratch operand']
  %s0 = inlined_call_operand.vmem [shape: bf16[32,128], index: 0, kind: input, shape index: {}]
  %s1 = inlined_call_operand.hbm [shape: bf16[128,1280], index: 1, kind: input, shape index: {}]
  %s2 = inlined_call_operand.vmem [shape: bf16[32,1280], index: 2, kind: output, shape index: {}]
  %s3 = sld [smem:[#allocation0]]
  $region87: #{bilinear_attention_forward.6} parent=0
    _
  %s5 = ssub.s32 1, %s3
  %s6 = scalar_select 0, %s5, %s3
  $region1: #{bilinear_attention_forward.6} parent=0
    #allocation3 [shape = 'u8[131072]{0}', space=vmem, size = 0x20000, scoped, tag = 'input window, operand 1']
    #allocation4 [shape = 's32[2]{0}', space=sflag, size = 0x8, scoped, tag = 'scoped memory for bilinear_attention_forward.6']
    #allocation5 [shape = 'u8[32768]{0}', space=vmem, size = 0x8000, scoped, tag = 'output window, operand 0']
    %7 = vsyncpa [#allocation4], 0
    %s8 = scalar_lea.sflag [#allocation4], 1
    %9 = vsyncpa %s8, 0
    loop: start=0, step=1, limit=7
    $region2: #{bilinear_attention_forward.6} parent=1 // loop_pre_header
      _
    $region3: #{bilinear_attention_forward.6} parent=1 // loop_header
      %s11 = sphi 0, %s15
      %p12 = scmp.ge.s32.totalorder %s11, 7
      %s18 = sphi 0, %s37
      %s19 = sphi 0, %s33
      %s20 = sphi 0, %s29
      %s21 = sphi 0, %s18
      %s22 = sphi 0, %s19
      %s23 = sphi 0, %s20
      %s24 = sphi 0, %s21
      %s25 = sphi 0, %s22
      %s26 = sphi 0, %s23
      %s42 = sphi 0, %s44
      %s45 = sphi 0, %s42
      %s46 = sphi 0, %s45
      %s62 = sphi 0, %s46
      %s70 = sphi 0, %s72
      %s73 = sphi 0, %s70
      %s74 = sphi 0, %s73
      %s90 = sphi 0, %s74
      %s98 = sphi 0, %s100
      %s101 = sphi 0, %s98
      %s102 = sphi 0, %s101
      %s118 = sphi 0, %s102
    $region4: #{bilinear_attention_forward.6} parent=1 // loop_header_branch
      %14 = sbr.rel (%p12) target = $region8
    $region5: #{bilinear_attention_forward.6} parent=1 // loop_body
      %s16 = ssub.s32 %s11, 1
      %s17 = ssub.s32 %s11, 2
      %s27 = sadd.s32 1, %s20
      %p28 = scmp.ge.s32.totalorder %s27, 1
      %s29 = scalar_select %p28, 0, %s27
      %s30 = sadd.s32 1, %s19
      %s31 = scalar_select %p28, %s30, %s19
      %p32 = scmp.ge.s32.totalorder %s31, 5
      %s33 = scalar_select %p32, 0, %s31
      %s34 = sadd.s32 1, %s18
      %s35 = scalar_select %p32, %s34, %s18
      %p36 = scmp.ge.s32.totalorder %s35, 1
      %s37 = scalar_select %p36, 0, %s35
      %s38 = ssub.s32 %s18, %s37
      %s39 = ssub.s32 %s20, %s29
      %s40 = sor.u32 %s38, %s39
      %p41 = scmp.eq.s32.totalorder %s40, 0
      %s43 = sadd.s32 %s42, 1
      %s44 = scalar_select %p41, %s42, %s43
      %p47 = pneg %p41
      %p48 = scmp.eq.s32.totalorder %s11, 4
      %p49 = por %p47, %p48
      %p50 = scmp.ne.s32.totalorder %s42, %s45
      %p51 = scmp.eq.s32.totalorder %s11, 0
      %p52 = por %p50, %p51
      %p53 = scmp.ne.s32.totalorder %s42, %s45
      %p54 = scmp.eq.s32.totalorder %s16, 4
      %p55 = por %p53, %p54
      %p56 = scmp.ne.s32.totalorder %s45, %s46
      %p57 = scmp.eq.s32.totalorder %s16, 0
      %p58 = por %p56, %p57
      %p59 = scmp.ne.s32.totalorder %s45, %s46
      %p60 = scmp.eq.s32.totalorder %s17, 4
      %p61 = por %p59, %p60
      %p63 = scmp.ne.s32.totalorder %s46, %s62
      %p64 = scmp.eq.s32.totalorder %s17, 0
      %p65 = por %p63, %p64
      %s66 = ssub.s32 %s20, %s29
      %s67 = ssub.s32 %s19, %s33
      %s68 = sor.u32 %s66, %s67
      %p69 = scmp.eq.s32.totalorder %s68, 0
      %s71 = sadd.s32 %s70, 1
      %s72 = scalar_select %p69, %s70, %s71
      %p75 = pneg %p69
      %p76 = scmp.eq.s32.totalorder %s11, 4
      %p77 = por %p75, %p76
      %p78 = scmp.ne.s32.totalorder %s70, %s73
      %p79 = scmp.eq.s32.totalorder %s11, 0
      %p80 = por %p78, %p79
      %p81 = scmp.ne.s32.totalorder %s70, %s73
      %p82 = scmp.eq.s32.totalorder %s16, 4
      %p83 = por %p81, %p82
      %p84 = scmp.ne.s32.totalorder %s73, %s74
      %p85 = scmp.eq.s32.totalorder %s16, 0
      %p86 = por %p84, %p85
      %p87 = scmp.ne.s32.totalorder %s73, %s74
      %p88 = scmp.eq.s32.totalorder %s17, 4
      %p89 = por %p87, %p88
      %p91 = scmp.ne.s32.totalorder %s74, %s90
      %p92 = scmp.eq.s32.totalorder %s17, 0
      %p93 = por %p91, %p92
      %s94 = ssub.s32 %s18, %s37
      %s95 = ssub.s32 %s19, %s33
      %s96 = sor.u32 %s94, %s95
      %p97 = scmp.eq.s32.totalorder %s96, 0
      %s99 = sadd.s32 %s98, 1
      %s100 = scalar_select %p97, %s98, %s99
      %p103 = pneg %p97
      %p104 = scmp.eq.s32.totalorder %s11, 4
      %p105 = por %p103, %p104
      %p106 = scmp.ne.s32.totalorder %s98, %s101
      %p107 = scmp.eq.s32.totalorder %s11, 0
      %p108 = por %p106, %p107
      %p109 = scmp.ne.s32.totalorder %s98, %s101
      %p110 = scmp.eq.s32.totalorder %s16, 4
      %p111 = por %p109, %p110
      %p112 = scmp.ne.s32.totalorder %s101, %s102
      %p113 = scmp.eq.s32.totalorder %s16, 0
      %p114 = por %p112, %p113
      %p115 = scmp.ne.s32.totalorder %s101, %s102
      %p116 = scmp.eq.s32.totalorder %s17, 4
      %p117 = por %p115, %p116
      %p119 = scmp.ne.s32.totalorder %s102, %s118
      %p120 = scmp.eq.s32.totalorder %s17, 0
      %p121 = por %p119, %p120
      %p122 = scmp.le.s32.totalorder 1, %s11
      %p123 = scmp.lt.s32.totalorder %s11, 6
      %p124 = pnand %p122, %p123
      %p125 = pneg %p124
      // Predicated region
      $region9: #{bilinear_attention_forward.6} parent=5 // pred_check
        _
      $region10: #{bilinear_attention_forward.6} parent=5 // pred_check_branch
        %127 = sbr.rel (%p124) target = $region12
      $region11: #{bilinear_attention_forward.6} parent=5 // pred_region
        %s128 = ssub.s32 %s11, 1
        // Predicated region
        $region13: #{bilinear_attention_forward.6} parent=11 // pred_check
          %p129 = pneg %p58
        $region14: #{bilinear_attention_forward.6} parent=11 // pred_check_branch
          %131 = sbr.rel (%p129) target = $region16
        $region15: #{bilinear_attention_forward.6} parent=11 // pred_region
          %s132 = smul.u32 4, %s21
          %p133 = scmp.lt.s32.totalorder %s132, 3
          %s134 = scalar_select %p133, %s132, 3
          %p135 = scmp.lt.s32.totalorder %s23, 0
          %s136 = scalar_select %p135, %s23, 0
          %s137 = sadd.s32 %s136, %s134
          %s138 = smul.addr %s137, 4
          %s139 = scalar_lea.vmem %s0, %s138
          %s140 = smul.u32 4, %s21
        $region16: #{bilinear_attention_forward.6} parent=11 // pred_fallthru
          _
      $region12: #{bilinear_attention_forward.6} parent=5 // pred_fallthru
        _
      %p141 = scmp.lt.s32.totalorder %s11, 5
      // Predicated region
      $region17: #{bilinear_attention_forward.6} parent=5 // pred_check
        %p142 = pneg %p141
      $region18: #{bilinear_attention_forward.6} parent=5 // pred_check_branch
        %144 = sbr.rel (%p142) target = $region20
      $region19: #{bilinear_attention_forward.6} parent=5 // pred_region
        // Predicated region
        $region21: #{bilinear_attention_forward.6} parent=19 // pred_check
          %p145 = pneg %p80
        $region22: #{bilinear_attention_forward.6} parent=19 // pred_check_branch
          %147 = sbr.rel (%p145) target = $region24
        $region23: #{bilinear_attention_forward.6} parent=19 // pred_region
          %s148 = sand.u32 %s70, 1
          %s149 = scalar_lea.sflag [#allocation4], %s148
          %s150 = sand.u32 %s70, 1
          %s151 = smul.addr %s150, 128
          %s152 = scalar_lea.vmem [#allocation3], %s151
          %s153 = smul.u32 16, %s20
          %s154 = smul.u32 2, %s19
          %s156 = ssub.s32 2048, 2048
          %157 = vsyncadd %s149, %s156
          %s158 = smul.addr %s153, 10
          %s159 = sadd.s32 %s154, %s158
          %s160 = smul.addr %s159, 64
          %s161 = scalar_lea.hbm %s1, %s160
          %s162 = sshll.u32 %s152, 4
          %s163 = int_to_ptr.vmem [resolvable:$true] %s162
          %168 = dma.hbm_to_vmem [thread:$0]  %s161, 2048, %s163, %s149, 640, 128, 8
        $region24: #{bilinear_attention_forward.6} parent=19 // pred_fallthru
          _
      $region20: #{bilinear_attention_forward.6} parent=5 // pred_fallthru
        _
      %p169 = scmp.le.s32.totalorder 1, %s11
      %p170 = scmp.lt.s32.totalorder %s11, 6
      %p171 = pnand %p169, %p170
      %p172 = pneg %p171
      // Predicated region
      $region25: #{bilinear_attention_forward.6} parent=5 // pred_check
        _
      $region26: #{bilinear_attention_forward.6} parent=5 // pred_check_branch
        %174 = sbr.rel (%p171) target = $region28
      $region27: #{bilinear_attention_forward.6} parent=5 // pred_region
        %s175 = ssub.s32 %s11, 1
        %s176 = sand.u32 %s73, 1
        %s177 = scalar_lea.sflag [#allocation4], %s176
        %s178 = sand.u32 %s73, 1
        %s179 = smul.addr %s178, 128
        %s180 = scalar_lea.vmem [#allocation3], %s179
        // Predicated region
        $region29: #{bilinear_attention_forward.6} parent=27 // pred_check
          %p181 = pneg %p86
        $region30: #{bilinear_attention_forward.6} parent=27 // pred_check_branch
          %183 = sbr.rel (%p181) target = $region32
        $region31: #{bilinear_attention_forward.6} parent=27 // pred_region
          %184 = dma.done %s177, 2048
        $region32: #{bilinear_attention_forward.6} parent=27 // pred_fallthru
          _
        %s185 = smul.u32 4, %s21
        %p186 = scmp.lt.s32.totalorder %s185, 3
        %s187 = scalar_select %p186, %s185, 3
        %p188 = scmp.lt.s32.totalorder %s23, 0
        %s189 = scalar_select %p188, %s23, 0
        %s190 = sadd.s32 %s189, %s187
        %s191 = smul.addr %s190, 4
        %s192 = scalar_lea.vmem %s0, %s191
        %p193 = pneg %p58
        %p194 = pneg %p55
        %s195 = sand.u32 %s73, 1
        %s196 = scalar_lea.sflag [#allocation4], %s195
        %s197 = sand.u32 %s73, 1
        %s198 = smul.addr %s197, 128
        %s199 = scalar_lea.vmem [#allocation3], %s198
        %p200 = pneg %p86
        %p201 = pneg %p83
        %p202 = pneg %p114
        %p203 = pneg %p111
        %s204 = sand.u32 %s101, 1
        %s205 = sand.u32 %s101, 1
        %s206 = smul.addr %s205, 32
        %s207 = scalar_lea.vmem [#allocation5], %s206
        %s208 = smul.u32 4, %s21
        %p209 = scmp.lt.s32.totalorder %s208, 3
        %s210 = scalar_select %p209, %s208, 3
        %p211 = scmp.lt.s32.totalorder %s23, 0
        %s212 = scalar_select %p211, %s23, 0
        %s213 = sadd.s32 %s212, %s210
        %s214 = smul.addr %s213, 4
        %s215 = scalar_lea.vmem %s0, %s214
        %s216 = smul.u32 4, %s21
        %s217 = smul.u32 16, %s23
        %s218 = smul.u32 2, %s22
        %s219 = smul.u32 4, %s21
        %s220 = smul.u32 2, %s22
        %p222 = scmp.eq.s32.totalorder %s23, 0
        // Predicated region
        $region33: #{bilinear_attention_forward.6} parent=27 // pred_check
          %p223 = pneg %p222
        $region34: #{bilinear_attention_forward.6} parent=27 // pred_check_branch
          %225 = sbr.rel (%p223) target = $region36
        $region35: #{bilinear_attention_forward.6} parent=27 // pred_region
          %226 = vst [vmem:[#allocation2] sm:$0xff] 0.0
          %227 = vst [vmem:[#allocation2 + $0x8] sm:$0xff] 0.0
          %228 = vst [vmem:[#allocation2 + $0x10] sm:$0xff] 0.0
          %229 = vst [vmem:[#allocation2 + $0x18] sm:$0xff] 0.0
          %230 = vst [vmem:[#allocation2 + $0x20] sm:$0xff] 0.0
          %231 = vst [vmem:[#allocation2 + $0x28] sm:$0xff] 0.0
          %232 = vst [vmem:[#allocation2 + $0x30] sm:$0xff] 0.0
          %233 = vst [vmem:[#allocation2 + $0x38] sm:$0xff] 0.0
        $region36: #{bilinear_attention_forward.6} parent=27 // pred_fallthru
          _
        %v234 = vld [vmem:[#allocation2] sm:$0xff]
        %v235 = vld [vmem:[#allocation2 + $0x8] sm:$0xff]
        %v236 = vld [vmem:[#allocation2 + $0x10] sm:$0xff]
        %v237 = vld [vmem:[#allocation2 + $0x18] sm:$0xff]
        %v238 = vld [vmem:[#allocation2 + $0x20] sm:$0xff]
        %v239 = vld [vmem:[#allocation2 + $0x28] sm:$0xff]
        %v240 = vld [vmem:[#allocation2 + $0x30] sm:$0xff]
        %v241 = vld [vmem:[#allocation2 + $0x38] sm:$0xff]
        %v242 = vld [vmem:[%s215] sm:$0xf]
        %v243 = vld [vmem:[%s215 + $0x4] sm:$0xf]
        %v244 = vld [vmem:[%s215 + $0x8] sm:$0xf]
        %v245 = vld [vmem:[%s215 + $0xc] sm:$0xf]
        %v246 = vld [vmem:[%s180] sm:$0xff]
        %v247 = vld [vmem:[%s180 + $0x8] sm:$0xff]
        %v248 = vld [vmem:[%s180 + $0x10] sm:$0xff]
        %v249 = vld [vmem:[%s180 + $0x18] sm:$0xff]
        %v250 = vld [vmem:[%s180 + $0x20] sm:$0xff]
        %v251 = vld [vmem:[%s180 + $0x28] sm:$0xff]
        %v252 = vld [vmem:[%s180 + $0x30] sm:$0xff]
        %v253 = vld [vmem:[%s180 + $0x38] sm:$0xff]
        %v254 = vld [vmem:[%s180 + $0x40] sm:$0xff]
        %v255 = vld [vmem:[%s180 + $0x48] sm:$0xff]
        %v256 = vld [vmem:[%s180 + $0x50] sm:$0xff]
        %v257 = vld [vmem:[%s180 + $0x58] sm:$0xff]
        %v258 = vld [vmem:[%s180 + $0x60] sm:$0xff]
        %v259 = vld [vmem:[%s180 + $0x68] sm:$0xff]
        %v260 = vld [vmem:[%s180 + $0x70] sm:$0xff]
        %v261 = vld [vmem:[%s180 + $0x78] sm:$0xff]
        %v266 = vunpack.c.l.b16 %v242
        %v267 = vunpack.c.l.b16 %v243
        %v268 = vunpack.c.l.b16 %v244
        %v269 = vunpack.c.l.b16 %v245
        %v270 = vpack.c.b16 %v267, %v266
        %v271 = vpack.c.b16 %v269, %v268
        %v290 = vunpack.c.l.b16 %v246
        %v291 = vunpack.c.h.b16 %v246
        %v292 = vunpack.c.l.b16 %v247
        %v293 = vunpack.c.h.b16 %v247
        %v294 = vunpack.c.l.b16 %v248
        %v295 = vunpack.c.h.b16 %v248
        %v296 = vunpack.c.l.b16 %v249
        %v297 = vunpack.c.h.b16 %v249
        %v298 = vunpack.c.l.b16 %v250
        %v299 = vunpack.c.h.b16 %v250
        %v300 = vunpack.c.l.b16 %v251
        %v301 = vunpack.c.h.b16 %v251
        %v302 = vunpack.c.l.b16 %v252
        %v303 = vunpack.c.h.b16 %v252
        %v304 = vunpack.c.l.b16 %v253
        %v305 = vunpack.c.h.b16 %v253
        %v306 = vunpack.c.l.b16 %v254
        %v307 = vunpack.c.h.b16 %v254
        %v308 = vunpack.c.l.b16 %v255
        %v309 = vunpack.c.h.b16 %v255
        %v310 = vunpack.c.l.b16 %v256
        %v311 = vunpack.c.h.b16 %v256
        %v312 = vunpack.c.l.b16 %v257
        %v313 = vunpack.c.h.b16 %v257
        %v314 = vunpack.c.l.b16 %v258
        %v315 = vunpack.c.h.b16 %v258
        %v316 = vunpack.c.l.b16 %v259
        %v317 = vunpack.c.h.b16 %v259
        %v318 = vunpack.c.l.b16 %v260
        %v319 = vunpack.c.h.b16 %v260
        %v320 = vunpack.c.l.b16 %v261
        %v321 = vunpack.c.h.b16 %v261
        %v322 = vpack.c.b16 %v292, %v290
        %v323 = vpack.c.b16 %v293, %v291
        %v324 = vpack.c.b16 %v296, %v294
        %v325 = vpack.c.b16 %v297, %v295
        %v326 = vpack.c.b16 %v300, %v298
        %v327 = vpack.c.b16 %v301, %v299
        %v328 = vpack.c.b16 %v304, %v302
        %v329 = vpack.c.b16 %v305, %v303
        %v330 = vpack.c.b16 %v308, %v306
        %v331 = vpack.c.b16 %v309, %v307
        %v332 = vpack.c.b16 %v312, %v310
        %v333 = vpack.c.b16 %v313, %v311
        %v334 = vpack.c.b16 %v316, %v314
        %v335 = vpack.c.b16 %v317, %v315
        %v336 = vpack.c.b16 %v320, %v318
        %v337 = vpack.c.b16 %v321, %v319
        %354 = vmatprep.subr.bf16.mxu0 %v337
        %355 = vmatpush1.bf16.msra.mxu0 %v336
        %356 = vmatprep.subr.bf16.mxu0 %v335
        %357 = vmatpush1.bf16.msra.mxu0 %v334
        %358 = vmatprep.subr.bf16.mxu0 %v333
        %359 = vmatpush1.bf16.msra.mxu0 %v332
        %360 = vmatprep.subr.bf16.mxu0 %v331
        %361 = vmatpush1.bf16.msra.mxu0 %v330
        %362 = vmatprep.subr.bf16.mxu0 %v329
        %363 = vmatpush1.bf16.msra.mxu0 %v328
        %364 = vmatprep.subr.bf16.mxu0 %v327
        %365 = vmatpush1.bf16.msra.mxu0 %v326
        %366 = vmatprep.subr.bf16.mxu0 %v325
        %367 = vmatpush1.bf16.msra.mxu0 %v324
        %368 = vmatprep.subr.bf16.mxu0 %v323
        %369 = vmatpush1.bf16.msra.mxu0 %v322
        %370 = vmatprep.subr.bf16.mxu0 0
        %371 = vmatpush2.bf16.msra.mxu0 0
        %372 = vmatprep.subr.bf16.mxu0 0
        %373 = vmatpush2.bf16.msra.mxu0 0
        %374 = vmatprep.subr.bf16.mxu0 0
        %375 = vmatpush2.bf16.msra.mxu0 0
        %376 = vmatprep.subr.bf16.mxu0 0
        %377 = vmatpush2.bf16.msra.mxu0 0
        %378 = vmatprep.subr.bf16.mxu0 0
        %379 = vmatpush2.bf16.msra.mxu0 0
        %380 = vmatprep.subr.bf16.mxu0 0
        %381 = vmatpush2.bf16.msra.mxu0 0
        %382 = vmatprep.subr.bf16.mxu0 0
        %383 = vmatpush2.bf16.msra.mxu0 0
        %384 = vmatprep.subr.bf16.mxu0 0
        %385 = vmatpush2.bf16.msra.mxu0 0
        %386 = vmatprep.mubr.bf16.mxu0 0
        %387 = vmatmul.mubr.bf16.gmra.mxu0 %v270
        %v388 = vpop.f32.mrf.mxu0
        %v389 = vadd.f32 0.0, %v388
        %v390 = vpop.f32.mrf.mxu0
        %v391 = vadd.f32 0.0, %v390
        %v392 = vpop.f32.mrf.mxu0
        %v393 = vadd.f32 0.0, %v392
        %v394 = vpop.f32.mrf.mxu0
        %v395 = vadd.f32 0.0, %v394
        %396 = vmatprep.mubr.bf16.mxu0 0
        %397 = vmatmul.mubr.bf16.gmra.mxu0 %v271
        %v398 = vpop.f32.mrf.mxu0
        %v399 = vadd.f32 0.0, %v398
        %v400 = vpop.f32.mrf.mxu0
        %v401 = vadd.f32 0.0, %v400
        %v402 = vpop.f32.mrf.mxu0
        %v403 = vadd.f32 0.0, %v402
        %v404 = vpop.f32.mrf.mxu0
        %v405 = vadd.f32 0.0, %v404
        %406 = vdwg.mxu0
        %v407 = vadd.f32 %v234, %v389
        %v408 = vadd.f32 %v235, %v391
        %v409 = vadd.f32 %v236, %v393
        %v410 = vadd.f32 %v237, %v395
        %v411 = vadd.f32 %v238, %v399
        %v412 = vadd.f32 %v239, %v401
        %v413 = vadd.f32 %v240, %v403
        %v414 = vadd.f32 %v241, %v405
        %415 = vst [vmem:[#allocation2] sm:$0xff] %v407
        %416 = vst [vmem:[#allocation2 + $0x8] sm:$0xff] %v408
        %417 = vst [vmem:[#allocation2 + $0x10] sm:$0xff] %v409
        %418 = vst [vmem:[#allocation2 + $0x18] sm:$0xff] %v410
        %419 = vst [vmem:[#allocation2 + $0x20] sm:$0xff] %v411
        %420 = vst [vmem:[#allocation2 + $0x28] sm:$0xff] %v412
        %421 = vst [vmem:[#allocation2 + $0x30] sm:$0xff] %v413
        %422 = vst [vmem:[#allocation2 + $0x38] sm:$0xff] %v414
        // Predicated region
        $region37: #{bilinear_attention_forward.6} parent=27 // pred_check
          %p423 = pneg %p222
        $region38: #{bilinear_attention_forward.6} parent=27 // pred_check_branch
          %425 = sbr.rel (%p423) target = $region40
        $region39: #{bilinear_attention_forward.6} parent=27 // pred_region
          %v426 = vld [vmem:[#allocation2] sm:$0xff]
          %v427 = vld [vmem:[#allocation2 + $0x8] sm:$0xff]
          %v428 = vld [vmem:[#allocation2 + $0x10] sm:$0xff]
          %v429 = vld [vmem:[#allocation2 + $0x18] sm:$0xff]
          %v430 = vld [vmem:[#allocation2 + $0x20] sm:$0xff]
          %v431 = vld [vmem:[#allocation2 + $0x28] sm:$0xff]
          %v432 = vld [vmem:[#allocation2 + $0x30] sm:$0xff]
          %v433 = vld [vmem:[#allocation2 + $0x38] sm:$0xff]
          %v434 = vpack.c.bf16 %v428, %v426
          %v435 = vpack.c.bf16 %v429, %v427
          %v436 = vpack.c.bf16 %v432, %v430
          %v437 = vpack.c.bf16 %v433, %v431
          %v442 = vunpack.c.l.b16 %v434
          %v443 = vunpack.c.l.b16 %v435
          %v444 = vunpack.c.h.b16 %v434
          %v445 = vunpack.c.h.b16 %v435
          %v446 = vunpack.c.l.b16 %v436
          %v447 = vunpack.c.l.b16 %v437
          %v448 = vunpack.c.h.b16 %v436
          %v449 = vunpack.c.h.b16 %v437
          %v450 = vpack.c.b16 %v443, %v442
          %v451 = vpack.c.b16 %v445, %v444
          %v452 = vpack.c.b16 %v447, %v446
          %v453 = vpack.c.b16 %v449, %v448
          %458 = vst [vmem:[%s207] sm:$0xff] %v450
          %459 = vst [vmem:[%s207 + $0x8] sm:$0xff] %v451
          %460 = vst [vmem:[%s207 + $0x10] sm:$0xff] %v452
          %461 = vst [vmem:[%s207 + $0x18] sm:$0xff] %v453
        $region40: #{bilinear_attention_forward.6} parent=27 // pred_fallthru
          _
        %s462 = sand.u32 %s101, 1
        %s463 = sand.u32 %s101, 1
        %s464 = smul.addr %s463, 32
        %s465 = scalar_lea.vmem [#allocation5], %s464
        // Predicated region
        $region41: #{bilinear_attention_forward.6} parent=27 // pred_check
          %p466 = pneg %p111
        $region42: #{bilinear_attention_forward.6} parent=27 // pred_check_branch
          %468 = sbr.rel (%p466) target = $region44
        $region43: #{bilinear_attention_forward.6} parent=27 // pred_region
          %s469 = smul.u32 4, %s21
          %s470 = smul.u32 2, %s22
          %s471 = smul.addr %s469, 10
          %s472 = sadd.s32 %s470, %s471
          %s473 = smul.addr %s472, 4
          %s474 = scalar_lea.vmem %s2, %s473
          // Predicated region
          $region45: #{bilinear_attention_forward.6} parent=43 // pred_check
            _
          $region46: #{bilinear_attention_forward.6} parent=43 // pred_check_branch
            %476 = sbr.rel (0) target = $region48
          $region47: #{bilinear_attention_forward.6} parent=43 // pred_region
            // Predicated region
            $region49: #{bilinear_attention_forward.6} parent=47 // pred_check
              _
            $region50: #{bilinear_attention_forward.6} parent=47 // pred_check_branch
              %478 = sbr.rel (0) target = $region52
            $region51: #{bilinear_attention_forward.6} parent=47 // pred_region
              // Predicated region
              $region64: #{bilinear_attention_forward.6} parent=51 // pred_check
                _
              $region65: #{bilinear_attention_forward.6} parent=51 // pred_check_branch
                %500 = sbr.rel (0) target = $region67
              $region66: #{bilinear_attention_forward.6} parent=51 // pred_region
                loop: start=0, step=1, limit=1
                $region68: #{bilinear_attention_forward.6} parent=66 // loop_pre_header
                  _
                $region69: #{bilinear_attention_forward.6} parent=66 // loop_header
                  %s502 = sphi 0, %s506
                  %p503 = scmp.ge.s32.totalorder %s502, 1
                  %s507 = sphi %s465, %s465
                  %s508 = sphi %s474, %s474
                $region70: #{bilinear_attention_forward.6} parent=66 // loop_header_branch
                  %505 = sbr.rel (%p503) target = $region74
                $region71: #{bilinear_attention_forward.6} parent=66 // loop_body
                  %v509 = vld [vmem:[%s507] sm:$0xff]
                  %510 = vst [vmem:[%s508] sm:$0xff] %v509
                  %v511 = vld [vmem:[%s507 + $0x8] sm:$0xff]
                  %512 = vst [vmem:[%s508 + $0x28] sm:$0xff] %v511
                  %v513 = vld [vmem:[%s507 + $0x10] sm:$0xff]
                  %514 = vst [vmem:[%s508 + $0x50] sm:$0xff] %v513
                  %v515 = vld [vmem:[%s507 + $0x18] sm:$0xff]
                  %516 = vst [vmem:[%s508 + $0x78] sm:$0xff] %v515
                $region72: #{bilinear_attention_forward.6} parent=66 // loop_footer
                  %s506 = sadd.s32 1, %s502
                $region73: #{bilinear_attention_forward.6} parent=66 // loop_footer_branch
                  %501 = sbr.rel target = $region69
                $region74: #{bilinear_attention_forward.6} parent=66 // loop_exit
                  _
              $region67: #{bilinear_attention_forward.6} parent=51 // pred_fallthru
                _
              // Predicated region
              $region75: #{bilinear_attention_forward.6} parent=51 // pred_check
                _
              $region76: #{bilinear_attention_forward.6} parent=51 // pred_check_branch
                %518 = sbr.rel target = $region78
              $region77: #{bilinear_attention_forward.6} parent=51 // pred_region
                _
              $region78: #{bilinear_attention_forward.6} parent=51 // pred_fallthru
                _
            $region52: #{bilinear_attention_forward.6} parent=47 // pred_fallthru
              _
            // Predicated region
            $region53: #{bilinear_attention_forward.6} parent=47 // pred_check
              _
            $region54: #{bilinear_attention_forward.6} parent=47 // pred_check_branch
              %480 = sbr.rel target = $region56
            $region55: #{bilinear_attention_forward.6} parent=47 // pred_region
              %s482 = ssub.s32 256, 1
              loop: start=0, step=1, limit=1
              $region57: #{bilinear_attention_forward.6} parent=55 // loop_pre_header
                _
              $region58: #{bilinear_attention_forward.6} parent=55 // loop_header
                %s484 = sphi 0, %s488
                %p485 = scmp.ge.s32.totalorder %s484, 1
                %s489 = sphi %s465, %s465
                %s490 = sphi %s474, %s474
              $region59: #{bilinear_attention_forward.6} parent=55 // loop_header_branch
                %487 = sbr.rel (%p485) target = $region63
              $region60: #{bilinear_attention_forward.6} parent=55 // loop_body
                %v491 = vld [vmem:[%s489] sm:%s482]
                %492 = vst [vmem:[%s490] sm:%s482] %v491
                %v493 = vld [vmem:[%s489 + $0x8] sm:%s482]
                %494 = vst [vmem:[%s490 + $0x28] sm:%s482] %v493
                %v495 = vld [vmem:[%s489 + $0x10] sm:%s482]
                %496 = vst [vmem:[%s490 + $0x50] sm:%s482] %v495
                %v497 = vld [vmem:[%s489 + $0x18] sm:%s482]
                %498 = vst [vmem:[%s490 + $0x78] sm:%s482] %v497
              $region61: #{bilinear_attention_forward.6} parent=55 // loop_footer
                %s488 = sadd.s32 1, %s484
              $region62: #{bilinear_attention_forward.6} parent=55 // loop_footer_branch
                %483 = sbr.rel target = $region58
              $region63: #{bilinear_attention_forward.6} parent=55 // loop_exit
                _
            $region56: #{bilinear_attention_forward.6} parent=47 // pred_fallthru
              _
          $region48: #{bilinear_attention_forward.6} parent=43 // pred_fallthru
            _
          %519 = vnop
        $region44: #{bilinear_attention_forward.6} parent=27 // pred_fallthru
          _
      $region28: #{bilinear_attention_forward.6} parent=5 // pred_fallthru
        _
      %p520 = scmp.le.s32.totalorder 2, %s11
      // Predicated region
      $region79: #{bilinear_attention_forward.6} parent=5 // pred_check
        %p521 = pneg %p520
      $region80: #{bilinear_attention_forward.6} parent=5 // pred_check_branch
        %523 = sbr.rel (%p521) target = $region82
      $region81: #{bilinear_attention_forward.6} parent=5 // pred_region
        %s524 = ssub.s32 %s11, 2
        // Predicated region
        $region83: #{bilinear_attention_forward.6} parent=81 // pred_check
          %p525 = pneg %p117
        $region84: #{bilinear_attention_forward.6} parent=81 // pred_check_branch
          %527 = sbr.rel (%p525) target = $region86
        $region85: #{bilinear_attention_forward.6} parent=81 // pred_region
          %s528 = sand.u32 %s102, 1
          %s529 = sand.u32 %s102, 1
          %s530 = smul.addr %s529, 32
          %s531 = scalar_lea.vmem [#allocation5], %s530
        $region86: #{bilinear_attention_forward.6} parent=81 // pred_fallthru
          _
      $region82: #{bilinear_attention_forward.6} parent=5 // pred_fallthru
        _
    $region6: #{bilinear_attention_forward.6} parent=1 // loop_footer
      %s15 = sadd.s32 1, %s11
    $region7: #{bilinear_attention_forward.6} parent=1 // loop_footer_branch
      %10 = sbr.rel target = $region3
    $region8: #{bilinear_attention_forward.6} parent=1 // loop_exit
      _
    %532 = vsyncpa [#allocation4], 1
    %s533 = scalar_lea.sflag [#allocation4], 1
    %534 = vsyncpa %s533, 1

// kernel: bilinear_attention_forward.9
$region0: #{bilinear_attention_forward.9}
  #allocation0 [shape = 'u32[]', space=smem, size = 0x4, offset = 0x4, fixed_abs, tag = 'smem constant byte address 0x4 - core index']
  #allocation1 [shape = 'u32[144,128]{1,0:T(1,128)}', space=vmem, size = 0x12000, scoped, tag = 'internal scratch']
  %s0 = inlined_call_operand.vmem [shape: bf16[2,17,256], index: 0, kind: input, shape index: {}]
  %s1 = inlined_call_operand.vmem [shape: f32[2,256], index: 1, kind: input, shape index: {}]
  %s2 = inlined_call_operand.vmem [shape: bf16[2,16,256], index: 2, kind: output, shape index: {}]
  %s3 = sld [smem:[#allocation0]]
  $region41: #{bilinear_attention_forward.9} parent=0
    _
  %s5 = ssub.s32 1, %s3
  %s6 = scalar_select 0, %s5, %s3
  loop: start=0, step=1, limit=4
  $region2: #{bilinear_attention_forward.9} parent=0 // loop_pre_header
    _
  $region3: #{bilinear_attention_forward.9} parent=0 // loop_header
    %s8 = sphi 0, %s12
    %p9 = scmp.ge.s32.totalorder %s8, 4
    %s15 = sphi 0, %s27
    %s16 = sphi 0, %s23
    %s17 = sphi 0, %s15
    %s18 = sphi 0, %s16
    %s19 = sphi 0, %s17
    %s20 = sphi 0, %s18
    %s32 = sphi 0, %s34
    %s35 = sphi 0, %s32
    %s36 = sphi 0, %s35
    %s52 = sphi 0, %s36
    %s58 = sphi 0, %s60
    %s61 = sphi 0, %s58
    %s62 = sphi 0, %s61
    %s78 = sphi 0, %s62
    %s86 = sphi 0, %s88
    %s89 = sphi 0, %s86
    %s90 = sphi 0, %s89
    %s106 = sphi 0, %s90
  $region4: #{bilinear_attention_forward.9} parent=0 // loop_header_branch
    %11 = sbr.rel (%p9) target = $region8
  $region5: #{bilinear_attention_forward.9} parent=0 // loop_body
    %s13 = ssub.s32 %s8, 1
    %s14 = ssub.s32 %s8, 2
    %s21 = sadd.s32 1, %s16
    %p22 = scmp.ge.s32.totalorder %s21, 1
    %s23 = scalar_select %p22, 0, %s21
    %s24 = sadd.s32 1, %s15
    %s25 = scalar_select %p22, %s24, %s15
    %p26 = scmp.ge.s32.totalorder %s25, 2
    %s27 = scalar_select %p26, 0, %s25
    %s28 = ssub.s32 %s15, %s27
    %s29 = ssub.s32 %s16, %s23
    %s30 = sor.u32 %s28, %s29
    %p31 = scmp.eq.s32.totalorder %s30, 0
    %s33 = sadd.s32 %s32, 1
    %s34 = scalar_select %p31, %s32, %s33
    %p37 = pneg %p31
    %p38 = scmp.eq.s32.totalorder %s8, 1
    %p39 = por %p37, %p38
    %p40 = scmp.ne.s32.totalorder %s32, %s35
    %p41 = scmp.eq.s32.totalorder %s8, 0
    %p42 = por %p40, %p41
    %p43 = scmp.ne.s32.totalorder %s32, %s35
    %p44 = scmp.eq.s32.totalorder %s13, 1
    %p45 = por %p43, %p44
    %p46 = scmp.ne.s32.totalorder %s35, %s36
    %p47 = scmp.eq.s32.totalorder %s13, 0
    %p48 = por %p46, %p47
    %p49 = scmp.ne.s32.totalorder %s35, %s36
    %p50 = scmp.eq.s32.totalorder %s14, 1
    %p51 = por %p49, %p50
    %p53 = scmp.ne.s32.totalorder %s36, %s52
    %p54 = scmp.eq.s32.totalorder %s14, 0
    %p55 = por %p53, %p54
    %s56 = ssub.s32 %s16, %s23
    %p57 = scmp.eq.s32.totalorder %s56, 0
    %s59 = sadd.s32 %s58, 1
    %s60 = scalar_select %p57, %s58, %s59
    %p63 = pneg %p57
    %p64 = scmp.eq.s32.totalorder %s8, 1
    %p65 = por %p63, %p64
    %p66 = scmp.ne.s32.totalorder %s58, %s61
    %p67 = scmp.eq.s32.totalorder %s8, 0
    %p68 = por %p66, %p67
    %p69 = scmp.ne.s32.totalorder %s58, %s61
    %p70 = scmp.eq.s32.totalorder %s13, 1
    %p71 = por %p69, %p70
    %p72 = scmp.ne.s32.totalorder %s61, %s62
    %p73 = scmp.eq.s32.totalorder %s13, 0
    %p74 = por %p72, %p73
    %p75 = scmp.ne.s32.totalorder %s61, %s62
    %p76 = scmp.eq.s32.totalorder %s14, 1
    %p77 = por %p75, %p76
    %p79 = scmp.ne.s32.totalorder %s62, %s78
    %p80 = scmp.eq.s32.totalorder %s14, 0
    %p81 = por %p79, %p80
    %s82 = ssub.s32 %s15, %s27
    %s83 = ssub.s32 %s16, %s23
    %s84 = sor.u32 %s82, %s83
    %p85 = scmp.eq.s32.totalorder %s84, 0
    %s87 = sadd.s32 %s86, 1
    %s88 = scalar_select %p85, %s86, %s87
    %p91 = pneg %p85
    %p92 = scmp.eq.s32.totalorder %s8, 1
    %p93 = por %p91, %p92
    %p94 = scmp.ne.s32.totalorder %s86, %s89
    %p95 = scmp.eq.s32.totalorder %s8, 0
    %p96 = por %p94, %p95
    %p97 = scmp.ne.s32.totalorder %s86, %s89
    %p98 = scmp.eq.s32.totalorder %s13, 1
    %p99 = por %p97, %p98
    %p100 = scmp.ne.s32.totalorder %s89, %s90
    %p101 = scmp.eq.s32.totalorder %s13, 0
    %p102 = por %p100, %p101
    %p103 = scmp.ne.s32.totalorder %s89, %s90
    %p104 = scmp.eq.s32.totalorder %s14, 1
    %p105 = por %p103, %p104
    %p107 = scmp.ne.s32.totalorder %s90, %s106
    %p108 = scmp.eq.s32.totalorder %s14, 0
    %p109 = por %p107, %p108
    %p110 = scmp.le.s32.totalorder 1, %s8
    %p111 = scmp.lt.s32.totalorder %s8, 3
    %p112 = pnand %p110, %p111
    %p113 = pneg %p112
    // Predicated region
    $region9: #{bilinear_attention_forward.9} parent=5 // pred_check
      _
    $region10: #{bilinear_attention_forward.9} parent=5 // pred_check_branch
      %115 = sbr.rel (%p112) target = $region12
    $region11: #{bilinear_attention_forward.9} parent=5 // pred_region
      %s116 = ssub.s32 %s8, 1
      // Predicated region
      $region13: #{bilinear_attention_forward.9} parent=11 // pred_check
        %p117 = pneg %p74
      $region14: #{bilinear_attention_forward.9} parent=11 // pred_check_branch
        %119 = sbr.rel (%p117) target = $region16
      $region15: #{bilinear_attention_forward.9} parent=11 // pred_region
        %s120 = smul.u32 2, %s18
        %p121 = scmp.lt.s32.totalorder %s120, 1
        %s122 = scalar_select %p121, %s120, 1
        %s123 = smul.addr %s122, 2
        %s124 = scalar_lea.vmem %s1, %s123
        %s125 = smul.u32 2, %s18
      $region16: #{bilinear_attention_forward.9} parent=11 // pred_fallthru
        _
    $region12: #{bilinear_attention_forward.9} parent=5 // pred_fallthru
      _
    %p126 = scmp.lt.s32.totalorder %s8, 2
    // Predicated region
    $region17: #{bilinear_attention_forward.9} parent=5 // pred_check
      %p127 = pneg %p126
    $region18: #{bilinear_attention_forward.9} parent=5 // pred_check_branch
      %129 = sbr.rel (%p127) target = $region20
    $region19: #{bilinear_attention_forward.9} parent=5 // pred_region
      // Predicated region
      $region21: #{bilinear_attention_forward.9} parent=19 // pred_check
        %p130 = pneg %p42
      $region22: #{bilinear_attention_forward.9} parent=19 // pred_check_branch
        %132 = sbr.rel (%p130) target = $region24
      $region23: #{bilinear_attention_forward.9} parent=19 // pred_region
        %s133 = smul.u32 2, %s16
        %p134 = scmp.lt.s32.totalorder %s15, 1
        %s135 = scalar_select %p134, %s15, 1
        %p136 = scmp.lt.s32.totalorder %s133, 1
        %s137 = scalar_select %p136, %s133, 1
        %s138 = smul.addr %s135, 6
        %s139 = sadd.s32 %s137, %s138
        %s140 = smul.addr %s139, 4
        %s141 = scalar_lea.vmem %s0, %s140
        %s142 = smul.u32 2, %s16
      $region24: #{bilinear_attention_forward.9} parent=19 // pred_fallthru
        _
    $region20: #{bilinear_attention_forward.9} parent=5 // pred_fallthru
      _
    %p143 = scmp.le.s32.totalorder 1, %s8
    %p144 = scmp.lt.s32.totalorder %s8, 3
    %p145 = pnand %p143, %p144
    %p146 = pneg %p145
    // Predicated region
    $region25: #{bilinear_attention_forward.9} parent=5 // pred_check
      _
    $region26: #{bilinear_attention_forward.9} parent=5 // pred_check_branch
      %148 = sbr.rel (%p145) target = $region28
    $region27: #{bilinear_attention_forward.9} parent=5 // pred_region
      %s149 = ssub.s32 %s8, 1
      %s150 = smul.u32 2, %s18
      %p151 = scmp.lt.s32.totalorder %s17, 1
      %s152 = scalar_select %p151, %s17, 1
      %p153 = scmp.lt.s32.totalorder %s150, 1
      %s154 = scalar_select %p153, %s150, 1
      %s155 = smul.addr %s152, 6
      %s156 = sadd.s32 %s154, %s155
      %s157 = smul.addr %s156, 4
      %s158 = scalar_lea.vmem %s0, %s157
      %p159 = pneg %p48
      %p160 = pneg %p45
      %s161 = smul.u32 2, %s18
      %p162 = scmp.lt.s32.totalorder %s161, 1
      %s163 = scalar_select %p162, %s161, 1
      %s164 = smul.addr %s163, 2
      %s165 = scalar_lea.vmem %s1, %s164
      %p166 = pneg %p74
      %p167 = pneg %p71
      %p168 = pneg %p102
      %p169 = pneg %p99
      %s170 = smul.u32 2, %s18
      %p171 = scmp.lt.s32.totalorder %s17, 1
      %s172 = scalar_select %p171, %s17, 1
      %p173 = scmp.lt.s32.totalorder %s170, 1
      %s174 = scalar_select %p173, %s170, 1
      %s175 = smul.addr %s172, 4
      %s176 = sadd.s32 %s174, %s175
      %s177 = smul.addr %s176, 4
      %s178 = scalar_lea.vmem %s2, %s177
      %s179 = smul.u32 2, %s18
      %p180 = scmp.lt.s32.totalorder %s17, 1
      %s181 = scalar_select %p180, %s17, 1
      %p182 = scmp.lt.s32.totalorder %s179, 1
      %s183 = scalar_select %p182, %s179, 1
      %s184 = smul.addr %s181, 6
      %s185 = sadd.s32 %s183, %s184
      %s186 = smul.addr %s185, 4
      %s187 = scalar_lea.vmem %s0, %s186
      %s188 = smul.u32 2, %s18
      %s189 = smul.u32 2, %s18
      %p190 = scmp.lt.s32.totalorder %s189, 1
      %s191 = scalar_select %p190, %s189, 1
      %s192 = smul.addr %s191, 2
      %s193 = scalar_lea.vmem %s1, %s192
      %s194 = smul.u32 2, %s18
      %s195 = smul.u32 2, %s18
      %p196 = scmp.lt.s32.totalorder %s17, 1
      %s197 = scalar_select %p196, %s17, 1
      %p198 = scmp.lt.s32.totalorder %s195, 1
      %s199 = scalar_select %p198, %s195, 1
      %s200 = smul.addr %s197, 4
      %s201 = sadd.s32 %s199, %s200
      %s202 = smul.addr %s201, 4
      %s203 = scalar_lea.vmem %s2, %s202
      %s204 = smul.u32 2, %s18
      %v205 = vld [vmem:[%s193] sm:$0xf]
      %v206 = vld [vmem:[%s187] sm:$0xff]
      %v207 = vld [vmem:[%s187 + $0x8] sm:$0xff]
      %v208 = vunpack.c.l.bf16 %v206
      %v209 = vunpack.c.h.bf16 %v206
      %v210 = vunpack.c.l.bf16 %v207
      %v211 = vunpack.c.h.bf16 %v207
      %v213 = vlaneseq
      %v214 = vshrl.u32 %v213, 7
      %v215 = vsub.s32 0, %v214
      %v216 = vrot.slane %v205, %v215
      %v217 = vlaneseq
      %v218 = vshrl.u32 %v217, 7
      %v219 = vsub.s32 2, %v218
      %v220 = vrot.slane %v205, %v219
      %v223 = vlaneseq
      %v224 = vshrl.u32 %v223, 7
      %v225 = vsub.s32 0, %v224
      %v226 = vrot.slane %v216, %v225
      %v227 = vlaneseq
      %v228 = vshrl.u32 %v227, 7
      %v229 = vsub.s32 0, %v228
      %v230 = vrot.slane %v220, %v229
      %v231 = vmul.f32 %v208, %v226
      %v232 = vmul.f32 %v209, %v230
      %v233 = vmul.f32 %v210, %v226
      %v234 = vmul.f32 %v211, %v230
      %v235 = vadd.f32 %v231, 0.0
      %v236 = vadd.f32 %v232, 0.0
      %v237 = vadd.f32 %v233, 0.0
      %v238 = vadd.f32 %v234, 0.0
      %v239 = vld [vmem:[%s187 + $0x10] sm:$0x11]
      %v240 = vunpack.c.l.bf16 %v239
      %v241 = vunpack.c.h.bf16 %v239
      %v242 = vlaneseq
      %v243 = vshrl.u32 %v242, 7
      %v244 = vsub.s32 1, %v243
      %v245 = vrot.slane %v205, %v244
      %v246 = vlaneseq
      %v247 = vshrl.u32 %v246, 7
      %v248 = vsub.s32 3, %v247
      %v249 = vrot.slane %v205, %v248
      %v252 = vlaneseq
      %v253 = vshrl.u32 %v252, 7
      %v254 = vsub.s32 1, %v253
      %v255 = vrot.slane %v245, %v254
      %v256 = vlaneseq
      %v257 = vshrl.u32 %v256, 7
      %v258 = vsub.s32 1, %v257
      %v259 = vrot.slane %v249, %v258
      %v260 = vmul.f32 %v208, %v255
      %v261 = vmul.f32 %v209, %v259
      %v262 = vmul.f32 %v210, %v255
      %v263 = vmul.f32 %v211, %v259
      %v264 = vmul.f32 %v240, %v255
      %v265 = vmul.f32 %v241, %v259
      %vm272 = vcmask 1046528
      %v273 = vrot.slane %v260, 1
      %v274 = vrot.slane %v262, 1
      %v275 = vsel %vm272, %v273, %v274
      %v276 = vrot.slane %v261, 1
      %v277 = vrot.slane %v263, 1
      %v278 = vsel %vm272, %v276, %v277
      %v279 = vrot.slane %v264, 1
      %v280 = vsel %vm272, %v274, %v279
      %v281 = vrot.slane %v265, 1
      %v282 = vsel %vm272, %v277, %v281
      %v287 = vadd.f32 %v235, %v275
      %v288 = vadd.f32 %v236, %v278
      %v289 = vadd.f32 %v237, %v280
      %v290 = vadd.f32 %v238, %v282
      %v291 = vxor.u32 %v287, 2147483648
      %v292 = vxor.u32 %v288, 2147483648
      %v293 = vxor.u32 %v289, 2147483648
      %v294 = vxor.u32 %v290, 2147483648
      %v295 = vmul.f32 %v291, 1.442695
      %v296 = vpow.pop %v295
      %v297 = vmul.f32 %v292, 1.442695
      %v298 = vpow.pop %v297
      %v299 = vmul.f32 %v293, 1.442695
      %v300 = vpow.pop %v299
      %v301 = vmul.f32 %v294, 1.442695
      %v302 = vpow.pop %v301
      %v303 = vadd.f32 %v296, 1.0
      %v304 = vadd.f32 %v298, 1.0
      %v305 = vadd.f32 %v300, 1.0
      %v306 = vadd.f32 %v302, 1.0
      %v307 = vrcp.pop %v303
      %v308 = vmul.f32 1.0, %v307
      %v309 = vrcp.pop %v304
      %v310 = vmul.f32 1.0, %v309
      %v311 = vrcp.pop %v305
      %v312 = vmul.f32 1.0, %v311
      %v313 = vrcp.pop %v306
      %v314 = vmul.f32 1.0, %v313
      %v315 = vmul.f32 %v287, %v308
      %v316 = vmul.f32 %v288, %v310
      %v317 = vmul.f32 %v289, %v312
      %v318 = vmul.f32 %v290, %v314
      %v319 = vpack.c.bf16 %v317, %v315
      %v320 = vpack.c.bf16 %v318, %v316
      %v323 = vunpack.c.l.b16 %v319
      %v324 = vunpack.c.l.b16 %v320
      %v325 = vunpack.c.h.b16 %v319
      %v326 = vunpack.c.h.b16 %v320
      %v327 = vpack.c.b16 %v324, %v323
      %v328 = vpack.c.b16 %v326, %v325
      %331 = vst [vmem:[%s203] sm:$0xff] %v327
      %332 = vst [vmem:[%s203 + $0x8] sm:$0xff] %v328
      %s333 = smul.u32 2, %s18
      %p334 = scmp.lt.s32.totalorder %s17, 1
      %s335 = scalar_select %p334, %s17, 1
      %p336 = scmp.lt.s32.totalorder %s333, 1
      %s337 = scalar_select %p336, %s333, 1
      %s338 = smul.addr %s335, 4
      %s339 = sadd.s32 %s337, %s338
      %s340 = smul.addr %s339, 4
      %s341 = scalar_lea.vmem %s2, %s340
      // Predicated region
      $region29: #{bilinear_attention_forward.9} parent=27 // pred_check
        %p342 = pneg %p99
      $region30: #{bilinear_attention_forward.9} parent=27 // pred_check_branch
        %344 = sbr.rel (%p342) target = $region32
      $region31: #{bilinear_attention_forward.9} parent=27 // pred_region
        %s345 = smul.u32 2, %s18
      $region32: #{bilinear_attention_forward.9} parent=27 // pred_fallthru
        _
    $region28: #{bilinear_attention_forward.9} parent=5 // pred_fallthru
      _
    %p346 = scmp.le.s32.totalorder 2, %s8
    // Predicated region
    $region33: #{bilinear_attention_forward.9} parent=5 // pred_check
      %p347 = pneg %p346
    $region34: #{bilinear_attention_forward.9} parent=5 // pred_check_branch
      %349 = sbr.rel (%p347) target = $region36
    $region35: #{bilinear_attention_forward.9} parent=5 // pred_region
      %s350 = ssub.s32 %s8, 2
      // Predicated region
      $region37: #{bilinear_attention_forward.9} parent=35 // pred_check
        %p351 = pneg %p105
      $region38: #{bilinear_attention_forward.9} parent=35 // pred_check_branch
        %353 = sbr.rel (%p351) target = $region40
      $region39: #{bilinear_attention_forward.9} parent=35 // pred_region
        %s354 = smul.u32 2, %s20
        %p355 = scmp.lt.s32.totalorder %s19, 1
        %s356 = scalar_select %p355, %s19, 1
        %p357 = scmp.lt.s32.totalorder %s354, 1
        %s358 = scalar_select %p357, %s354, 1
        %s359 = smul.addr %s356, 4
        %s360 = sadd.s32 %s358, %s359
        %s361 = smul.addr %s360, 4
        %s362 = scalar_lea.vmem %s2, %s361
      $region40: #{bilinear_attention_forward.9} parent=35 // pred_fallthru
        _
    $region36: #{bilinear_attention_forward.9} parent=5 // pred_fallthru
      _
  $region6: #{bilinear_attention_forward.9} parent=0 // loop_footer
    %s12 = sadd.s32 1, %s8
  $region7: #{bilinear_attention_forward.9} parent=0 // loop_footer_branch
    %7 = sbr.rel target = $region3
  $region8: #{bilinear_attention_forward.9} parent=0 // loop_exit
    _

// kernel: bilinear_attention_forward.11
$region0: #{bilinear_attention_forward.11}
  #allocation0 [shape = 'u32[]', space=smem, size = 0x4, offset = 0x4, fixed_abs, tag = 'smem constant byte address 0x4 - core index']
  #allocation1 [shape = 'u32[144,128]{1,0:T(1,128)}', space=vmem, size = 0x12000, scoped, tag = 'internal scratch']
  #allocation2 [shape = 'f32[32,128]{1,0:T(8,128)}', space=vmem, size = 0x4000, scoped, tag = 'scratch operand']
  %s0 = inlined_call_operand.vmem [shape: bf16[32,256], index: 0, kind: input, shape index: {}]
  %s1 = inlined_call_operand.vmem [shape: bf16[256,128], index: 1, kind: input, shape index: {}]
  %s2 = inlined_call_operand.hbm [shape: bf16[32,128], index: 2, kind: output, shape index: {}]
  %s3 = sld [smem:[#allocation0]]
  $region26: #{bilinear_attention_forward.11} parent=0
    _
  %s5 = ssub.s32 1, %s3
  %s6 = scalar_select 0, %s5, %s3
  $region1: #{bilinear_attention_forward.11} parent=0
    #allocation3 [shape = 'u8[8192]{0}', space=vmem, size = 0x2000, scoped, tag = 'output window, operand 0, single buffered']
    #allocation4 [shape = 's32[1]{0}', space=sflag, size = 0x4, scoped, tag = 'scoped memory for bilinear_attention_forward.11']
    %7 = vsyncpa [#allocation4], 0
    // Predicated region
    $region2: #{bilinear_attention_forward.11} parent=1 // pred_check
      _
    $region3: #{bilinear_attention_forward.11} parent=1 // pred_check_branch
      %9 = sbr.rel (0) target = $region5
    $region4: #{bilinear_attention_forward.11} parent=1 // pred_region
      _
    $region5: #{bilinear_attention_forward.11} parent=1 // pred_fallthru
      _
    // Predicated region
    $region6: #{bilinear_attention_forward.11} parent=1 // pred_check
      _
    $region7: #{bilinear_attention_forward.11} parent=1 // pred_check_branch
      %11 = sbr.rel (0) target = $region9
    $region8: #{bilinear_attention_forward.11} parent=1 // pred_region
      _
    $region9: #{bilinear_attention_forward.11} parent=1 // pred_fallthru
      _
    %p13 = scmp.eq.s32.totalorder 0, 0
    // Predicated region
    $region10: #{bilinear_attention_forward.11} parent=1 // pred_check
      %p14 = pneg %p13
    $region11: #{bilinear_attention_forward.11} parent=1 // pred_check_branch
      %16 = sbr.rel (%p14) target = $region13
    $region12: #{bilinear_attention_forward.11} parent=1 // pred_region
      %17 = vst [vmem:[#allocation2] sm:$0xff] 0.0
      %18 = vst [vmem:[#allocation2 + $0x8] sm:$0xff] 0.0
      %19 = vst [vmem:[#allocation2 + $0x10] sm:$0xff] 0.0
      %20 = vst [vmem:[#allocation2 + $0x18] sm:$0xff] 0.0
    $region13: #{bilinear_attention_forward.11} parent=1 // pred_fallthru
      _
    %v21 = vld [vmem:[#allocation2] sm:$0xff]
    %v22 = vld [vmem:[#allocation2 + $0x8] sm:$0xff]
    %v23 = vld [vmem:[#allocation2 + $0x10] sm:$0xff]
    %v24 = vld [vmem:[#allocation2 + $0x18] sm:$0xff]
    %v25 = vld [vmem:[%s0] sm:$0xff]
    %v26 = vld [vmem:[%s0 + $0x8] sm:$0xff]
    %v27 = vld [vmem:[%s0 + $0x10] sm:$0xff]
    %v28 = vld [vmem:[%s0 + $0x18] sm:$0xff]
    %v29 = vld [vmem:[%s1] sm:$0xf]
    %v30 = vld [vmem:[%s1 + $0x4] sm:$0xf]
    %v31 = vld [vmem:[%s1 + $0x8] sm:$0xf]
    %v32 = vld [vmem:[%s1 + $0xc] sm:$0xf]
    %v33 = vld [vmem:[%s1 + $0x10] sm:$0xf]
    %v34 = vld [vmem:[%s1 + $0x14] sm:$0xf]
    %v35 = vld [vmem:[%s1 + $0x18] sm:$0xf]
    %v36 = vld [vmem:[%s1 + $0x1c] sm:$0xf]
    %v37 = vld [vmem:[%s1 + $0x20] sm:$0xf]
    %v38 = vld [vmem:[%s1 + $0x24] sm:$0xf]
    %v39 = vld [vmem:[%s1 + $0x28] sm:$0xf]
    %v40 = vld [vmem:[%s1 + $0x2c] sm:$0xf]
    %v41 = vld [vmem:[%s1 + $0x30] sm:$0xf]
    %v42 = vld [vmem:[%s1 + $0x34] sm:$0xf]
    %v43 = vld [vmem:[%s1 + $0x38] sm:$0xf]
    %v44 = vld [vmem:[%s1 + $0x3c] sm:$0xf]
    %v45 = vld [vmem:[%s1 + $0x40] sm:$0xf]
    %v46 = vld [vmem:[%s1 + $0x44] sm:$0xf]
    %v47 = vld [vmem:[%s1 + $0x48] sm:$0xf]
    %v48 = vld [vmem:[%s1 + $0x4c] sm:$0xf]
    %v49 = vld [vmem:[%s1 + $0x50] sm:$0xf]
    %v50 = vld [vmem:[%s1 + $0x54] sm:$0xf]
    %v51 = vld [vmem:[%s1 + $0x58] sm:$0xf]
    %v52 = vld [vmem:[%s1 + $0x5c] sm:$0xf]
    %v53 = vld [vmem:[%s1 + $0x60] sm:$0xf]
    %v54 = vld [vmem:[%s1 + $0x64] sm:$0xf]
    %v55 = vld [vmem:[%s1 + $0x68] sm:$0xf]
    %v56 = vld [vmem:[%s1 + $0x6c] sm:$0xf]
    %v57 = vld [vmem:[%s1 + $0x70] sm:$0xf]
    %v58 = vld [vmem:[%s1 + $0x74] sm:$0xf]
    %v59 = vld [vmem:[%s1 + $0x78] sm:$0xf]
    %v60 = vld [vmem:[%s1 + $0x7c] sm:$0xf]
    %v65 = vunpack.c.l.b16 %v25
    %v66 = vunpack.c.h.b16 %v25
    %v67 = vunpack.c.l.b16 %v26
    %v68 = vunpack.c.h.b16 %v26
    %v69 = vunpack.c.l.b16 %v27
    %v70 = vunpack.c.h.b16 %v27
    %v71 = vunpack.c.l.b16 %v28
    %v72 = vunpack.c.h.b16 %v28
    %v73 = vpack.c.b16 %v67, %v65
    %v74 = vpack.c.b16 %v68, %v66
    %v75 = vpack.c.b16 %v71, %v69
    %v76 = vpack.c.b16 %v72, %v70
    %v113 = vunpack.c.l.b16 %v29
    %v114 = vunpack.c.l.b16 %v30
    %v115 = vunpack.c.l.b16 %v31
    %v116 = vunpack.c.l.b16 %v32
    %v117 = vunpack.c.l.b16 %v33
    %v118 = vunpack.c.l.b16 %v34
    %v119 = vunpack.c.l.b16 %v35
    %v120 = vunpack.c.l.b16 %v36
    %v121 = vunpack.c.l.b16 %v37
    %v122 = vunpack.c.l.b16 %v38
    %v123 = vunpack.c.l.b16 %v39
    %v124 = vunpack.c.l.b16 %v40
    %v125 = vunpack.c.l.b16 %v41
    %v126 = vunpack.c.l.b16 %v42
    %v127 = vunpack.c.l.b16 %v43
    %v128 = vunpack.c.l.b16 %v44
    %v129 = vunpack.c.l.b16 %v45
    %v130 = vunpack.c.l.b16 %v46
    %v131 = vunpack.c.l.b16 %v47
    %v132 = vunpack.c.l.b16 %v48
    %v133 = vunpack.c.l.b16 %v49
    %v134 = vunpack.c.l.b16 %v50
    %v135 = vunpack.c.l.b16 %v51
    %v136 = vunpack.c.l.b16 %v52
    %v137 = vunpack.c.l.b16 %v53
    %v138 = vunpack.c.l.b16 %v54
    %v139 = vunpack.c.l.b16 %v55
    %v140 = vunpack.c.l.b16 %v56
    %v141 = vunpack.c.l.b16 %v57
    %v142 = vunpack.c.l.b16 %v58
    %v143 = vunpack.c.l.b16 %v59
    %v144 = vunpack.c.l.b16 %v60
    %v145 = vpack.c.b16 %v114, %v113
    %v146 = vpack.c.b16 %v116, %v115
    %v147 = vpack.c.b16 %v118, %v117
    %v148 = vpack.c.b16 %v120, %v119
    %v149 = vpack.c.b16 %v122, %v121
    %v150 = vpack.c.b16 %v124, %v123
    %v151 = vpack.c.b16 %v126, %v125
    %v152 = vpack.c.b16 %v128, %v127
    %v153 = vpack.c.b16 %v130, %v129
    %v154 = vpack.c.b16 %v132, %v131
    %v155 = vpack.c.b16 %v134, %v133
    %v156 = vpack.c.b16 %v136, %v135
    %v157 = vpack.c.b16 %v138, %v137
    %v158 = vpack.c.b16 %v140, %v139
    %v159 = vpack.c.b16 %v142, %v141
    %v160 = vpack.c.b16 %v144, %v143
    %177 = vmatprep.subr.bf16.mxu0 0
    %178 = vmatpush1.bf16.msra.mxu0 %v152
    %179 = vmatprep.subr.bf16.mxu0 0
    %180 = vmatpush1.bf16.msra.mxu0 %v151
    %181 = vmatprep.subr.bf16.mxu0 0
    %182 = vmatpush1.bf16.msra.mxu0 %v150
    %183 = vmatprep.subr.bf16.mxu0 0
    %184 = vmatpush1.bf16.msra.mxu0 %v149
    %185 = vmatprep.subr.bf16.mxu0 0
    %186 = vmatpush1.bf16.msra.mxu0 %v148
    %187 = vmatprep.subr.bf16.mxu0 0
    %188 = vmatpush1.bf16.msra.mxu0 %v147
    %189 = vmatprep.subr.bf16.mxu0 0
    %190 = vmatpush1.bf16.msra.mxu0 %v146
    %191 = vmatprep.subr.bf16.mxu0 0
    %192 = vmatpush1.bf16.msra.mxu0 %v145
    %193 = vmatprep.subr.bf16.mxu0 0
    %194 = vmatpush2.bf16.msra.mxu0 %v160
    %195 = vmatprep.subr.bf16.mxu0 0
    %196 = vmatpush2.bf16.msra.mxu0 %v159
    %197 = vmatprep.subr.bf16.mxu0 0
    %198 = vmatpush2.bf16.msra.mxu0 %v158
    %199 = vmatprep.subr.bf16.mxu0 0
    %200 = vmatpush2.bf16.msra.mxu0 %v157
    %201 = vmatprep.subr.bf16.mxu0 0
    %202 = vmatpush2.bf16.msra.mxu0 %v156
    %203 = vmatprep.subr.bf16.mxu0 0
    %204 = vmatpush2.bf16.msra.mxu0 %v155
    %205 = vmatprep.subr.bf16.mxu0 0
    %206 = vmatpush2.bf16.msra.mxu0 %v154
    %207 = vmatprep.subr.bf16.mxu0 0
    %208 = vmatpush2.bf16.msra.mxu0 %v153
    %209 = vmatprep.mubr.bf16.mxu0 %v74
    %210 = vmatmul.mubr.bf16.gmra.mxu0 %v73
    %v211 = vpop.f32.mrf.mxu0
    %v212 = vadd.f32 0.0, %v211
    %v213 = vpop.f32.mrf.mxu0
    %v214 = vpop.f32.mrf.mxu0
    %v215 = vadd.f32 0.0, %v214
    %v216 = vpop.f32.mrf.mxu0
    %217 = vmatprep.mubr.bf16.mxu0 %v76
    %218 = vmatmul.mubr.bf16.gmra.mxu0 %v75
    %v219 = vpop.f32.mrf.mxu0
    %v220 = vadd.f32 0.0, %v219
    %v221 = vpop.f32.mrf.mxu0
    %v222 = vpop.f32.mrf.mxu0
    %v223 = vadd.f32 0.0, %v222
    %v224 = vpop.f32.mrf.mxu0
    %225 = vdwg.mxu0
    %v226 = vadd.f32 %v21, %v212
    %v227 = vadd.f32 %v22, %v215
    %v228 = vadd.f32 %v23, %v220
    %v229 = vadd.f32 %v24, %v223
    %230 = vst [vmem:[#allocation2] sm:$0xff] %v226
    %231 = vst [vmem:[#allocation2 + $0x8] sm:$0xff] %v227
    %232 = vst [vmem:[#allocation2 + $0x10] sm:$0xff] %v228
    %233 = vst [vmem:[#allocation2 + $0x18] sm:$0xff] %v229
    // Predicated region
    $region14: #{bilinear_attention_forward.11} parent=1 // pred_check
      %p234 = pneg %p13
    $region15: #{bilinear_attention_forward.11} parent=1 // pred_check_branch
      %236 = sbr.rel (%p234) target = $region17
    $region16: #{bilinear_attention_forward.11} parent=1 // pred_region
      %v237 = vld [vmem:[#allocation2] sm:$0xff]
      %v238 = vld [vmem:[#allocation2 + $0x8] sm:$0xff]
      %v239 = vld [vmem:[#allocation2 + $0x10] sm:$0xff]
      %v240 = vld [vmem:[#allocation2 + $0x18] sm:$0xff]
      %v241 = vpack.c.bf16 %v238, %v237
      %v242 = vpack.c.bf16 %v240, %v239
      %v245 = vunpack.c.l.b16 %v241
      %v246 = vunpack.c.h.b16 %v241
      %v247 = vunpack.c.l.b16 %v242
      %v248 = vunpack.c.h.b16 %v242
      %v249 = vpack.c.b16 %v245, %v245
      %v250 = vpack.c.b16 %v246, %v246
      %v251 = vpack.c.b16 %v247, %v247
      %v252 = vpack.c.b16 %v248, %v248
      %257 = vst [vmem:[#allocation3] sm:$0xf] %v249
      %258 = vst [vmem:[#allocation3 + $0x4] sm:$0xf] %v250
      %259 = vst [vmem:[#allocation3 + $0x8] sm:$0xf] %v251
      %260 = vst [vmem:[#allocation3 + $0xc] sm:$0xf] %v252
    $region17: #{bilinear_attention_forward.11} parent=1 // pred_fallthru
      _
    // Predicated region
    $region18: #{bilinear_attention_forward.11} parent=1 // pred_check
      _
    $region19: #{bilinear_attention_forward.11} parent=1 // pred_check_branch
      %262 = sbr.rel (0) target = $region21
    $region20: #{bilinear_attention_forward.11} parent=1 // pred_region
      %s264 = ssub.s32 256, 256
      %265 = vsyncadd [#allocation4], %s264
      %s266 = sshll.u32 [#allocation3], 4
      %s267 = int_to_ptr.vmem [resolvable:$true] %s266
      %272 = dma.vmem_to_hbm [thread:$0]  %s267, 256, %s2, [#allocation4], 64, 64, 4
    $region21: #{bilinear_attention_forward.11} parent=1 // pred_fallthru
      _
    // Predicated region
    $region22: #{bilinear_attention_forward.11} parent=1 // pred_check
      _
    $region23: #{bilinear_attention_forward.11} parent=1 // pred_check_branch
      %274 = sbr.rel (0) target = $region25
    $region24: #{bilinear_attention_forward.11} parent=1 // pred_region
      %275 = dma.done [#allocation4], 256
    $region25: #{bilinear_attention_forward.11} parent=1 // pred_fallthru
      _
    %276 = vsyncpa [#allocation4], 1

// kernel: bilinear_attention_forward.10
$region0: #{bilinear_attention_forward.10}
  #allocation0 [shape = 'u32[]', space=smem, size = 0x4, offset = 0x4, fixed_abs, tag = 'smem constant byte address 0x4 - core index']
  #allocation1 [shape = 'u32[144,128]{1,0:T(1,128)}', space=vmem, size = 0x12000, scoped, tag = 'internal scratch']
  #allocation2 [shape = 'f32[128,128]{1,0:T(8,128)}', space=vmem, size = 0x10000, scoped, tag = 'scratch operand']
  %s0 = inlined_call_operand.vmem [shape: bf16[2,16,256], index: 0, kind: input, shape index: {}]
  %s1 = inlined_call_operand.vmem [shape: bf16[2,16,256], index: 1, kind: input, shape index: {}]
  %s2 = inlined_call_operand.vmem [shape: bf16[2,16,256], index: 2, kind: input, shape index: {}]
  %s3 = inlined_call_operand.vmem [shape: f32[2,2,1,1,16], index: 3, kind: input, shape index: {}]
  %s4 = inlined_call_operand.vmem [shape: f32[2,2,1,16,2], index: 4, kind: input, shape index: {}]
  %s5 = inlined_call_operand.vmem [shape: bf16[2,16,256], index: 5, kind: input, shape index: {}]
  %s6 = inlined_call_operand.vmem [shape: f32[1,128], index: 6, kind: input, shape index: {}]
  %s7 = inlined_call_operand.vmem [shape: bf16[2,16,256], index: 7, kind: output, shape index: {}]
  %s8 = sld [smem:[#allocation0]]
  $region266: #{bilinear_attention_forward.10} parent=0
    _
  %s10 = ssub.s32 1, %s8
  %s11 = scalar_select 0, %s10, %s8
  $region1: #{bilinear_attention_forward.10} parent=0
    #allocation3 [shape = 'u8[8192]{0}', space=vmem, size = 0x2000, scoped, tag = 'input window, operand 0']
    #allocation4 [shape = 'u8[8192]{0}', space=vmem, size = 0x2000, scoped, tag = 'input window, operand 1']
    #allocation5 [shape = 'u8[8192]{0}', space=vmem, size = 0x2000, scoped, tag = 'input window, operand 2']
    #allocation6 [shape = 'u8[8192]{0}', space=vmem, size = 0x2000, scoped, tag = 'input window, operand 5']
    #allocation7 [shape = 'u8[8192]{0}', space=vmem, size = 0x2000, scoped, tag = 'output window, operand 0']
    loop: start=0, step=1, limit=6
    $region2: #{bilinear_attention_forward.10} parent=1 // loop_pre_header
      _
    $region3: #{bilinear_attention_forward.10} parent=1 // loop_header
      %s13 = sphi 0, %s17
      %p14 = scmp.ge.s32.totalorder %s13, 6
      %s20 = sphi 0, %s39
      %s21 = sphi 0, %s35
      %s22 = sphi 0, %s31
      %s23 = sphi 0, %s20
      %s24 = sphi 0, %s21
      %s25 = sphi 0, %s22
      %s26 = sphi 0, %s23
      %s27 = sphi 0, %s24
      %s28 = sphi 0, %s25
      %s46 = sphi 0, %s48
      %s49 = sphi 0, %s46
      %s50 = sphi 0, %s49
      %s66 = sphi 0, %s50
      %s76 = sphi 0, %s78
      %s79 = sphi 0, %s76
      %s80 = sphi 0, %s79
      %s96 = sphi 0, %s80
      %s106 = sphi 0, %s108
      %s109 = sphi 0, %s106
      %s110 = sphi 0, %s109
      %s126 = sphi 0, %s110
      %s136 = sphi 0, %s138
      %s139 = sphi 0, %s136
      %s140 = sphi 0, %s139
      %s156 = sphi 0, %s140
      %s166 = sphi 0, %s168
      %s169 = sphi 0, %s166
      %s170 = sphi 0, %s169
      %s186 = sphi 0, %s170
      %s196 = sphi 0, %s198
      %s199 = sphi 0, %s196
      %s200 = sphi 0, %s199
      %s216 = sphi 0, %s200
      %s220 = sphi 0, %s220
      %s222 = sphi 0, %s220
      %s223 = sphi 0, %s222
      %s237 = sphi 0, %s223
      %s247 = sphi 0, %s249
      %s250 = sphi 0, %s247
      %s251 = sphi 0, %s250
      %s267 = sphi 0, %s251
    $region4: #{bilinear_attention_forward.10} parent=1 // loop_header_branch
      %16 = sbr.rel (%p14) target = $region8
    $region5: #{bilinear_attention_forward.10} parent=1 // loop_body
      %s18 = ssub.s32 %s13, 1
      %s19 = ssub.s32 %s13, 2
      %s29 = sadd.s32 1, %s22
      %p30 = scmp.ge.s32.totalorder %s29, 1
      %s31 = scalar_select %p30, 0, %s29
      %s32 = sadd.s32 1, %s21
      %s33 = scalar_select %p30, %s32, %s21
      %p34 = scmp.ge.s32.totalorder %s33, 2
      %s35 = scalar_select %p34, 0, %s33
      %s36 = sadd.s32 1, %s20
      %s37 = scalar_select %p34, %s36, %s20
      %p38 = scmp.ge.s32.totalorder %s37, 2
      %s39 = scalar_select %p38, 0, %s37
      %s40 = ssub.s32 %s20, %s39
      %s41 = ssub.s32 %s22, %s31
      %s42 = sor.u32 %s40, %s41
      %s43 = ssub.s32 %s21, %s35
      %s44 = sor.u32 %s42, %s43
      %p45 = scmp.eq.s32.totalorder %s44, 0
      %s47 = sadd.s32 %s46, 1
      %s48 = scalar_select %p45, %s46, %s47
      %p51 = pneg %p45
      %p52 = scmp.eq.s32.totalorder %s13, 3
      %p53 = por %p51, %p52
      %p54 = scmp.ne.s32.totalorder %s46, %s49
      %p55 = scmp.eq.s32.totalorder %s13, 0
      %p56 = por %p54, %p55
      %p57 = scmp.ne.s32.totalorder %s46, %s49
      %p58 = scmp.eq.s32.totalorder %s18, 3
      %p59 = por %p57, %p58
      %p60 = scmp.ne.s32.totalorder %s49, %s50
      %p61 = scmp.eq.s32.totalorder %s18, 0
      %p62 = por %p60, %p61
      %p63 = scmp.ne.s32.totalorder %s49, %s50
      %p64 = scmp.eq.s32.totalorder %s19, 3
      %p65 = por %p63, %p64
      %p67 = scmp.ne.s32.totalorder %s50, %s66
      %p68 = scmp.eq.s32.totalorder %s19, 0
      %p69 = por %p67, %p68
      %s70 = ssub.s32 %s20, %s39
      %s71 = ssub.s32 %s22, %s31
      %s72 = sor.u32 %s70, %s71
      %s73 = ssub.s32 %s21, %s35
      %s74 = sor.u32 %s72, %s73
      %p75 = scmp.eq.s32.totalorder %s74, 0
      %s77 = sadd.s32 %s76, 1
      %s78 = scalar_select %p75, %s76, %s77
      %p81 = pneg %p75
      %p82 = scmp.eq.s32.totalorder %s13, 3
      %p83 = por %p81, %p82
      %p84 = scmp.ne.s32.totalorder %s76, %s79
      %p85 = scmp.eq.s32.totalorder %s13, 0
      %p86 = por %p84, %p85
      %p87 = scmp.ne.s32.totalorder %s76, %s79
      %p88 = scmp.eq.s32.totalorder %s18, 3
      %p89 = por %p87, %p88
      %p90 = scmp.ne.s32.totalorder %s79, %s80
      %p91 = scmp.eq.s32.totalorder %s18, 0
      %p92 = por %p90, %p91
      %p93 = scmp.ne.s32.totalorder %s79, %s80
      %p94 = scmp.eq.s32.totalorder %s19, 3
      %p95 = por %p93, %p94
      %p97 = scmp.ne.s32.totalorder %s80, %s96
      %p98 = scmp.eq.s32.totalorder %s19, 0
      %p99 = por %p97, %p98
      %s100 = ssub.s32 %s20, %s39
      %s101 = ssub.s32 %s22, %s31
      %s102 = sor.u32 %s100, %s101
      %s103 = ssub.s32 %s21, %s35
      %s104 = sor.u32 %s102, %s103
      %p105 = scmp.eq.s32.totalorder %s104, 0
      %s107 = sadd.s32 %s106, 1
      %s108 = scalar_select %p105, %s106, %s107
      %p111 = pneg %p105
      %p112 = scmp.eq.s32.totalorder %s13, 3
      %p113 = por %p111, %p112
      %p114 = scmp.ne.s32.totalorder %s106, %s109
      %p115 = scmp.eq.s32.totalorder %s13, 0
      %p116 = por %p114, %p115
      %p117 = scmp.ne.s32.totalorder %s106, %s109
      %p118 = scmp.eq.s32.totalorder %s18, 3
      %p119 = por %p117, %p118
      %p120 = scmp.ne.s32.totalorder %s109, %s110
      %p121 = scmp.eq.s32.totalorder %s18, 0
      %p122 = por %p120, %p121
      %p123 = scmp.ne.s32.totalorder %s109, %s110
      %p124 = scmp.eq.s32.totalorder %s19, 3
      %p125 = por %p123, %p124
      %p127 = scmp.ne.s32.totalorder %s110, %s126
      %p128 = scmp.eq.s32.totalorder %s19, 0
      %p129 = por %p127, %p128
      %s130 = ssub.s32 %s20, %s39
      %s131 = ssub.s32 %s21, %s35
      %s132 = sor.u32 %s130, %s131
      %s133 = ssub.s32 %s22, %s31
      %s134 = sor.u32 %s132, %s133
      %p135 = scmp.eq.s32.totalorder %s134, 0
      %s137 = sadd.s32 %s136, 1
      %s138 = scalar_select %p135, %s136, %s137
      %p141 = pneg %p135
      %p142 = scmp.eq.s32.totalorder %s13, 3
      %p143 = por %p141, %p142
      %p144 = scmp.ne.s32.totalorder %s136, %s139
      %p145 = scmp.eq.s32.totalorder %s13, 0
      %p146 = por %p144, %p145
      %p147 = scmp.ne.s32.totalorder %s136, %s139
      %p148 = scmp.eq.s32.totalorder %s18, 3
      %p149 = por %p147, %p148
      %p150 = scmp.ne.s32.totalorder %s139, %s140
      %p151 = scmp.eq.s32.totalorder %s18, 0
      %p152 = por %p150, %p151
      %p153 = scmp.ne.s32.totalorder %s139, %s140
      %p154 = scmp.eq.s32.totalorder %s19, 3
      %p155 = por %p153, %p154
      %p157 = scmp.ne.s32.totalorder %s140, %s156
      %p158 = scmp.eq.s32.totalorder %s19, 0
      %p159 = por %p157, %p158
      %s160 = ssub.s32 %s20, %s39
      %s161 = ssub.s32 %s21, %s35
      %s162 = sor.u32 %s160, %s161
      %s163 = ssub.s32 %s22, %s31
      %s164 = sor.u32 %s162, %s163
      %p165 = scmp.eq.s32.totalorder %s164, 0
      %s167 = sadd.s32 %s166, 1
      %s168 = scalar_select %p165, %s166, %s167
      %p171 = pneg %p165
      %p172 = scmp.eq.s32.totalorder %s13, 3
      %p173 = por %p171, %p172
      %p174 = scmp.ne.s32.totalorder %s166, %s169
      %p175 = scmp.eq.s32.totalorder %s13, 0
      %p176 = por %p174, %p175
      %p177 = scmp.ne.s32.totalorder %s166, %s169
      %p178 = scmp.eq.s32.totalorder %s18, 3
      %p179 = por %p177, %p178
      %p180 = scmp.ne.s32.totalorder %s169, %s170
      %p181 = scmp.eq.s32.totalorder %s18, 0
      %p182 = por %p180, %p181
      %p183 = scmp.ne.s32.totalorder %s169, %s170
      %p184 = scmp.eq.s32.totalorder %s19, 3
      %p185 = por %p183, %p184
      %p187 = scmp.ne.s32.totalorder %s170, %s186
      %p188 = scmp.eq.s32.totalorder %s19, 0
      %p189 = por %p187, %p188
      %s190 = ssub.s32 %s20, %s39
      %s191 = ssub.s32 %s22, %s31
      %s192 = sor.u32 %s190, %s191
      %s193 = ssub.s32 %s21, %s35
      %s194 = sor.u32 %s192, %s193
      %p195 = scmp.eq.s32.totalorder %s194, 0
      %s197 = sadd.s32 %s196, 1
      %s198 = scalar_select %p195, %s196, %s197
      %p201 = pneg %p195
      %p202 = scmp.eq.s32.totalorder %s13, 3
      %p203 = por %p201, %p202
      %p204 = scmp.ne.s32.totalorder %s196, %s199
      %p205 = scmp.eq.s32.totalorder %s13, 0
      %p206 = por %p204, %p205
      %p207 = scmp.ne.s32.totalorder %s196, %s199
      %p208 = scmp.eq.s32.totalorder %s18, 3
      %p209 = por %p207, %p208
      %p210 = scmp.ne.s32.totalorder %s199, %s200
      %p211 = scmp.eq.s32.totalorder %s18, 0
      %p212 = por %p210, %p211
      %p213 = scmp.ne.s32.totalorder %s199, %s200
      %p214 = scmp.eq.s32.totalorder %s19, 3
      %p215 = por %p213, %p214
      %p217 = scmp.ne.s32.totalorder %s200, %s216
      %p218 = scmp.eq.s32.totalorder %s19, 0
      %p219 = por %p217, %p218
      %s221 = sadd.s32 %s220, 1
      %p224 = scmp.eq.s32.totalorder %s13, 3
      %p225 = scmp.ne.s32.totalorder %s220, %s222
      %p226 = scmp.eq.s32.totalorder %s13, 0
      %p227 = por %p225, %p226
      %p228 = scmp.ne.s32.totalorder %s220, %s222
      %p229 = scmp.eq.s32.totalorder %s18, 3
      %p230 = por %p228, %p229
      %p231 = scmp.ne.s32.totalorder %s222, %s223
      %p232 = scmp.eq.s32.totalorder %s18, 0
      %p233 = por %p231, %p232
      %p234 = scmp.ne.s32.totalorder %s222, %s223
      %p235 = scmp.eq.s32.totalorder %s19, 3
      %p236 = por %p234, %p235
      %p238 = scmp.ne.s32.totalorder %s223, %s237
      %p239 = scmp.eq.s32.totalorder %s19, 0
      %p240 = por %p238, %p239
      %s241 = ssub.s32 %s20, %s39
      %s242 = ssub.s32 %s22, %s31
      %s243 = sor.u32 %s241, %s242
      %s244 = ssub.s32 %s21, %s35
      %s245 = sor.u32 %s243, %s244
      %p246 = scmp.eq.s32.totalorder %s245, 0
      %s248 = sadd.s32 %s247, 1
      %s249 = scalar_select %p246, %s247, %s248
      %p252 = pneg %p246
      %p253 = scmp.eq.s32.totalorder %s13, 3
      %p254 = por %p252, %p253
      %p255 = scmp.ne.s32.totalorder %s247, %s250
      %p256 = scmp.eq.s32.totalorder %s13, 0
      %p257 = por %p255, %p256
      %p258 = scmp.ne.s32.totalorder %s247, %s250
      %p259 = scmp.eq.s32.totalorder %s18, 3
      %p260 = por %p258, %p259
      %p261 = scmp.ne.s32.totalorder %s250, %s251
      %p262 = scmp.eq.s32.totalorder %s18, 0
      %p263 = por %p261, %p262
      %p264 = scmp.ne.s32.totalorder %s250, %s251
      %p265 = scmp.eq.s32.totalorder %s19, 3
      %p266 = por %p264, %p265
      %p268 = scmp.ne.s32.totalorder %s251, %s267
      %p269 = scmp.eq.s32.totalorder %s19, 0
      %p270 = por %p268, %p269
      %p271 = scmp.le.s32.totalorder 1, %s13
      %p272 = scmp.lt.s32.totalorder %s13, 5
      %p273 = pnand %p271, %p272
      %p274 = pneg %p273
      // Predicated region
      $region9: #{bilinear_attention_forward.10} parent=5 // pred_check
        _
      $region10: #{bilinear_attention_forward.10} parent=5 // pred_check_branch
        %276 = sbr.rel (%p273) target = $region12
      $region11: #{bilinear_attention_forward.10} parent=5 // pred_region
        %s277 = ssub.s32 %s13, 1
        // Predicated region
        $region13: #{bilinear_attention_forward.10} parent=11 // pred_check
          %p278 = pneg %p233
        $region14: #{bilinear_attention_forward.10} parent=11 // pred_check_branch
          %280 = sbr.rel (%p278) target = $region16
        $region15: #{bilinear_attention_forward.10} parent=11 // pred_region
          _
        $region16: #{bilinear_attention_forward.10} parent=11 // pred_fallthru
          _
      $region12: #{bilinear_attention_forward.10} parent=5 // pred_fallthru
        _
      %p281 = scmp.lt.s32.totalorder %s13, 4
      // Predicated region
      $region17: #{bilinear_attention_forward.10} parent=5 // pred_check
        %p282 = pneg %p281
      $region18: #{bilinear_attention_forward.10} parent=5 // pred_check_branch
        %284 = sbr.rel (%p282) target = $region20
      $region19: #{bilinear_attention_forward.10} parent=5 // pred_region
        // Predicated region
        $region21: #{bilinear_attention_forward.10} parent=19 // pred_check
          %p285 = pneg %p56
        $region22: #{bilinear_attention_forward.10} parent=19 // pred_check_branch
          %287 = sbr.rel (%p285) target = $region24
        $region23: #{bilinear_attention_forward.10} parent=19 // pred_region
          %s288 = sand.u32 %s46, 1
          %s289 = sand.u32 %s46, 1
          %s290 = smul.addr %s289, 8
          %s291 = scalar_lea.vmem [#allocation3], %s290
          %s292 = smul.u32 2, %s22
          %s293 = smul.addr %s292, 2
          %s294 = sadd.s32 %s21, %s293
          %s295 = smul.addr %s20, 4
          %s296 = sadd.s32 %s294, %s295
          %s297 = smul.addr %s296, 4
          %s298 = scalar_lea.vmem %s0, %s297
          // Predicated region
          $region25: #{bilinear_attention_forward.10} parent=23 // pred_check
            _
          $region26: #{bilinear_attention_forward.10} parent=23 // pred_check_branch
            %300 = sbr.rel (0) target = $region28
          $region27: #{bilinear_attention_forward.10} parent=23 // pred_region
            // Predicated region
            $region29: #{bilinear_attention_forward.10} parent=27 // pred_check
              _
            $region30: #{bilinear_attention_forward.10} parent=27 // pred_check_branch
              %302 = sbr.rel target = $region32
            $region31: #{bilinear_attention_forward.10} parent=27 // pred_region
              // Predicated region
              $region44: #{bilinear_attention_forward.10} parent=31 // pred_check
                _
              $region45: #{bilinear_attention_forward.10} parent=31 // pred_check_branch
                %320 = sbr.rel (0) target = $region47
              $region46: #{bilinear_attention_forward.10} parent=31 // pred_region
                loop: start=0, step=1, limit=1
                $region48: #{bilinear_attention_forward.10} parent=46 // loop_pre_header
                  _
                $region49: #{bilinear_attention_forward.10} parent=46 // loop_header
                  %s322 = sphi 0, %s326
                  %p323 = scmp.ge.s32.totalorder %s322, 1
                  %s327 = sphi %s298, %s298
                  %s328 = sphi %s291, %s291
                $region50: #{bilinear_attention_forward.10} parent=46 // loop_header_branch
                  %325 = sbr.rel (%p323) target = $region54
                $region51: #{bilinear_attention_forward.10} parent=46 // loop_body
                  _
                $region52: #{bilinear_attention_forward.10} parent=46 // loop_footer
                  %s326 = sadd.s32 1, %s322
                $region53: #{bilinear_attention_forward.10} parent=46 // loop_footer_branch
                  %321 = sbr.rel target = $region49
                $region54: #{bilinear_attention_forward.10} parent=46 // loop_exit
                  _
                %s330 = ssub.s32 16, 1
                loop: start=0, step=1, limit=1
                $region55: #{bilinear_attention_forward.10} parent=46 // loop_pre_header
                  _
                $region56: #{bilinear_attention_forward.10} parent=46 // loop_header
                  %s332 = sphi 0, %s336
                  %p333 = scmp.ge.s32.totalorder %s332, 1
                  %s337 = sphi %s298, %s298
                  %s338 = sphi %s291, %s291
                $region57: #{bilinear_attention_forward.10} parent=46 // loop_header_branch
                  %335 = sbr.rel (%p333) target = $region61
                $region58: #{bilinear_attention_forward.10} parent=46 // loop_body
                  %v339 = vld [vmem:[%s337] sm:%s330]
                  %340 = vst [vmem:[%s338] sm:%s330] %v339
                  %v341 = vld [vmem:[%s337 + $0x8] sm:%s330]
                  %342 = vst [vmem:[%s338 + $0x4] sm:%s330] %v341
                $region59: #{bilinear_attention_forward.10} parent=46 // loop_footer
                  %s336 = sadd.s32 1, %s332
                $region60: #{bilinear_attention_forward.10} parent=46 // loop_footer_branch
                  %331 = sbr.rel target = $region56
                $region61: #{bilinear_attention_forward.10} parent=46 // loop_exit
                  _
              $region47: #{bilinear_attention_forward.10} parent=31 // pred_fallthru
                _
            $region32: #{bilinear_attention_forward.10} parent=27 // pred_fallthru
              _
            // Predicated region
            $region33: #{bilinear_attention_forward.10} parent=27 // pred_check
              _
            $region34: #{bilinear_attention_forward.10} parent=27 // pred_check_branch
              %304 = sbr.rel (0) target = $region36
            $region35: #{bilinear_attention_forward.10} parent=27 // pred_region
              %s306 = ssub.s32 16, 1
              loop: start=0, step=1, limit=1
              $region37: #{bilinear_attention_forward.10} parent=35 // loop_pre_header
                _
              $region38: #{bilinear_attention_forward.10} parent=35 // loop_header
                %s308 = sphi 0, %s312
                %p309 = scmp.ge.s32.totalorder %s308, 1
                %s313 = sphi %s298, %s298
                %s314 = sphi %s291, %s291
              $region39: #{bilinear_attention_forward.10} parent=35 // loop_header_branch
                %311 = sbr.rel (%p309) target = $region43
              $region40: #{bilinear_attention_forward.10} parent=35 // loop_body
                %v315 = vld [vmem:[%s313] sm:%s306]
                %316 = vst [vmem:[%s314] sm:%s306] %v315
                %v317 = vld [vmem:[%s313 + $0x8] sm:%s306]
                %318 = vst [vmem:[%s314 + $0x4] sm:%s306] %v317
              $region41: #{bilinear_attention_forward.10} parent=35 // loop_footer
                %s312 = sadd.s32 1, %s308
              $region42: #{bilinear_attention_forward.10} parent=35 // loop_footer_branch
                %307 = sbr.rel target = $region38
              $region43: #{bilinear_attention_forward.10} parent=35 // loop_exit
                _
            $region36: #{bilinear_attention_forward.10} parent=27 // pred_fallthru
              _
          $region28: #{bilinear_attention_forward.10} parent=23 // pred_fallthru
            _
          %343 = vnop
        $region24: #{bilinear_attention_forward.10} parent=19 // pred_fallthru
          _
        // Predicated region
        $region62: #{bilinear_attention_forward.10} parent=19 // pred_check
          %p344 = pneg %p86
        $region63: #{bilinear_attention_forward.10} parent=19 // pred_check_branch
          %346 = sbr.rel (%p344) target = $region65
        $region64: #{bilinear_attention_forward.10} parent=19 // pred_region
          %s347 = sand.u32 %s76, 1
          %s348 = sand.u32 %s76, 1
          %s349 = smul.addr %s348, 8
          %s350 = scalar_lea.vmem [#allocation4], %s349
          %s351 = smul.u32 2, %s22
          %s352 = smul.addr %s351, 2
          %s353 = sadd.s32 %s21, %s352
          %s354 = smul.addr %s20, 4
          %s355 = sadd.s32 %s353, %s354
          %s356 = smul.addr %s355, 4
          %s357 = scalar_lea.vmem %s1, %s356
          // Predicated region
          $region66: #{bilinear_attention_forward.10} parent=64 // pred_check
            _
          $region67: #{bilinear_attention_forward.10} parent=64 // pred_check_branch
            %359 = sbr.rel (0) target = $region69
          $region68: #{bilinear_attention_forward.10} parent=64 // pred_region
            // Predicated region
            $region70: #{bilinear_attention_forward.10} parent=68 // pred_check
              _
            $region71: #{bilinear_attention_forward.10} parent=68 // pred_check_branch
              %361 = sbr.rel target = $region73
            $region72: #{bilinear_attention_forward.10} parent=68 // pred_region
              // Predicated region
              $region85: #{bilinear_attention_forward.10} parent=72 // pred_check
                _
              $region86: #{bilinear_attention_forward.10} parent=72 // pred_check_branch
                %379 = sbr.rel (0) target = $region88
              $region87: #{bilinear_attention_forward.10} parent=72 // pred_region
                loop: start=0, step=1, limit=1
                $region89: #{bilinear_attention_forward.10} parent=87 // loop_pre_header
                  _
                $region90: #{bilinear_attention_forward.10} parent=87 // loop_header
                  %s381 = sphi 0, %s385
                  %p382 = scmp.ge.s32.totalorder %s381, 1
                  %s386 = sphi %s357, %s357
                  %s387 = sphi %s350, %s350
                $region91: #{bilinear_attention_forward.10} parent=87 // loop_header_branch
                  %384 = sbr.rel (%p382) target = $region95
                $region92: #{bilinear_attention_forward.10} parent=87 // loop_body
                  _
                $region93: #{bilinear_attention_forward.10} parent=87 // loop_footer
                  %s385 = sadd.s32 1, %s381
                $region94: #{bilinear_attention_forward.10} parent=87 // loop_footer_branch
                  %380 = sbr.rel target = $region90
                $region95: #{bilinear_attention_forward.10} parent=87 // loop_exit
                  _
                %s389 = ssub.s32 16, 1
                loop: start=0, step=1, limit=1
                $region96: #{bilinear_attention_forward.10} parent=87 // loop_pre_header
                  _
                $region97: #{bilinear_attention_forward.10} parent=87 // loop_header
                  %s391 = sphi 0, %s395
                  %p392 = scmp.ge.s32.totalorder %s391, 1
                  %s396 = sphi %s357, %s357
                  %s397 = sphi %s350, %s350
                $region98: #{bilinear_attention_forward.10} parent=87 // loop_header_branch
                  %394 = sbr.rel (%p392) target = $region102
                $region99: #{bilinear_attention_forward.10} parent=87 // loop_body
                  %v398 = vld [vmem:[%s396] sm:%s389]
                  %399 = vst [vmem:[%s397] sm:%s389] %v398
                  %v400 = vld [vmem:[%s396 + $0x8] sm:%s389]
                  %401 = vst [vmem:[%s397 + $0x4] sm:%s389] %v400
                $region100: #{bilinear_attention_forward.10} parent=87 // loop_footer
                  %s395 = sadd.s32 1, %s391
                $region101: #{bilinear_attention_forward.10} parent=87 // loop_footer_branch
                  %390 = sbr.rel target = $region97
                $region102: #{bilinear_attention_forward.10} parent=87 // loop_exit
                  _
              $region88: #{bilinear_attention_forward.10} parent=72 // pred_fallthru
                _
            $region73: #{bilinear_attention_forward.10} parent=68 // pred_fallthru
              _
            // Predicated region
            $region74: #{bilinear_attention_forward.10} parent=68 // pred_check
              _
            $region75: #{bilinear_attention_forward.10} parent=68 // pred_check_branch
              %363 = sbr.rel (0) target = $region77
            $region76: #{bilinear_attention_forward.10} parent=68 // pred_region
              %s365 = ssub.s32 16, 1
              loop: start=0, step=1, limit=1
              $region78: #{bilinear_attention_forward.10} parent=76 // loop_pre_header
                _
              $region79: #{bilinear_attention_forward.10} parent=76 // loop_header
                %s367 = sphi 0, %s371
                %p368 = scmp.ge.s32.totalorder %s367, 1
                %s372 = sphi %s357, %s357
                %s373 = sphi %s350, %s350
              $region80: #{bilinear_attention_forward.10} parent=76 // loop_header_branch
                %370 = sbr.rel (%p368) target = $region84
              $region81: #{bilinear_attention_forward.10} parent=76 // loop_body
                %v374 = vld [vmem:[%s372] sm:%s365]
                %375 = vst [vmem:[%s373] sm:%s365] %v374
                %v376 = vld [vmem:[%s372 + $0x8] sm:%s365]
                %377 = vst [vmem:[%s373 + $0x4] sm:%s365] %v376
              $region82: #{bilinear_attention_forward.10} parent=76 // loop_footer
                %s371 = sadd.s32 1, %s367
              $region83: #{bilinear_attention_forward.10} parent=76 // loop_footer_branch
                %366 = sbr.rel target = $region79
              $region84: #{bilinear_attention_forward.10} parent=76 // loop_exit
                _
            $region77: #{bilinear_attention_forward.10} parent=68 // pred_fallthru
              _
          $region69: #{bilinear_attention_forward.10} parent=64 // pred_fallthru
            _
          %402 = vnop
        $region65: #{bilinear_attention_forward.10} parent=19 // pred_fallthru
          _
        // Predicated region
        $region103: #{bilinear_attention_forward.10} parent=19 // pred_check
          %p403 = pneg %p116
        $region104: #{bilinear_attention_forward.10} parent=19 // pred_check_branch
          %405 = sbr.rel (%p403) target = $region106
        $region105: #{bilinear_attention_forward.10} parent=19 // pred_region
          %s406 = sand.u32 %s106, 1
          %s407 = sand.u32 %s106, 1
          %s408 = smul.addr %s407, 8
          %s409 = scalar_lea.vmem [#allocation5], %s408
          %s410 = smul.u32 2, %s22
          %s411 = smul.addr %s410, 2
          %s412 = sadd.s32 %s21, %s411
          %s413 = smul.addr %s20, 4
          %s414 = sadd.s32 %s412, %s413
          %s415 = smul.addr %s414, 4
          %s416 = scalar_lea.vmem %s2, %s415
          // Predicated region
          $region107: #{bilinear_attention_forward.10} parent=105 // pred_check
            _
          $region108: #{bilinear_attention_forward.10} parent=105 // pred_check_branch
            %418 = sbr.rel (0) target = $region110
          $region109: #{bilinear_attention_forward.10} parent=105 // pred_region
            // Predicated region
            $region111: #{bilinear_attention_forward.10} parent=109 // pred_check
              _
            $region112: #{bilinear_attention_forward.10} parent=109 // pred_check_branch
              %420 = sbr.rel target = $region114
            $region113: #{bilinear_attention_forward.10} parent=109 // pred_region
              // Predicated region
              $region126: #{bilinear_attention_forward.10} parent=113 // pred_check
                _
              $region127: #{bilinear_attention_forward.10} parent=113 // pred_check_branch
                %438 = sbr.rel (0) target = $region129
              $region128: #{bilinear_attention_forward.10} parent=113 // pred_region
                loop: start=0, step=1, limit=1
                $region130: #{bilinear_attention_forward.10} parent=128 // loop_pre_header
                  _
                $region131: #{bilinear_attention_forward.10} parent=128 // loop_header
                  %s440 = sphi 0, %s444
                  %p441 = scmp.ge.s32.totalorder %s440, 1
                  %s445 = sphi %s416, %s416
                  %s446 = sphi %s409, %s409
                $region132: #{bilinear_attention_forward.10} parent=128 // loop_header_branch
                  %443 = sbr.rel (%p441) target = $region136
                $region133: #{bilinear_attention_forward.10} parent=128 // loop_body
                  _
                $region134: #{bilinear_attention_forward.10} parent=128 // loop_footer
                  %s444 = sadd.s32 1, %s440
                $region135: #{bilinear_attention_forward.10} parent=128 // loop_footer_branch
                  %439 = sbr.rel target = $region131
                $region136: #{bilinear_attention_forward.10} parent=128 // loop_exit
                  _
                %s448 = ssub.s32 16, 1
                loop: start=0, step=1, limit=1
                $region137: #{bilinear_attention_forward.10} parent=128 // loop_pre_header
                  _
                $region138: #{bilinear_attention_forward.10} parent=128 // loop_header
                  %s450 = sphi 0, %s454
                  %p451 = scmp.ge.s32.totalorder %s450, 1
                  %s455 = sphi %s416, %s416
                  %s456 = sphi %s409, %s409
                $region139: #{bilinear_attention_forward.10} parent=128 // loop_header_branch
                  %453 = sbr.rel (%p451) target = $region143
                $region140: #{bilinear_attention_forward.10} parent=128 // loop_body
                  %v457 = vld [vmem:[%s455] sm:%s448]
                  %458 = vst [vmem:[%s456] sm:%s448] %v457
                  %v459 = vld [vmem:[%s455 + $0x8] sm:%s448]
                  %460 = vst [vmem:[%s456 + $0x4] sm:%s448] %v459
                $region141: #{bilinear_attention_forward.10} parent=128 // loop_footer
                  %s454 = sadd.s32 1, %s450
                $region142: #{bilinear_attention_forward.10} parent=128 // loop_footer_branch
                  %449 = sbr.rel target = $region138
                $region143: #{bilinear_attention_forward.10} parent=128 // loop_exit
                  _
              $region129: #{bilinear_attention_forward.10} parent=113 // pred_fallthru
                _
            $region114: #{bilinear_attention_forward.10} parent=109 // pred_fallthru
              _
            // Predicated region
            $region115: #{bilinear_attention_forward.10} parent=109 // pred_check
              _
            $region116: #{bilinear_attention_forward.10} parent=109 // pred_check_branch
              %422 = sbr.rel (0) target = $region118
            $region117: #{bilinear_attention_forward.10} parent=109 // pred_region
              %s424 = ssub.s32 16, 1
              loop: start=0, step=1, limit=1
              $region119: #{bilinear_attention_forward.10} parent=117 // loop_pre_header
                _
              $region120: #{bilinear_attention_forward.10} parent=117 // loop_header
                %s426 = sphi 0, %s430
                %p427 = scmp.ge.s32.totalorder %s426, 1
                %s431 = sphi %s416, %s416
                %s432 = sphi %s409, %s409
              $region121: #{bilinear_attention_forward.10} parent=117 // loop_header_branch
                %429 = sbr.rel (%p427) target = $region125
              $region122: #{bilinear_attention_forward.10} parent=117 // loop_body
                %v433 = vld [vmem:[%s431] sm:%s424]
                %434 = vst [vmem:[%s432] sm:%s424] %v433
                %v435 = vld [vmem:[%s431 + $0x8] sm:%s424]
                %436 = vst [vmem:[%s432 + $0x4] sm:%s424] %v435
              $region123: #{bilinear_attention_forward.10} parent=117 // loop_footer
                %s430 = sadd.s32 1, %s426
              $region124: #{bilinear_attention_forward.10} parent=117 // loop_footer_branch
                %425 = sbr.rel target = $region120
              $region125: #{bilinear_attention_forward.10} parent=117 // loop_exit
                _
            $region118: #{bilinear_attention_forward.10} parent=109 // pred_fallthru
              _
          $region110: #{bilinear_attention_forward.10} parent=105 // pred_fallthru
            _
          %461 = vnop
        $region106: #{bilinear_attention_forward.10} parent=19 // pred_fallthru
          _
        // Predicated region
        $region144: #{bilinear_attention_forward.10} parent=19 // pred_check
          %p462 = pneg %p146
        $region145: #{bilinear_attention_forward.10} parent=19 // pred_check_branch
          %464 = sbr.rel (%p462) target = $region147
        $region146: #{bilinear_attention_forward.10} parent=19 // pred_region
          %p465 = scmp.lt.s32.totalorder %s20, 1
          %s466 = scalar_select %p465, %s20, 1
          %p467 = scmp.lt.s32.totalorder %s21, 1
          %s468 = scalar_select %p467, %s21, 1
          %p469 = scmp.lt.s32.totalorder %s22, 0
          %s470 = scalar_select %p469, %s22, 0
          %s471 = sadd.s32 %s470, %s468
          %s472 = smul.addr %s466, 2
          %s473 = sadd.s32 %s471, %s472
          %s474 = scalar_lea.vmem %s3, %s473
        $region147: #{bilinear_attention_forward.10} parent=19 // pred_fallthru
          _
        // Predicated region
        $region148: #{bilinear_attention_forward.10} parent=19 // pred_check
          %p475 = pneg %p176
        $region149: #{bilinear_attention_forward.10} parent=19 // pred_check_branch
          %477 = sbr.rel (%p475) target = $region151
        $region150: #{bilinear_attention_forward.10} parent=19 // pred_region
          %p478 = scmp.lt.s32.totalorder %s20, 1
          %s479 = scalar_select %p478, %s20, 1
          %p480 = scmp.lt.s32.totalorder %s21, 1
          %s481 = scalar_select %p480, %s21, 1
          %p482 = scmp.lt.s32.totalorder %s22, 0
          %s483 = scalar_select %p482, %s22, 0
          %s484 = smul.addr %s483, 2
          %s485 = smul.addr %s481, 2
          %s486 = sadd.s32 %s484, %s485
          %s487 = smul.addr %s479, 4
          %s488 = sadd.s32 %s486, %s487
          %s489 = smul.addr %s488, 8
          %s490 = scalar_lea.vmem %s4, %s489
        $region151: #{bilinear_attention_forward.10} parent=19 // pred_fallthru
          _
        // Predicated region
        $region152: #{bilinear_attention_forward.10} parent=19 // pred_check
          %p491 = pneg %p206
        $region153: #{bilinear_attention_forward.10} parent=19 // pred_check_branch
          %493 = sbr.rel (%p491) target = $region155
        $region154: #{bilinear_attention_forward.10} parent=19 // pred_region
          %s494 = sand.u32 %s196, 1
          %s495 = sand.u32 %s196, 1
          %s496 = smul.addr %s495, 8
          %s497 = scalar_lea.vmem [#allocation6], %s496
          %s498 = smul.u32 2, %s22
          %s499 = smul.addr %s498, 2
          %s500 = sadd.s32 %s21, %s499
          %s501 = smul.addr %s20, 4
          %s502 = sadd.s32 %s500, %s501
          %s503 = smul.addr %s502, 4
          %s504 = scalar_lea.vmem %s5, %s503
          // Predicated region
          $region156: #{bilinear_attention_forward.10} parent=154 // pred_check
            _
          $region157: #{bilinear_attention_forward.10} parent=154 // pred_check_branch
            %506 = sbr.rel (0) target = $region159
          $region158: #{bilinear_attention_forward.10} parent=154 // pred_region
            // Predicated region
            $region160: #{bilinear_attention_forward.10} parent=158 // pred_check
              _
            $region161: #{bilinear_attention_forward.10} parent=158 // pred_check_branch
              %508 = sbr.rel target = $region163
            $region162: #{bilinear_attention_forward.10} parent=158 // pred_region
              // Predicated region
              $region175: #{bilinear_attention_forward.10} parent=162 // pred_check
                _
              $region176: #{bilinear_attention_forward.10} parent=162 // pred_check_branch
                %526 = sbr.rel (0) target = $region178
              $region177: #{bilinear_attention_forward.10} parent=162 // pred_region
                loop: start=0, step=1, limit=1
                $region179: #{bilinear_attention_forward.10} parent=177 // loop_pre_header
                  _
                $region180: #{bilinear_attention_forward.10} parent=177 // loop_header
                  %s528 = sphi 0, %s532
                  %p529 = scmp.ge.s32.totalorder %s528, 1
                  %s533 = sphi %s504, %s504
                  %s534 = sphi %s497, %s497
                $region181: #{bilinear_attention_forward.10} parent=177 // loop_header_branch
                  %531 = sbr.rel (%p529) target = $region185
                $region182: #{bilinear_attention_forward.10} parent=177 // loop_body
                  _
                $region183: #{bilinear_attention_forward.10} parent=177 // loop_footer
                  %s532 = sadd.s32 1, %s528
                $region184: #{bilinear_attention_forward.10} parent=177 // loop_footer_branch
                  %527 = sbr.rel target = $region180
                $region185: #{bilinear_attention_forward.10} parent=177 // loop_exit
                  _
                %s536 = ssub.s32 16, 1
                loop: start=0, step=1, limit=1
                $region186: #{bilinear_attention_forward.10} parent=177 // loop_pre_header
                  _
                $region187: #{bilinear_attention_forward.10} parent=177 // loop_header
                  %s538 = sphi 0, %s542
                  %p539 = scmp.ge.s32.totalorder %s538, 1
                  %s543 = sphi %s504, %s504
                  %s544 = sphi %s497, %s497
                $region188: #{bilinear_attention_forward.10} parent=177 // loop_header_branch
                  %541 = sbr.rel (%p539) target = $region192
                $region189: #{bilinear_attention_forward.10} parent=177 // loop_body
                  %v545 = vld [vmem:[%s543] sm:%s536]
                  %546 = vst [vmem:[%s544] sm:%s536] %v545
                  %v547 = vld [vmem:[%s543 + $0x8] sm:%s536]
                  %548 = vst [vmem:[%s544 + $0x4] sm:%s536] %v547
                $region190: #{bilinear_attention_forward.10} parent=177 // loop_footer
                  %s542 = sadd.s32 1, %s538
                $region191: #{bilinear_attention_forward.10} parent=177 // loop_footer_branch
                  %537 = sbr.rel target = $region187
                $region192: #{bilinear_attention_forward.10} parent=177 // loop_exit
                  _
              $region178: #{bilinear_attention_forward.10} parent=162 // pred_fallthru
                _
            $region163: #{bilinear_attention_forward.10} parent=158 // pred_fallthru
              _
            // Predicated region
            $region164: #{bilinear_attention_forward.10} parent=158 // pred_check
              _
            $region165: #{bilinear_attention_forward.10} parent=158 // pred_check_branch
              %510 = sbr.rel (0) target = $region167
            $region166: #{bilinear_attention_forward.10} parent=158 // pred_region
              %s512 = ssub.s32 16, 1
              loop: start=0, step=1, limit=1
              $region168: #{bilinear_attention_forward.10} parent=166 // loop_pre_header
                _
              $region169: #{bilinear_attention_forward.10} parent=166 // loop_header
                %s514 = sphi 0, %s518
                %p515 = scmp.ge.s32.totalorder %s514, 1
                %s519 = sphi %s504, %s504
                %s520 = sphi %s497, %s497
              $region170: #{bilinear_attention_forward.10} parent=166 // loop_header_branch
                %517 = sbr.rel (%p515) target = $region174
              $region171: #{bilinear_attention_forward.10} parent=166 // loop_body
                %v521 = vld [vmem:[%s519] sm:%s512]
                %522 = vst [vmem:[%s520] sm:%s512] %v521
                %v523 = vld [vmem:[%s519 + $0x8] sm:%s512]
                %524 = vst [vmem:[%s520 + $0x4] sm:%s512] %v523
              $region172: #{bilinear_attention_forward.10} parent=166 // loop_footer
                %s518 = sadd.s32 1, %s514
              $region173: #{bilinear_attention_forward.10} parent=166 // loop_footer_branch
                %513 = sbr.rel target = $region169
              $region174: #{bilinear_attention_forward.10} parent=166 // loop_exit
                _
            $region167: #{bilinear_attention_forward.10} parent=158 // pred_fallthru
              _
          $region159: #{bilinear_attention_forward.10} parent=154 // pred_fallthru
            _
          %549 = vnop
        $region155: #{bilinear_attention_forward.10} parent=19 // pred_fallthru
          _
      $region20: #{bilinear_attention_forward.10} parent=5 // pred_fallthru
        _
      %p550 = scmp.le.s32.totalorder 1, %s13
      %p551 = scmp.lt.s32.totalorder %s13, 5
      %p552 = pnand %p550, %p551
      %p553 = pneg %p552
      // Predicated region
      $region193: #{bilinear_attention_forward.10} parent=5 // pred_check
        _
      $region194: #{bilinear_attention_forward.10} parent=5 // pred_check_branch
        %555 = sbr.rel (%p552) target = $region196
      $region195: #{bilinear_attention_forward.10} parent=5 // pred_region
        %s556 = ssub.s32 %s13, 1
        %s557 = sand.u32 %s49, 1
        %s558 = sand.u32 %s49, 1
        %s559 = smul.addr %s558, 8
        %s560 = scalar_lea.vmem [#allocation3], %s559
        // Predicated region
        $region197: #{bilinear_attention_forward.10} parent=195 // pred_check
          %p561 = pneg %p62
        $region198: #{bilinear_attention_forward.10} parent=195 // pred_check_branch
          %563 = sbr.rel (%p561) target = $region200
        $region199: #{bilinear_attention_forward.10} parent=195 // pred_region
          _
        $region200: #{bilinear_attention_forward.10} parent=195 // pred_fallthru
          _
        %s564 = sand.u32 %s79, 1
        %s565 = sand.u32 %s79, 1
        %s566 = smul.addr %s565, 8
        %s567 = scalar_lea.vmem [#allocation4], %s566
        // Predicated region
        $region201: #{bilinear_attention_forward.10} parent=195 // pred_check
          %p568 = pneg %p92
        $region202: #{bilinear_attention_forward.10} parent=195 // pred_check_branch
          %570 = sbr.rel (%p568) target = $region204
        $region203: #{bilinear_attention_forward.10} parent=195 // pred_region
          _
        $region204: #{bilinear_attention_forward.10} parent=195 // pred_fallthru
          _
        %s571 = sand.u32 %s109, 1
        %s572 = sand.u32 %s109, 1
        %s573 = smul.addr %s572, 8
        %s574 = scalar_lea.vmem [#allocation5], %s573
        // Predicated region
        $region205: #{bilinear_attention_forward.10} parent=195 // pred_check
          %p575 = pneg %p122
        $region206: #{bilinear_attention_forward.10} parent=195 // pred_check_branch
          %577 = sbr.rel (%p575) target = $region208
        $region207: #{bilinear_attention_forward.10} parent=195 // pred_region
          _
        $region208: #{bilinear_attention_forward.10} parent=195 // pred_fallthru
          _
        %s578 = sand.u32 %s199, 1
        %s579 = sand.u32 %s199, 1
        %s580 = smul.addr %s579, 8
        %s581 = scalar_lea.vmem [#allocation6], %s580
        // Predicated region
        $region209: #{bilinear_attention_forward.10} parent=195 // pred_check
          %p582 = pneg %p212
        $region210: #{bilinear_attention_forward.10} parent=195 // pred_check_branch
          %584 = sbr.rel (%p582) target = $region212
        $region211: #{bilinear_attention_forward.10} parent=195 // pred_region
          _
        $region212: #{bilinear_attention_forward.10} parent=195 // pred_fallthru
          _
        %s585 = sand.u32 %s49, 1
        %s586 = sand.u32 %s49, 1
        %s587 = smul.addr %s586, 8
        %s588 = scalar_lea.vmem [#allocation3], %s587
        %p589 = pneg %p62
        %p590 = pneg %p59
        %s591 = sand.u32 %s79, 1
        %s592 = sand.u32 %s79, 1
        %s593 = smul.addr %s592, 8
        %s594 = scalar_lea.vmem [#allocation4], %s593
        %p595 = pneg %p92
        %p596 = pneg %p89
        %s597 = sand.u32 %s109, 1
        %s598 = sand.u32 %s109, 1
        %s599 = smul.addr %s598, 8
        %s600 = scalar_lea.vmem [#allocation5], %s599
        %p601 = pneg %p122
        %p602 = pneg %p119
        %p603 = scmp.lt.s32.totalorder %s23, 1
        %s604 = scalar_select %p603, %s23, 1
        %p605 = scmp.lt.s32.totalorder %s24, 1
        %s606 = scalar_select %p605, %s24, 1
        %p607 = scmp.lt.s32.totalorder %s25, 0
        %s608 = scalar_select %p607, %s25, 0
        %s609 = sadd.s32 %s608, %s606
        %s610 = smul.addr %s604, 2
        %s611 = sadd.s32 %s609, %s610
        %s612 = scalar_lea.vmem %s3, %s611
        %p613 = pneg %p152
        %p614 = pneg %p149
        %p615 = scmp.lt.s32.totalorder %s23, 1
        %s616 = scalar_select %p615, %s23, 1
        %p617 = scmp.lt.s32.totalorder %s24, 1
        %s618 = scalar_select %p617, %s24, 1
        %p619 = scmp.lt.s32.totalorder %s25, 0
        %s620 = scalar_select %p619, %s25, 0
        %s621 = smul.addr %s620, 2
        %s622 = smul.addr %s618, 2
        %s623 = sadd.s32 %s621, %s622
        %s624 = smul.addr %s616, 4
        %s625 = sadd.s32 %s623, %s624
        %s626 = smul.addr %s625, 8
        %s627 = scalar_lea.vmem %s4, %s626
        %p628 = pneg %p182
        %p629 = pneg %p179
        %s630 = sand.u32 %s199, 1
        %s631 = sand.u32 %s199, 1
        %s632 = smul.addr %s631, 8
        %s633 = scalar_lea.vmem [#allocation6], %s632
        %p634 = pneg %p212
        %p635 = pneg %p209
        %p636 = pneg %p233
        %p637 = pneg %p230
        %p638 = pneg %p263
        %p639 = pneg %p260
        %s640 = sand.u32 %s250, 1
        %s641 = sand.u32 %s250, 1
        %s642 = smul.addr %s641, 8
        %s643 = scalar_lea.vmem [#allocation7], %s642
        %s644 = smul.u32 2, %s25
        %s645 = smul.u32 2, %s25
        %s646 = smul.u32 2, %s25
        %p647 = scmp.lt.s32.totalorder %s23, 1
        %s648 = scalar_select %p647, %s23, 1
        %p649 = scmp.lt.s32.totalorder %s24, 1
        %s650 = scalar_select %p649, %s24, 1
        %p651 = scmp.lt.s32.totalorder %s25, 0
        %s652 = scalar_select %p651, %s25, 0
        %s653 = sadd.s32 %s652, %s650
        %s654 = smul.addr %s648, 2
        %s655 = sadd.s32 %s653, %s654
        %s656 = scalar_lea.vmem %s3, %s655
        %p657 = scmp.lt.s32.totalorder %s23, 1
        %s658 = scalar_select %p657, %s23, 1
        %p659 = scmp.lt.s32.totalorder %s24, 1
        %s660 = scalar_select %p659, %s24, 1
        %p661 = scmp.lt.s32.totalorder %s25, 0
        %s662 = scalar_select %p661, %s25, 0
        %s663 = smul.addr %s662, 2
        %s664 = smul.addr %s660, 2
        %s665 = sadd.s32 %s663, %s664
        %s666 = smul.addr %s658, 4
        %s667 = sadd.s32 %s665, %s666
        %s668 = smul.addr %s667, 8
        %s669 = scalar_lea.vmem %s4, %s668
        %s670 = smul.u32 2, %s25
        %s671 = smul.u32 2, %s25
        %p673 = scmp.eq.s32.totalorder %s25, 0
        // Predicated region
        $region213: #{bilinear_attention_forward.10} parent=195 // pred_check
          %p674 = pneg %p673
        $region214: #{bilinear_attention_forward.10} parent=195 // pred_check_branch
          %676 = sbr.rel (%p674) target = $region216
        $region215: #{bilinear_attention_forward.10} parent=195 // pred_region
          %677 = vst [vmem:[#allocation2] sm:$0xff] 0.0
          %678 = vst [vmem:[#allocation2 + $0x8] sm:$0xff] 0.0
          %679 = vst [vmem:[#allocation2 + $0x10] sm:$0xff] 0.0
          %680 = vst [vmem:[#allocation2 + $0x18] sm:$0xff] 0.0
          %681 = vst [vmem:[#allocation2 + $0x20] sm:$0xff] 0.0
          %682 = vst [vmem:[#allocation2 + $0x28] sm:$0xff] 0.0
          %683 = vst [vmem:[#allocation2 + $0x30] sm:$0xff] 0.0
          %684 = vst [vmem:[#allocation2 + $0x38] sm:$0xff] 0.0
          %685 = vst [vmem:[#allocation2 + $0x40] sm:$0xff] 0.0
          %686 = vst [vmem:[#allocation2 + $0x48] sm:$0xff] 0.0
          %687 = vst [vmem:[#allocation2 + $0x50] sm:$0xff] 0.0
          %688 = vst [vmem:[#allocation2 + $0x58] sm:$0xff] 0.0
          %689 = vst [vmem:[#allocation2 + $0x60] sm:$0xff] 0.0
          %690 = vst [vmem:[#allocation2 + $0x68] sm:$0xff] 0.0
          %691 = vst [vmem:[#allocation2 + $0x70] sm:$0xff] 0.0
          %692 = vst [vmem:[#allocation2 + $0x78] sm:$0xff] 0.0
        $region216: #{bilinear_attention_forward.10} parent=195 // pred_fallthru
          _
        %v693 = vld [vmem:[%s6] sm:$0x1]
        %v694 = vlaneseq
        %v695 = vshrl.u32 %v694, 7
        %v696 = vadd.s32 %v695, 8
        %v697 = vlaneseq
        %v698 = vand.u32 %v697, 127
        %vm699 = vcmp.ge.s32.totalorder %v695, %v698
        %vm700 = vcmp.ge.s32.totalorder %v696, %v698
        %v701 = vld [vmem:[#allocation2] sm:$0xff]
        %v702 = vld [vmem:[#allocation2 + $0x8] sm:$0xff]
        %v703 = vld [vmem:[#allocation2 + $0x10] sm:$0xff]
        %v704 = vld [vmem:[#allocation2 + $0x18] sm:$0xff]
        %v705 = vld [vmem:[#allocation2 + $0x20] sm:$0xff]
        %v706 = vld [vmem:[#allocation2 + $0x28] sm:$0xff]
        %v707 = vld [vmem:[#allocation2 + $0x30] sm:$0xff]
        %v708 = vld [vmem:[#allocation2 + $0x38] sm:$0xff]
        %v709 = vld [vmem:[#allocation2 + $0x40] sm:$0xff]
        %v710 = vld [vmem:[#allocation2 + $0x48] sm:$0xff]
        %v711 = vld [vmem:[#allocation2 + $0x50] sm:$0xff]
        %v712 = vld [vmem:[#allocation2 + $0x58] sm:$0xff]
        %v713 = vld [vmem:[#allocation2 + $0x60] sm:$0xff]
        %v714 = vld [vmem:[#allocation2 + $0x68] sm:$0xff]
        %v715 = vld [vmem:[#allocation2 + $0x70] sm:$0xff]
        %v716 = vld [vmem:[#allocation2 + $0x78] sm:$0xff]
        %v717 = vld [vmem:[%s560] sm:$0xf]
        %v718 = vld [vmem:[%s560 + $0x4] sm:$0xf]
        %v719 = vunpack.c.l.bf16 %v717
        %v720 = vunpack.c.l.bf16 %v718
        %v721 = vld [vmem:[%s567] sm:$0xf]
        %v722 = vld [vmem:[%s567 + $0x4] sm:$0xf]
        %v723 = vunpack.c.l.bf16 %v721
        %v724 = vunpack.c.l.bf16 %v722
        %v725 = vld [vmem:[%s574] sm:$0xf]
        %v726 = vld [vmem:[%s574 + $0x4] sm:$0xf]
        %v727 = vld [vmem:[%s669] sm:$0xff]
        %v728 = vld [vmem:[%s669 + $0x8] sm:$0xff]
        %v729 = vld [vmem:[%s656] sm:$0x1]
        %v730 = vmul.f32 %v719, %v719
        %v731 = vmul.f32 %v720, %v720
        %732 = vadd.xlane.f32.xlu0 %v730
        %v733 = vpop.xlane.xlu0 %732
        %734 = vadd.xlane.f32.xlu0 %v731
        %v735 = vpop.xlane.xlu0 %734
        %v736 = vadd.f32 %v733, 1e-06
        %v737 = vadd.f32 %v735, 1e-06
        %v738 = vrsqrt.pop %v736
        %v739 = vrsqrt.pop %v737
        %v740 = vmul.f32 %v719, %v738
        %v741 = vmul.f32 %v720, %v739
        %v742 = vmul.f32 %v723, %v723
        %v743 = vmul.f32 %v724, %v724
        %744 = vadd.xlane.f32.xlu0 %v742
        %v745 = vpop.xlane.xlu0 %744
        %746 = vadd.xlane.f32.xlu0 %v743
        %v747 = vpop.xlane.xlu0 %746
        %v748 = vadd.f32 %v745, 1e-06
        %v749 = vadd.f32 %v747, 1e-06
        %v750 = vrsqrt.pop %v748
        %v751 = vrsqrt.pop %v749
        %v752 = vmul.f32 %v723, %v750
        %v753 = vmul.f32 %v724, %v751
        %v754 = vmul.f32 %v740, 0.088388346
        %v755 = vmul.f32 %v741, 0.088388346
        %757 = vset.pattern.permute.xlu0 1
        %758 = vperm.xlu0 %757, %v727
        %v759 = vpop.permute.xlu0 %758
        %762 = vset.pattern.permute.xlu0 1
        %763 = vperm.xlu0 %762, %v728
        %v764 = vpop.permute.xlu0 %763
        %v766 = vmul.f32 %v752, %v759
        %v767 = vmul.f32 %v753, %v764
        %768 = vset.pattern.permute.xlu0 0
        %769 = vperm.xlu0 %768, %v727
        %v770 = vpop.permute.xlu0 %769
        %772 = vset.pattern.permute.xlu0 0
        %773 = vperm.xlu0 %772, %v728
        %v774 = vpop.permute.xlu0 %773
        %v777 = vlaneseq
        %v778 = vshrl.u32 %v777, 7
        %v779 = vsub.s32 0, %v778
        %v780 = vrot.slane %v729, %v779
        %v782 = vsub.f32 %v770, %v780
        %v783 = vsub.f32 %v774, %v780
        %v784 = vsel %vm699, %v782, -1e+30
        %v785 = vsel %vm700, %v783, -1e+30
        %v786 = vmul.f32 %v784, 1.442695
        %v787 = vpow.pop %v786
        %v788 = vmul.f32 %v785, 1.442695
        %v789 = vpow.pop %v788
        %v790 = vpack.c.bf16 %v755, %v754
        %v791 = vpack.c.bf16 %v767, %v766
        %792 = vmatprep.subr.bf16.mxu0 0
        %793 = vmatpush1.bf16.xpose.msra.mxu0 0
        %794 = vmatprep.subr.bf16.mxu0 0
        %795 = vmatpush1.bf16.xpose.msra.mxu0 0
        %796 = vmatprep.subr.bf16.mxu0 0
        %797 = vmatpush1.bf16.xpose.msra.mxu0 0
        %798 = vmatprep.subr.bf16.mxu0 0
        %799 = vmatpush1.bf16.xpose.msra.mxu0 0
        %800 = vmatprep.subr.bf16.mxu0 0
        %801 = vmatpush1.bf16.xpose.msra.mxu0 0
        %802 = vmatprep.subr.bf16.mxu0 0
        %803 = vmatpush1.bf16.xpose.msra.mxu0 0
        %804 = vmatprep.subr.bf16.mxu0 0
        %805 = vmatpush1.bf16.xpose.msra.mxu0 0
        %806 = vmatprep.subr.bf16.mxu0 0
        %807 = vmatpush1.bf16.xpose.msra.mxu0 %v791
        %808 = vmatprep.subr.bf16.mxu0 0
        %809 = vmatpush2.bf16.xpose.msra.mxu0 0
        %810 = vmatprep.subr.bf16.mxu0 0
        %811 = vmatpush2.bf16.xpose.msra.mxu0 0
        %812 = vmatprep.subr.bf16.mxu0 0
        %813 = vmatpush2.bf16.xpose.msra.mxu0 0
        %814 = vmatprep.subr.bf16.mxu0 0
        %815 = vmatpush2.bf16.xpose.msra.mxu0 0
        %816 = vmatprep.subr.bf16.mxu0 0
        %817 = vmatpush2.bf16.xpose.msra.mxu0 0
        %818 = vmatprep.subr.bf16.mxu0 0
        %819 = vmatpush2.bf16.xpose.msra.mxu0 0
        %820 = vmatprep.subr.bf16.mxu0 0
        %821 = vmatpush2.bf16.xpose.msra.mxu0 0
        %822 = vmatprep.subr.bf16.mxu0 0
        %823 = vmatpush2.bf16.xpose.msra.mxu0 0
        %824 = vmatprep.mubr.bf16.mxu0 0
        %825 = vmatmul.mubr.bf16.gmra.mxu0 %v790
        %v826 = vpop.f32.mrf.mxu0
        %v827 = vadd.f32 0.0, %v826
        %v828 = vpop.f32.mrf.mxu0
        %v829 = vpop.f32.mrf.mxu0
        %v830 = vadd.f32 0.0, %v829
        %v831 = vpop.f32.mrf.mxu0
        %832 = vdwg.mxu0
        %v833 = vmul.f32 %v827, %v787
        %v834 = vmul.f32 %v830, %v789
        %v835 = vpack.c.bf16 %v834, %v833
        %v836 = vmul.f32 %v727, 1.442695
        %v837 = vpow.pop %v836
        %v838 = vmul.f32 %v728, 1.442695
        %v839 = vpow.pop %v838
        %841 = vset.pattern.permute.xlu0 0
        %842 = vperm.xlu0 %841, %v837
        %v843 = vpop.permute.xlu0 %842
        %846 = vset.pattern.permute.xlu0 0
        %847 = vperm.xlu0 %846, %v839
        %v848 = vpop.permute.xlu0 %847
        %v850 = vmul.f32 %v754, %v843
        %v851 = vmul.f32 %v755, %v848
        %v852 = vpack.c.bf16 %v851, %v850
        %v853 = vpack.c.bf16 %v702, %v701
        %v854 = vpack.c.bf16 %v704, %v703
        %v855 = vpack.c.bf16 %v706, %v705
        %v856 = vpack.c.bf16 %v708, %v707
        %v857 = vpack.c.bf16 %v710, %v709
        %v858 = vpack.c.bf16 %v712, %v711
        %v859 = vpack.c.bf16 %v714, %v713
        %v860 = vpack.c.bf16 %v716, %v715
        %861 = vmatprep.subr.bf16.mxu0 0
        %862 = vmatpush1.bf16.msra.mxu0 %v860
        %863 = vmatprep.subr.bf16.mxu0 0
        %864 = vmatpush1.bf16.msra.mxu0 %v859
        %865 = vmatprep.subr.bf16.mxu0 0
        %866 = vmatpush1.bf16.msra.mxu0 %v858
        %867 = vmatprep.subr.bf16.mxu0 0
        %868 = vmatpush1.bf16.msra.mxu0 %v857
        %869 = vmatprep.subr.bf16.mxu0 0
        %870 = vmatpush1.bf16.msra.mxu0 %v856
        %871 = vmatprep.subr.bf16.mxu0 0
        %872 = vmatpush1.bf16.msra.mxu0 %v855
        %873 = vmatprep.subr.bf16.mxu0 0
        %874 = vmatpush1.bf16.msra.mxu0 %v854
        %875 = vmatprep.subr.bf16.mxu0 0
        %876 = vmatpush1.bf16.msra.mxu0 %v853
        %877 = vmatprep.subr.bf16.mxu0 0
        %878 = vmatpush2.bf16.msra.mxu0 0
        %879 = vmatprep.subr.bf16.mxu0 0
        %880 = vmatpush2.bf16.msra.mxu0 0
        %881 = vmatprep.subr.bf16.mxu0 0
        %882 = vmatpush2.bf16.msra.mxu0 0
        %883 = vmatprep.subr.bf16.mxu0 0
        %884 = vmatpush2.bf16.msra.mxu0 0
        %885 = vmatprep.subr.bf16.mxu0 0
        %886 = vmatpush2.bf16.msra.mxu0 0
        %887 = vmatprep.subr.bf16.mxu0 0
        %888 = vmatpush2.bf16.msra.mxu0 0
        %889 = vmatprep.subr.bf16.mxu0 0
        %890 = vmatpush2.bf16.msra.mxu0 0
        %891 = vmatprep.subr.bf16.mxu0 0
        %892 = vmatpush2.bf16.msra.mxu0 0
        %893 = vmatprep.mubr.bf16.mxu0 0
        %894 = vmatmul.mubr.bf16.gmra.mxu0 %v852
        %v895 = vpop.f32.mrf.mxu0
        %v896 = vadd.f32 0.0, %v895
        %v897 = vpop.f32.mrf.mxu0
        %v898 = vpop.f32.mrf.mxu0
        %v899 = vadd.f32 0.0, %v898
        %v900 = vpop.f32.mrf.mxu0
        %901 = vdwg.mxu0
        %902 = vrot.lane.b32.xlu0 %v727, 15
        %v903 = vpop.permute.xlu0 %902
        %904 = vrot.lane.b32.xlu0 %v728, 15
        %v905 = vpop.permute.xlu0 %904
        %v908 = vsub.f32 %v780, %v903
        %v909 = vsub.f32 %v780, %v905
        %v910 = vmul.f32 %v908, 1.442695
        %v911 = vpow.pop %v910
        %v912 = vmul.f32 %v909, 1.442695
        %v913 = vpow.pop %v912
        %915 = vset.pattern.permute.xlu0 15
        %916 = vperm.xlu0 %915, %v911
        %v917 = vpop.permute.xlu0 %916
        %920 = vset.pattern.permute.xlu0 15
        %921 = vperm.xlu0 %920, %v913
        %v922 = vpop.permute.xlu0 %921
        %v924 = vmul.f32 %v766, %v917
        %v925 = vmul.f32 %v767, %v922
        %v926 = vpack.c.bf16 %v925, %v924
        %927 = vxpose.xlu0.c.b16.start [1/8] %v926, 128
        %928 = vxpose.xlu0.c.b16.cont [2/8] 0, 128
        %929 = vxpose.xlu0.c.b16.cont [3/8] 0, 128
        %930 = vxpose.xlu0.c.b16.cont [4/8] 0, 128
        %931 = vxpose.xlu0.c.b16.cont [5/8] 0, 128
        %932 = vxpose.xlu0.c.b16.cont [6/8] 0, 128
        %933 = vxpose.xlu0.c.b16.cont [7/8] 0, 128
        %934 = vxpose.xlu0.c.b16.end [8/8] 0, 128
        %v935 = vpop.trf.xlu0
        %v936 = vpop.trf.xlu0
        %v937 = vpop.trf.xlu0
        %v938 = vpop.trf.xlu0
        %v939 = vpop.trf.xlu0
        %v940 = vpop.trf.xlu0
        %v941 = vpop.trf.xlu0
        %v942 = vpop.trf.xlu0
        %v945 = vunpack.c.l.b16 %v725
        %v946 = vunpack.c.l.b16 %v726
        %v947 = vpack.c.b16 %v946, %v945
        %vm949 = vcmask 130048
        %v951 = vsel %vm949, %v935, 0
        %v954 = vsel %vm949, %v936, 0
        %v957 = vsel %vm949, %v937, 0
        %v960 = vsel %vm949, %v938, 0
        %v963 = vsel %vm949, %v939, 0
        %v966 = vsel %vm949, %v940, 0
        %v969 = vsel %vm949, %v941, 0
        %v972 = vsel %vm949, %v942, 0
        %974 = vmatprep.subr.bf16.mxu0 0
        %975 = vmatpush1.bf16.msra.mxu0 0
        %976 = vmatprep.subr.bf16.mxu0 0
        %977 = vmatpush1.bf16.msra.mxu0 0
        %978 = vmatprep.subr.bf16.mxu0 0
        %979 = vmatpush1.bf16.msra.mxu0 0
        %980 = vmatprep.subr.bf16.mxu0 0
        %981 = vmatpush1.bf16.msra.mxu0 0
        %982 = vmatprep.subr.bf16.mxu0 0
        %983 = vmatpush1.bf16.msra.mxu0 0
        %984 = vmatprep.subr.bf16.mxu0 0
        %985 = vmatpush1.bf16.msra.mxu0 0
        %986 = vmatprep.subr.bf16.mxu0 0
        %987 = vmatpush1.bf16.msra.mxu0 0
        %988 = vmatprep.subr.bf16.mxu0 0
        %989 = vmatpush1.bf16.msra.mxu0 %v947
        %990 = vmatprep.subr.bf16.mxu0 0
        %991 = vmatpush2.bf16.msra.mxu0 0
        %992 = vmatprep.subr.bf16.mxu0 0
        %993 = vmatpush2.bf16.msra.mxu0 0
        %994 = vmatprep.subr.bf16.mxu0 0
        %995 = vmatpush2.bf16.msra.mxu0 0
        %996 = vmatprep.subr.bf16.mxu0 0
        %997 = vmatpush2.bf16.msra.mxu0 0
        %998 = vmatprep.subr.bf16.mxu0 0
        %999 = vmatpush2.bf16.msra.mxu0 0
        %1000 = vmatprep.subr.bf16.mxu0 0
        %1001 = vmatpush2.bf16.msra.mxu0 0
        %1002 = vmatprep.subr.bf16.mxu0 0
        %1003 = vmatpush2.bf16.msra.mxu0 0
        %1004 = vmatprep.subr.bf16.mxu0 0
        %1005 = vmatpush2.bf16.msra.mxu0 0
        %1006 = vmatprep.mubr.bf16.mxu0 0
        %1007 = vmatmul.mubr.bf16.gmra.mxu0 %v951
        %v1008 = vpop.f32.mrf.mxu0
        %v1009 = vadd.f32 0.0, %v1008
        %v1010 = vpop.f32.mrf.mxu0
        %v1011 = vpop.f32.mrf.mxu0
        %v1012 = vadd.f32 0.0, %v1011
        %v1013 = vpop.f32.mrf.mxu0
        %1014 = vmatprep.mubr.bf16.mxu0 0
        %1015 = vmatmul.mubr.bf16.gmra.mxu0 %v954
        %v1016 = vpop.f32.mrf.mxu0
        %v1017 = vadd.f32 0.0, %v1016
        %v1018 = vpop.f32.mrf.mxu0
        %v1019 = vpop.f32.mrf.mxu0
        %v1020 = vadd.f32 0.0, %v1019
        %v1021 = vpop.f32.mrf.mxu0
        %1022 = vmatprep.mubr.bf16.mxu0 0
        %1023 = vmatmul.mubr.bf16.gmra.mxu0 %v957
        %v1024 = vpop.f32.mrf.mxu0
        %v1025 = vadd.f32 0.0, %v1024
        %v1026 = vpop.f32.mrf.mxu0
        %v1027 = vpop.f32.mrf.mxu0
        %v1028 = vadd.f32 0.0, %v1027
        %v1029 = vpop.f32.mrf.mxu0
        %1030 = vmatprep.mubr.bf16.mxu0 0
        %1031 = vmatmul.mubr.bf16.gmra.mxu0 %v960
        %v1032 = vpop.f32.mrf.mxu0
        %v1033 = vadd.f32 0.0, %v1032
        %v1034 = vpop.f32.mrf.mxu0
        %v1035 = vpop.f32.mrf.mxu0
        %v1036 = vadd.f32 0.0, %v1035
        %v1037 = vpop.f32.mrf.mxu0
        %1038 = vmatprep.mubr.bf16.mxu0 0
        %1039 = vmatmul.mubr.bf16.gmra.mxu0 %v963
        %v1040 = vpop.f32.mrf.mxu0
        %v1041 = vadd.f32 0.0, %v1040
        %v1042 = vpop.f32.mrf.mxu0
        %v1043 = vpop.f32.mrf.mxu0
        %v1044 = vadd.f32 0.0, %v1043
        %v1045 = vpop.f32.mrf.mxu0
        %1046 = vmatprep.mubr.bf16.mxu0 0
        %1047 = vmatmul.mubr.bf16.gmra.mxu0 %v966
        %v1048 = vpop.f32.mrf.mxu0
        %v1049 = vadd.f32 0.0, %v1048
        %v1050 = vpop.f32.mrf.mxu0
        %v1051 = vpop.f32.mrf.mxu0
        %v1052 = vadd.f32 0.0, %v1051
        %v1053 = vpop.f32.mrf.mxu0
        %1054 = vmatprep.mubr.bf16.mxu0 0
        %1055 = vmatmul.mubr.bf16.gmra.mxu0 %v969
        %v1056 = vpop.f32.mrf.mxu0
        %v1057 = vadd.f32 0.0, %v1056
        %v1058 = vpop.f32.mrf.mxu0
        %v1059 = vpop.f32.mrf.mxu0
        %v1060 = vadd.f32 0.0, %v1059
        %v1061 = vpop.f32.mrf.mxu0
        %1062 = vmatprep.mubr.bf16.mxu0 0
        %1063 = vmatmul.mubr.bf16.gmra.mxu0 %v972
        %v1064 = vpop.f32.mrf.mxu0
        %v1065 = vadd.f32 0.0, %v1064
        %v1066 = vpop.f32.mrf.mxu0
        %v1067 = vpop.f32.mrf.mxu0
        %v1068 = vadd.f32 0.0, %v1067
        %v1069 = vpop.f32.mrf.mxu0
        %1070 = vdwg.mxu0
        %v1071 = vmul.f32 %v729, 1.442695
        %v1072 = vpow.pop %v1071
        %v1074 = vlaneseq
        %v1075 = vshrl.u32 %v1074, 7
        %v1076 = vsub.s32 0, %v1075
        %v1077 = vrot.slane %v1072, %v1076
        %1078 = vset.pattern.permute.xlu0 15
        %1079 = vperm.xlu0 %1078, %v1077
        %v1080 = vpop.permute.xlu0 %1079
        %v1082 = vmul.f32 %v1080, %v701
        %v1083 = vmul.f32 %v1080, %v702
        %v1084 = vmul.f32 %v1080, %v703
        %v1085 = vmul.f32 %v1080, %v704
        %v1086 = vmul.f32 %v1080, %v705
        %v1087 = vmul.f32 %v1080, %v706
        %v1088 = vmul.f32 %v1080, %v707
        %v1089 = vmul.f32 %v1080, %v708
        %v1090 = vmul.f32 %v1080, %v709
        %v1091 = vmul.f32 %v1080, %v710
        %v1092 = vmul.f32 %v1080, %v711
        %v1093 = vmul.f32 %v1080, %v712
        %v1094 = vmul.f32 %v1080, %v713
        %v1095 = vmul.f32 %v1080, %v714
        %v1096 = vmul.f32 %v1080, %v715
        %v1097 = vmul.f32 %v1080, %v716
        %v1098 = vadd.f32 %v1082, %v1009
        %v1099 = vadd.f32 %v1083, %v1012
        %v1100 = vadd.f32 %v1084, %v1017
        %v1101 = vadd.f32 %v1085, %v1020
        %v1102 = vadd.f32 %v1086, %v1025
        %v1103 = vadd.f32 %v1087, %v1028
        %v1104 = vadd.f32 %v1088, %v1033
        %v1105 = vadd.f32 %v1089, %v1036
        %v1106 = vadd.f32 %v1090, %v1041
        %v1107 = vadd.f32 %v1091, %v1044
        %v1108 = vadd.f32 %v1092, %v1049
        %v1109 = vadd.f32 %v1093, %v1052
        %v1110 = vadd.f32 %v1094, %v1057
        %v1111 = vadd.f32 %v1095, %v1060
        %v1112 = vadd.f32 %v1096, %v1065
        %v1113 = vadd.f32 %v1097, %v1068
        %v1115 = vsel %vm949, %v835, 0
        %1117 = vmatprep.subr.bf16.mxu0 0
        %1118 = vmatpush1.bf16.msra.mxu0 0
        %1119 = vmatprep.subr.bf16.mxu0 0
        %1120 = vmatpush1.bf16.msra.mxu0 0
        %1121 = vmatprep.subr.bf16.mxu0 0
        %1122 = vmatpush1.bf16.msra.mxu0 0
        %1123 = vmatprep.subr.bf16.mxu0 0
        %1124 = vmatpush1.bf16.msra.mxu0 0
        %1125 = vmatprep.subr.bf16.mxu0 0
        %1126 = vmatpush1.bf16.msra.mxu0 0
        %1127 = vmatprep.subr.bf16.mxu0 0
        %1128 = vmatpush1.bf16.msra.mxu0 0
        %1129 = vmatprep.subr.bf16.mxu0 0
        %1130 = vmatpush1.bf16.msra.mxu0 0
        %1131 = vmatprep.subr.bf16.mxu0 0
        %1132 = vmatpush1.bf16.msra.mxu0 %v947
        %1133 = vmatprep.subr.bf16.mxu0 0
        %1134 = vmatpush2.bf16.msra.mxu0 0
        %1135 = vmatprep.subr.bf16.mxu0 0
        %1136 = vmatpush2.bf16.msra.mxu0 0
        %1137 = vmatprep.subr.bf16.mxu0 0
        %1138 = vmatpush2.bf16.msra.mxu0 0
        %1139 = vmatprep.subr.bf16.mxu0 0
        %1140 = vmatpush2.bf16.msra.mxu0 0
        %1141 = vmatprep.subr.bf16.mxu0 0
        %1142 = vmatpush2.bf16.msra.mxu0 0
        %1143 = vmatprep.subr.bf16.mxu0 0
        %1144 = vmatpush2.bf16.msra.mxu0 0
        %1145 = vmatprep.subr.bf16.mxu0 0
        %1146 = vmatpush2.bf16.msra.mxu0 0
        %1147 = vmatprep.subr.bf16.mxu0 0
        %1148 = vmatpush2.bf16.msra.mxu0 0
        %1149 = vmatprep.mubr.bf16.mxu0 0
        %1150 = vmatmul.mubr.bf16.gmra.mxu0 %v1115
        %v1151 = vpop.f32.mrf.mxu0
        %v1152 = vadd.f32 %v896, %v1151
        %v1153 = vpop.f32.mrf.mxu0
        %v1154 = vpop.f32.mrf.mxu0
        %v1155 = vadd.f32 %v899, %v1154
        %v1156 = vpop.f32.mrf.mxu0
        %1157 = vdwg.mxu0
        %v1158 = vmul.f32 %v1152, %v1152
        %v1159 = vmul.f32 %v1155, %v1155
        %1160 = vadd.xlane.f32.xlu0 %v1158
        %v1161 = vpop.xlane.xlu0 %1160
        %1162 = vadd.xlane.f32.xlu0 %v1159
        %v1163 = vpop.xlane.xlu0 %1162
        %v1164 = vrcp.pop 128.0
        %v1165 = vmul.f32 %v1161, %v1164
        %v1166 = vmul.f32 %v1163, %v1164
        %v1167 = vadd.f32 %v1165, 1e-05
        %v1168 = vadd.f32 %v1166, 1e-05
        %v1169 = vrsqrt.pop %v1167
        %v1170 = vrsqrt.pop %v1168
        %v1171 = vmul.f32 %v1152, %v1169
        %v1172 = vmul.f32 %v1155, %v1170
        %v1173 = vld [vmem:[%s581] sm:$0xf]
        %v1174 = vld [vmem:[%s581 + $0x4] sm:$0xf]
        %v1175 = vunpack.c.l.bf16 %v1173
        %v1176 = vunpack.c.l.bf16 %v1174
        %v1178 = vlaneseq
        %v1179 = vshrl.u32 %v1178, 7
        %v1180 = vsub.s32 0, %v1179
        %v1181 = vrot.slane %v693, %v1180
        %v1183 = vmul.f32 %v1171, %v1181
        %v1184 = vmul.f32 %v1172, %v1181
        %v1185 = vxor.u32 %v1175, 2147483648
        %v1186 = vxor.u32 %v1176, 2147483648
        %v1187 = vmul.f32 %v1185, 1.442695
        %v1188 = vpow.pop %v1187
        %v1189 = vmul.f32 %v1186, 1.442695
        %v1190 = vpow.pop %v1189
        %v1191 = vadd.f32 %v1188, 1.0
        %v1192 = vadd.f32 %v1190, 1.0
        %v1193 = vrcp.pop %v1191
        %v1194 = vmul.f32 1.0, %v1193
        %v1195 = vrcp.pop %v1192
        %v1196 = vmul.f32 1.0, %v1195
        %v1197 = vmul.f32 %v1175, %v1194
        %v1198 = vmul.f32 %v1176, %v1196
        %v1199 = vmul.f32 %v1183, %v1197
        %v1200 = vmul.f32 %v1184, %v1198
        %v1201 = vpack.c.bf16 %v1200, %v1199
        %v1203 = vunpack.c.l.b16 %v1201
        %v1204 = vunpack.c.h.b16 %v1201
        %v1205 = vpack.c.b16 %v1203, %v1203
        %v1206 = vpack.c.b16 %v1204, %v1204
        %1209 = vst [vmem:[%s643] sm:$0xf] %v1205
        %1210 = vst [vmem:[%s643 + $0x4] sm:$0xf] %v1206
        %1211 = vst [vmem:[#allocation2] sm:$0xff] %v1098
        %1212 = vst [vmem:[#allocation2 + $0x8] sm:$0xff] %v1099
        %1213 = vst [vmem:[#allocation2 + $0x10] sm:$0xff] %v1100
        %1214 = vst [vmem:[#allocation2 + $0x18] sm:$0xff] %v1101
        %1215 = vst [vmem:[#allocation2 + $0x20] sm:$0xff] %v1102
        %1216 = vst [vmem:[#allocation2 + $0x28] sm:$0xff] %v1103
        %1217 = vst [vmem:[#allocation2 + $0x30] sm:$0xff] %v1104
        %1218 = vst [vmem:[#allocation2 + $0x38] sm:$0xff] %v1105
        %1219 = vst [vmem:[#allocation2 + $0x40] sm:$0xff] %v1106
        %1220 = vst [vmem:[#allocation2 + $0x48] sm:$0xff] %v1107
        %1221 = vst [vmem:[#allocation2 + $0x50] sm:$0xff] %v1108
        %1222 = vst [vmem:[#allocation2 + $0x58] sm:$0xff] %v1109
        %1223 = vst [vmem:[#allocation2 + $0x60] sm:$0xff] %v1110
        %1224 = vst [vmem:[#allocation2 + $0x68] sm:$0xff] %v1111
        %1225 = vst [vmem:[#allocation2 + $0x70] sm:$0xff] %v1112
        %1226 = vst [vmem:[#allocation2 + $0x78] sm:$0xff] %v1113
        %s1227 = sand.u32 %s250, 1
        %s1228 = sand.u32 %s250, 1
        %s1229 = smul.addr %s1228, 8
        %s1230 = scalar_lea.vmem [#allocation7], %s1229
        // Predicated region
        $region217: #{bilinear_attention_forward.10} parent=195 // pred_check
          %p1231 = pneg %p260
        $region218: #{bilinear_attention_forward.10} parent=195 // pred_check_branch
          %1233 = sbr.rel (%p1231) target = $region220
        $region219: #{bilinear_attention_forward.10} parent=195 // pred_region
          %s1234 = smul.u32 2, %s25
          %s1235 = smul.addr %s1234, 2
          %s1236 = sadd.s32 %s24, %s1235
          %s1237 = smul.addr %s23, 4
          %s1238 = sadd.s32 %s1236, %s1237
          %s1239 = smul.addr %s1238, 4
          %s1240 = scalar_lea.vmem %s7, %s1239
          // Predicated region
          $region221: #{bilinear_attention_forward.10} parent=219 // pred_check
            _
          $region222: #{bilinear_attention_forward.10} parent=219 // pred_check_branch
            %1242 = sbr.rel (0) target = $region224
          $region223: #{bilinear_attention_forward.10} parent=219 // pred_region
            // Predicated region
            $region225: #{bilinear_attention_forward.10} parent=223 // pred_check
              _
            $region226: #{bilinear_attention_forward.10} parent=223 // pred_check_branch
              %1244 = sbr.rel target = $region228
            $region227: #{bilinear_attention_forward.10} parent=223 // pred_region
              // Predicated region
              $region240: #{bilinear_attention_forward.10} parent=227 // pred_check
                _
              $region241: #{bilinear_attention_forward.10} parent=227 // pred_check_branch
                %1262 = sbr.rel (0) target = $region243
              $region242: #{bilinear_attention_forward.10} parent=227 // pred_region
                loop: start=0, step=1, limit=1
                $region244: #{bilinear_attention_forward.10} parent=242 // loop_pre_header
                  _
                $region245: #{bilinear_attention_forward.10} parent=242 // loop_header
                  %s1264 = sphi 0, %s1268
                  %p1265 = scmp.ge.s32.totalorder %s1264, 1
                  %s1269 = sphi %s1230, %s1230
                  %s1270 = sphi %s1240, %s1240
                $region246: #{bilinear_attention_forward.10} parent=242 // loop_header_branch
                  %1267 = sbr.rel (%p1265) target = $region250
                $region247: #{bilinear_attention_forward.10} parent=242 // loop_body
                  _
                $region248: #{bilinear_attention_forward.10} parent=242 // loop_footer
                  %s1268 = sadd.s32 1, %s1264
                $region249: #{bilinear_attention_forward.10} parent=242 // loop_footer_branch
                  %1263 = sbr.rel target = $region245
                $region250: #{bilinear_attention_forward.10} parent=242 // loop_exit
                  _
                %s1272 = ssub.s32 16, 1
                loop: start=0, step=1, limit=1
                $region251: #{bilinear_attention_forward.10} parent=242 // loop_pre_header
                  _
                $region252: #{bilinear_attention_forward.10} parent=242 // loop_header
                  %s1274 = sphi 0, %s1278
                  %p1275 = scmp.ge.s32.totalorder %s1274, 1
                  %s1279 = sphi %s1230, %s1230
                  %s1280 = sphi %s1240, %s1240
                $region253: #{bilinear_attention_forward.10} parent=242 // loop_header_branch
                  %1277 = sbr.rel (%p1275) target = $region257
                $region254: #{bilinear_attention_forward.10} parent=242 // loop_body
                  %v1281 = vld [vmem:[%s1279] sm:%s1272]
                  %1282 = vst [vmem:[%s1280] sm:%s1272] %v1281
                  %v1283 = vld [vmem:[%s1279 + $0x4] sm:%s1272]
                  %1284 = vst [vmem:[%s1280 + $0x8] sm:%s1272] %v1283
                $region255: #{bilinear_attention_forward.10} parent=242 // loop_footer
                  %s1278 = sadd.s32 1, %s1274
                $region256: #{bilinear_attention_forward.10} parent=242 // loop_footer_branch
                  %1273 = sbr.rel target = $region252
                $region257: #{bilinear_attention_forward.10} parent=242 // loop_exit
                  _
              $region243: #{bilinear_attention_forward.10} parent=227 // pred_fallthru
                _
            $region228: #{bilinear_attention_forward.10} parent=223 // pred_fallthru
              _
            // Predicated region
            $region229: #{bilinear_attention_forward.10} parent=223 // pred_check
              _
            $region230: #{bilinear_attention_forward.10} parent=223 // pred_check_branch
              %1246 = sbr.rel (0) target = $region232
            $region231: #{bilinear_attention_forward.10} parent=223 // pred_region
              %s1248 = ssub.s32 16, 1
              loop: start=0, step=1, limit=1
              $region233: #{bilinear_attention_forward.10} parent=231 // loop_pre_header
                _
              $region234: #{bilinear_attention_forward.10} parent=231 // loop_header
                %s1250 = sphi 0, %s1254
                %p1251 = scmp.ge.s32.totalorder %s1250, 1
                %s1255 = sphi %s1230, %s1230
                %s1256 = sphi %s1240, %s1240
              $region235: #{bilinear_attention_forward.10} parent=231 // loop_header_branch
                %1253 = sbr.rel (%p1251) target = $region239
              $region236: #{bilinear_attention_forward.10} parent=231 // loop_body
                %v1257 = vld [vmem:[%s1255] sm:%s1248]
                %1258 = vst [vmem:[%s1256] sm:%s1248] %v1257
                %v1259 = vld [vmem:[%s1255 + $0x4] sm:%s1248]
                %1260 = vst [vmem:[%s1256 + $0x8] sm:%s1248] %v1259
              $region237: #{bilinear_attention_forward.10} parent=231 // loop_footer
                %s1254 = sadd.s32 1, %s1250
              $region238: #{bilinear_attention_forward.10} parent=231 // loop_footer_branch
                %1249 = sbr.rel target = $region234
              $region239: #{bilinear_attention_forward.10} parent=231 // loop_exit
                _
            $region232: #{bilinear_attention_forward.10} parent=223 // pred_fallthru
              _
          $region224: #{bilinear_attention_forward.10} parent=219 // pred_fallthru
            _
          %1285 = vnop
        $region220: #{bilinear_attention_forward.10} parent=195 // pred_fallthru
          _
      $region196: #{bilinear_attention_forward.10} parent=5 // pred_fallthru
        _
      %p1286 = scmp.le.s32.totalorder 2, %s13
      // Predicated region
      $region258: #{bilinear_attention_forward.10} parent=5 // pred_check
        %p1287 = pneg %p1286
      $region259: #{bilinear_attention_forward.10} parent=5 // pred_check_branch
        %1289 = sbr.rel (%p1287) target = $region261
      $region260: #{bilinear_attention_forward.10} parent=5 // pred_region
        %s1290 = ssub.s32 %s13, 2
        // Predicated region
        $region262: #{bilinear_attention_forward.10} parent=260 // pred_check
          %p1291 = pneg %p266
        $region263: #{bilinear_attention_forward.10} parent=260 // pred_check_branch
          %1293 = sbr.rel (%p1291) target = $region265
        $region264: #{bilinear_attention_forward.10} parent=260 // pred_region
          %s1294 = sand.u32 %s251, 1
          %s1295 = sand.u32 %s251, 1
          %s1296 = smul.addr %s1295, 8
          %s1297 = scalar_lea.vmem [#allocation7], %s1296
        $region265: #{bilinear_attention_forward.10} parent=260 // pred_fallthru
          _
      $region261: #{bilinear_attention_forward.10} parent=5 // pred_fallthru
        _
    $region6: #{bilinear_attention_forward.10} parent=1 // loop_footer
      %s17 = sadd.s32 1, %s13
    $region7: #{bilinear_attention_forward.10} parent=1 // loop_footer_branch
      %12 = sbr.rel target = $region3
    $region8: #{bilinear_attention_forward.10} parent=1 // loop_exit
      _

</llo_original>
